<compile_context>
chip_gen: v5e
topology: v5e:2x2
jax: 0.10.0
libtpu: 0.0.40
codegen_flags: <defaults>
</compile_context>

<pallas_src>
import functools
import math

import jax
import jax.numpy as jnp
from jax.experimental import pallas as pl
from jax.experimental.pallas import tpu as pltpu


def _encoder_kernel(kv_ref, q_ref, mask_ref,
                    wq_ref, bq_ref, wkv_ref, bkv_ref,
                    wo_ref, bo_ref, g1_ref, be1_ref,
                    w1_ref, b1_ref, w2_ref, b2_ref, g2_ref, be2_ref,
                    out_ref, kv_sc, *, n_head, eps):
    """Grid = (batch, query_tile). One step computes one (tq, D) output slab."""
    qt = pl.program_id(1)
    tq, D = q_ref.shape[1], q_ref.shape[2]
    dk = D // n_head
    scale = 1.0 / math.sqrt(dk)

    # ---- fused K/V projection: once per batch element, reused across query tiles ----
    @pl.when(qt == 0)
    def _():
        xf = kv_ref[0].astype(jnp.bfloat16)                                 # (S, D)
        kv = jnp.dot(xf, wkv_ref[...], preferred_element_type=jnp.float32)  # (S, 2D)
        kv_sc[...] = (kv + bkv_ref[...]).astype(jnp.bfloat16)

    x = q_ref[0]                                   # (tq, D) f32 rows (residual path)
    xb = x.astype(jnp.bfloat16)

    # ---- Q projection (softmax scale folded in once) ----
    q = jnp.dot(xb, wq_ref[...], preferred_element_type=jnp.float32) + bq_ref[...]
    qb = (q * scale).astype(jnp.bfloat16)                                   # (tq, D)

    # ---- additive mask bias, computed once and shared by all heads ----
    mask_bias = jnp.where(mask_ref[0] > 0, 0.0, -1e9).astype(jnp.float32)   # (1, S)

    kv_all = kv_sc[...]                                                     # (S, 2D) bf16
    wo_all = wo_ref[...]                                                    # (D, D)  bf16

    # q @ k^T without materializing a transpose: contract last dims of both.
    qk_dims = (((1,), (1,)), ((), ()))

    attn = jnp.zeros((tq, D), jnp.float32)
    # TODO(synk): for large n_head, process heads in lane-aligned groups (or a grid
    # axis) instead of a full Python unroll, to bound vreg pressure.
    for h in range(n_head):
        k_h = kv_all[:, h * dk:(h + 1) * dk]                                # (S, dk)
        v_h = kv_all[:, D + h * dk:D + (h + 1) * dk]                        # (S, dk)
        s = jax.lax.dot_general(qb[:, h * dk:(h + 1) * dk], k_h,
                                dimension_numbers=qk_dims,
                                preferred_element_type=jnp.float32)         # (tq, S)
        s = s + mask_bias
        s = s - jnp.max(s, axis=-1, keepdims=True)
        p = jnp.exp(s)
        p = p * pl.reciprocal(jnp.sum(p, axis=-1, keepdims=True), approx=True)
        head = jnp.dot(p.astype(jnp.bfloat16), v_h,
                       preferred_element_type=jnp.float32)                  # (tq, dk)
        # Fold the output projection in per head -> no lane-dim concat of heads.
        attn = attn + jnp.dot(head.astype(jnp.bfloat16), wo_all[h * dk:(h + 1) * dk, :],
                              preferred_element_type=jnp.float32)           # (tq, D)
    attn = attn + bo_ref[...]

    # ---- residual + LayerNorm 1 (f32 elementwise) ----
    y = x + attn
    mu = jnp.mean(y, axis=-1, keepdims=True)
    var = jnp.mean((y - mu) ** 2, axis=-1, keepdims=True)
    y = (y - mu) * jax.lax.rsqrt(var + eps) * g1_ref[...] + be1_ref[...]

    # ---- position-wise feed-forward: Linear -> ReLU -> Linear ----
    h1 = jnp.dot(y.astype(jnp.bfloat16), w1_ref[...],
                 preferred_element_type=jnp.float32) + b1_ref[...]
    h1 = jnp.maximum(h1, 0.0)
    ff = jnp.dot(h1.astype(jnp.bfloat16), w2_ref[...],
                 preferred_element_type=jnp.float32) + b2_ref[...]

    # ---- residual + LayerNorm 2 ----
    z = y + ff
    mu2 = jnp.mean(z, axis=-1, keepdims=True)
    var2 = jnp.mean((z - mu2) ** 2, axis=-1, keepdims=True)
    out_ref[0] = ((z - mu2) * jax.lax.rsqrt(var2 + eps) * g2_ref[...]
                  + be2_ref[...]).astype(out_ref.dtype)


def encoder_forward(inp, mask, params, *, n_head, tq=None, eps=1e-5):
    """inp: [B, S, D] f32, mask: [B, 1, S] (1 keep / 0 masked)."""
    B, S, D = inp.shape
    d_ff = params["w1"].shape[1]
    assert D % n_head == 0, "d_m must be divisible by n_head"
    if tq is None:
        tq = S if S <= 256 else 256      # v7x-safe tile; v5e/v6e can pass a larger tq
    assert S % tq == 0, "sequence length must be divisible by the query tile"
    n_qt = S // tq

    f32, bf16 = jnp.float32, jnp.bfloat16
    # bf16 weights feed the MXU at its native rate (f32 accumulation in-kernel);
    # biases / LayerNorm params stay f32 (all elementwise math is kept in f32).
    cast_w = lambda name: params[name].astype(bf16)
    cast_f = lambda name: params[name].astype(f32)
    # Fuse K and V projections into one (D, 2D) weight -> one big MXU call.
    wkv = jnp.concatenate([params["wk"], params["wv"]], axis=1).astype(bf16)
    bkv = jnp.concatenate([params["bk"], params["bv"]], axis=1).astype(f32)
    inp_f32 = inp.astype(f32)
    args = (inp_f32, inp_f32, mask.astype(f32),
            cast_w("wq"), cast_f("bq"), wkv, bkv,
            cast_w("wo"), cast_f("bo"),
            cast_f("g1"), cast_f("be1"),
            cast_w("w1"), cast_f("b1"), cast_w("w2"), cast_f("b2"),
            cast_f("g2"), cast_f("be2"))

    # Explicit VMEM budget: bf16 weights + activation tiles + K/V scratch, with
    # headroom, capped below the smallest physical VMEM (v7x: 64 MiB per TC).
    w_bytes = 2 * (4 * D * D + 2 * D * d_ff) + 4 * (8 * D + d_ff)
    a_bytes = (4 * S * D            # full-seq f32 input block
               + 4 * S * D          # (S, 2D) bf16 K/V scratch
               + 4 * S              # mask
               + 8 * tq * D         # query + output tiles
               + 4 * tq * (S + 2 * D + d_ff))   # in-kernel temporaries
    vmem_limit = int(min(64 * 2 ** 20, max(32 * 2 ** 20, 4 * (w_bytes + a_bytes))))

    kernel = functools.partial(_encoder_kernel, n_head=n_head, eps=eps)
    out_shape = jax.ShapeDtypeStruct((B, S, D), f32)

    def build(single_buffer_weights):
        # Weights / biases / LN params are grid-invariant: single-buffer them when
        # the installed JAX supports pipeline_mode (halves their VMEM footprint).
        w_kwargs = {}
        if single_buffer_weights and hasattr(pl, "Buffered"):
            w_kwargs = dict(pipeline_mode=pl.Buffered(1))
        wspec = lambda shape: pl.BlockSpec(shape, lambda b, t: (0, 0), **w_kwargs)
        in_specs = [
            pl.BlockSpec((1, S, D), lambda b, t: (b, 0, 0)),     # inp (K/V source, full seq)
            pl.BlockSpec((1, tq, D), lambda b, t: (b, t, 0)),    # inp (query / residual rows)
            pl.BlockSpec((1, 1, S), lambda b, t: (b, 0, 0)),     # mask
            wspec((D, D)), wspec((1, D)),            # wq, bq
            wspec((D, 2 * D)), wspec((1, 2 * D)),    # wkv, bkv (fused)
            wspec((D, D)), wspec((1, D)),            # wo, bo
            wspec((1, D)), wspec((1, D)),            # ln1 gamma, beta
            wspec((D, d_ff)), wspec((1, d_ff)),      # w1, b1
            wspec((d_ff, D)), wspec((1, D)),         # w2, b2
            wspec((1, D)), wspec((1, D)),            # ln2 gamma, beta
        ]
        return pl.pallas_call(
            kernel,
            out_shape=out_shape,
            grid_spec=pltpu.PrefetchScalarGridSpec(
                num_scalar_prefetch=0,
                grid=(B, n_qt),
                in_specs=in_specs,
                out_specs=pl.BlockSpec((1, tq, D), lambda b, t: (b, t, 0)),
                scratch_shapes=[pltpu.VMEM((S, 2 * D), bf16)],   # fused K/V cache (bf16)
            ),
            compiler_params=pltpu.CompilerParams(
                dimension_semantics=("parallel", "arbitrary"),
                vmem_limit_bytes=vmem_limit),
        )

    try:
        return build(True)(*args)
    except Exception:
        # pipeline_mode=pl.Buffered(1) not supported by this JAX/Mosaic version:
        # fall back to default (double-buffered) weight blocks.
        return build(False)(*args)


def _reference(inp, mask, params, *, n_head, eps=1e-5):
    """Pure-JAX f32 reference of the same forward pass (sanity check)."""
    B, S, D = inp.shape
    dk = D // n_head
    q = inp @ params["wq"] + params["bq"]
    k = inp @ params["wk"] + params["bk"]
    v = inp @ params["wv"] + params["bv"]
    split = lambda t: t.reshape(B, S, n_head, dk).transpose(0, 2, 1, 3)
    q, k, v = split(q), split(k), split(v)
    s = jnp.einsum("bhqd,bhkd->bhqk", q, k) / math.sqrt(dk)
    s = jnp.where(mask[:, None, :, :] > 0, s, -1e9)
    p = jax.nn.softmax(s, axis=-1)
    o = jnp.einsum("bhqk,bhkd->bhqd", p, v).transpose(0, 2, 1, 3).reshape(B, S, D)
    attn = o @ params["wo"] + params["bo"]

    def ln(x, g, b):
        mu = jnp.mean(x, -1, keepdims=True)
        var = jnp.mean((x - mu) ** 2, -1, keepdims=True)
        return (x - mu) * jax.lax.rsqrt(var + eps) * g + b

    y = ln(inp + attn, params["g1"], params["be1"])
    ff = jnp.maximum(y @ params["w1"] + params["b1"], 0.0) @ params["w2"] + params["b2"]
    return ln(y + ff, params["g2"], params["be2"])


if __name__ == "__main__":
    B, S, D, d_ff, n_head = 2, 16, 32, 64, 4

    key = jax.random.PRNGKey(0)
    ks = jax.random.split(key, 14)
    init = lambda k, shape: (0.05 * jax.random.normal(k, shape)).astype(jnp.float32)

    params = {
        "wq": init(ks[0], (D, D)), "bq": init(ks[1], (1, D)),
        "wk": init(ks[2], (D, D)), "bk": init(ks[3], (1, D)),
        "wv": init(ks[4], (D, D)), "bv": init(ks[5], (1, D)),
        "wo": init(ks[6], (D, D)), "bo": init(ks[7], (1, D)),
        "g1": jnp.ones((1, D), jnp.float32), "be1": jnp.zeros((1, D), jnp.float32),
        "w1": init(ks[8], (D, d_ff)), "b1": init(ks[9], (1, d_ff)),
        "w2": init(ks[10], (d_ff, D)), "b2": init(ks[11], (1, D)),
        "g2": jnp.ones((1, D), jnp.float32), "be2": jnp.zeros((1, D), jnp.float32),
    }

    inp = jax.random.normal(ks[12], (B, S, D), jnp.float32)
    # mask: last three key positions of batch element 1 masked out.
    mask = jnp.ones((B, 1, S), jnp.float32)
    mask = mask.at[1, 0, -3:].set(0.0)

    # tq=8 -> two query tiles per batch element (exercises the K/V scratch reuse).
    out = encoder_forward(inp, mask, params, n_head=n_head, tq=8)
    out = jax.block_until_ready(out)

    ref = _reference(inp, mask, params, n_head=n_head)
    assert out.shape == (B, S, D)
    # bf16 MXU inputs + approx-reciprocal softmax vs. a pure-f32 reference.
    assert jnp.allclose(out, ref, atol=2e-2, rtol=2e-2), \
        float(jnp.max(jnp.abs(out - ref)))

    print("KERNEL_OK")
</pallas_src>

<mosaic_0001>
module attributes {stable_mosaic.version = 11 : i64} {
  func.func @_encoder_kernel(%arg0: i32, %arg1: i32, %arg2: memref<1x16x32xf32, #tpu.memory_space<vmem>>, %arg3: memref<1x8x32xf32, #tpu.memory_space<vmem>>, %arg4: memref<1x1x16xf32, #tpu.memory_space<vmem>>, %arg5: memref<32x32xbf16, #tpu.memory_space<vmem>>, %arg6: memref<1x32xf32, #tpu.memory_space<vmem>>, %arg7: memref<32x64xbf16, #tpu.memory_space<vmem>>, %arg8: memref<1x64xf32, #tpu.memory_space<vmem>>, %arg9: memref<32x32xbf16, #tpu.memory_space<vmem>>, %arg10: memref<1x32xf32, #tpu.memory_space<vmem>>, %arg11: memref<1x32xf32, #tpu.memory_space<vmem>>, %arg12: memref<1x32xf32, #tpu.memory_space<vmem>>, %arg13: memref<32x64xbf16, #tpu.memory_space<vmem>>, %arg14: memref<1x64xf32, #tpu.memory_space<vmem>>, %arg15: memref<64x32xbf16, #tpu.memory_space<vmem>>, %arg16: memref<1x32xf32, #tpu.memory_space<vmem>>, %arg17: memref<1x32xf32, #tpu.memory_space<vmem>>, %arg18: memref<1x32xf32, #tpu.memory_space<vmem>>, %arg19: memref<1x8x32xf32, #tpu.memory_space<vmem>>, %arg20: memref<16x64xbf16, #tpu.memory_space<vmem>>) attributes {dimension_semantics = [#tpu.dimension_semantics<parallel>, #tpu.dimension_semantics<arbitrary>], iteration_bounds = array<i64: 2, 2>, scalar_prefetch = 0 : i64, scratch_operands = 1 : i64, tpu.core_type = #tpu.core_type<tc>, window_params = [{transform_indices = @transform_0, window_bounds = array<i64: 1, 16, 32>}, {transform_indices = @transform_1, window_bounds = array<i64: 1, 8, 32>}, {transform_indices = @transform_2, window_bounds = array<i64: 1, 1, 16>}, {pipeline_mode = #tpu.pipeline_mode<synchronous>, transform_indices = @transform_3, window_bounds = array<i64: 32, 32>}, {pipeline_mode = #tpu.pipeline_mode<synchronous>, transform_indices = @transform_4, window_bounds = array<i64: 1, 32>}, {pipeline_mode = #tpu.pipeline_mode<synchronous>, transform_indices = @transform_5, window_bounds = array<i64: 32, 64>}, {pipeline_mode = #tpu.pipeline_mode<synchronous>, transform_indices = @transform_6, window_bounds = array<i64: 1, 64>}, {pipeline_mode = #tpu.pipeline_mode<synchronous>, transform_indices = @transform_7, window_bounds = array<i64: 32, 32>}, {pipeline_mode = #tpu.pipeline_mode<synchronous>, transform_indices = @transform_8, window_bounds = array<i64: 1, 32>}, {pipeline_mode = #tpu.pipeline_mode<synchronous>, transform_indices = @transform_9, window_bounds = array<i64: 1, 32>}, {pipeline_mode = #tpu.pipeline_mode<synchronous>, transform_indices = @transform_10, window_bounds = array<i64: 1, 32>}, {pipeline_mode = #tpu.pipeline_mode<synchronous>, transform_indices = @transform_11, window_bounds = array<i64: 32, 64>}, {pipeline_mode = #tpu.pipeline_mode<synchronous>, transform_indices = @transform_12, window_bounds = array<i64: 1, 64>}, {pipeline_mode = #tpu.pipeline_mode<synchronous>, transform_indices = @transform_13, window_bounds = array<i64: 64, 32>}, {pipeline_mode = #tpu.pipeline_mode<synchronous>, transform_indices = @transform_14, window_bounds = array<i64: 1, 32>}, {pipeline_mode = #tpu.pipeline_mode<synchronous>, transform_indices = @transform_15, window_bounds = array<i64: 1, 32>}, {pipeline_mode = #tpu.pipeline_mode<synchronous>, transform_indices = @transform_16, window_bounds = array<i64: 1, 32>}, {transform_indices = @transform_17, window_bounds = array<i64: 1, 8, 32>}]} {
    %c0_i32 = arith.constant 0 : i32
    %0 = arith.cmpi eq, %arg1, %c0_i32 : i32
    %1 = arith.extui %0 : i1 to i32
    %c0_i32_0 = arith.constant 0 : i32
    %2 = arith.cmpi ne, %1, %c0_i32_0 : i32
    scf.if %2 {
      %c0_73 = arith.constant 0 : index
      %c0_74 = arith.constant 0 : index
      %c0_75 = arith.constant 0 : index
      %182 = vector.load %arg2[%c0_73, %c0_74, %c0_75] : memref<1x16x32xf32, #tpu.memory_space<vmem>>, vector<1x16x32xf32>
      %183 = vector.shape_cast %182 : vector<1x16x32xf32> to vector<16x32xf32>
      %184 = arith.truncf %183 : vector<16x32xf32> to vector<16x32xbf16>
      %c0_76 = arith.constant 0 : index
      %c0_77 = arith.constant 0 : index
      %185 = vector.load %arg7[%c0_76, %c0_77] : memref<32x64xbf16, #tpu.memory_space<vmem>>, vector<32x64xbf16>
      %cst_78 = arith.constant dense<0.000000e+00> : vector<16x64xf32>
      %186 = tpu.matmul %184, %185, %cst_78 {dimension_numbers = #tpu.dot_dimension_numbers<[1], [0], [0], [1], [0, 0, 1, 1], [], []>} : vector<16x32xbf16>, vector<32x64xbf16>, vector<16x64xf32> -> vector<16x64xf32>
      %c0_79 = arith.constant 0 : index
      %c0_80 = arith.constant 0 : index
      %187 = vector.load %arg8[%c0_79, %c0_80] : memref<1x64xf32, #tpu.memory_space<vmem>>, vector<1x64xf32>
      %188 = vector.broadcast %187 : vector<1x64xf32> to vector<16x64xf32>
      %189 = arith.addf %186, %188 : vector<16x64xf32>
      %190 = arith.truncf %189 : vector<16x64xf32> to vector<16x64xbf16>
      %c0_81 = arith.constant 0 : index
      %c0_82 = arith.constant 0 : index
      %191 = vector.load %arg20[%c0_81, %c0_82] : memref<16x64xbf16, #tpu.memory_space<vmem>>, vector<16x64xbf16>
      tpu.vector_store %arg20[%c0_81, %c0_82], %190 {strides = array<i32>} : memref<16x64xbf16, #tpu.memory_space<vmem>>, vector<16x64xbf16>,
    } else {
    }
    %c0 = arith.constant 0 : index
    %c0_1 = arith.constant 0 : index
    %c0_2 = arith.constant 0 : index
    %3 = vector.load %arg3[%c0, %c0_1, %c0_2] : memref<1x8x32xf32, #tpu.memory_space<vmem>>, vector<1x8x32xf32>
    %4 = vector.shape_cast %3 : vector<1x8x32xf32> to vector<8x32xf32>
    %5 = arith.truncf %4 : vector<8x32xf32> to vector<8x32xbf16>
    %c0_3 = arith.constant 0 : index
    %c0_4 = arith.constant 0 : index
    %6 = vector.load %arg5[%c0_3, %c0_4] : memref<32x32xbf16, #tpu.memory_space<vmem>>, vector<32x32xbf16>
    %cst = arith.constant dense<0.000000e+00> : vector<8x32xf32>
    %7 = tpu.matmul %5, %6, %cst {dimension_numbers = #tpu.dot_dimension_numbers<[1], [0], [0], [1], [0, 0, 1, 1], [], []>} : vector<8x32xbf16>, vector<32x32xbf16>, vector<8x32xf32> -> vector<8x32xf32>
    %c0_5 = arith.constant 0 : index
    %c0_6 = arith.constant 0 : index
    %8 = vector.load %arg6[%c0_5, %c0_6] : memref<1x32xf32, #tpu.memory_space<vmem>>, vector<1x32xf32>
    %9 = vector.broadcast %8 : vector<1x32xf32> to vector<8x32xf32>
    %10 = arith.addf %7, %9 : vector<8x32xf32>
    %cst_7 = arith.constant 0.353553385 : f32
    %11 = vector.broadcast %cst_7 : f32 to vector<8x32xf32>
    %12 = arith.mulf %10, %11 : vector<8x32xf32>
    %13 = arith.truncf %12 : vector<8x32xf32> to vector<8x32xbf16>
    %c0_8 = arith.constant 0 : index
    %c0_9 = arith.constant 0 : index
    %c0_10 = arith.constant 0 : index
    %14 = vector.load %arg4[%c0_8, %c0_9, %c0_10] : memref<1x1x16xf32, #tpu.memory_space<vmem>>, vector<1x1x16xf32>
    %15 = vector.shape_cast %14 : vector<1x1x16xf32> to vector<1x16xf32>
    %cst_11 = arith.constant 0.000000e+00 : f32
    %16 = vector.broadcast %cst_11 : f32 to vector<1x16xf32>
    %17 = arith.cmpf ogt, %15, %16 : vector<1x16xf32>
    %cst_12 = arith.constant 0.000000e+00 : f32
    %cst_13 = arith.constant -1.000000e+09 : f32
    %18 = vector.broadcast %cst_12 : f32 to vector<1x16xf32>
    %19 = vector.broadcast %cst_13 : f32 to vector<1x16xf32>
    %20 = arith.select %17, %18, %19 : vector<1x16xi1>, vector<1x16xf32>
    %c0_14 = arith.constant 0 : index
    %c0_15 = arith.constant 0 : index
    %21 = vector.load %arg20[%c0_14, %c0_15] : memref<16x64xbf16, #tpu.memory_space<vmem>>, vector<16x64xbf16>
    %c0_16 = arith.constant 0 : index
    %c0_17 = arith.constant 0 : index
    %22 = vector.load %arg9[%c0_16, %c0_17] : memref<32x32xbf16, #tpu.memory_space<vmem>>, vector<32x32xbf16>
    %cst_18 = arith.constant 0.000000e+00 : f32
    %23 = vector.broadcast %cst_18 : f32 to vector<8x32xf32>
    %24 = vector.extract_strided_slice %21 {offsets = [0, 0], sizes = [16, 8], strides = [1, 1]} : vector<16x64xbf16> to vector<16x8xbf16>
    %25 = vector.extract_strided_slice %21 {offsets = [0, 32], sizes = [16, 8], strides = [1, 1]} : vector<16x64xbf16> to vector<16x8xbf16>
    %26 = vector.extract_strided_slice %13 {offsets = [0, 0], sizes = [8, 8], strides = [1, 1]} : vector<8x32xbf16> to vector<8x8xbf16>
    %cst_19 = arith.constant dense<0.000000e+00> : vector<8x16xf32>
    %27 = tpu.matmul %26, %24, %cst_19 {dimension_numbers = #tpu.dot_dimension_numbers<[1], [1], [0], [0], [0, 0, 1, 0], [], []>} : vector<8x8xbf16>, vector<16x8xbf16>, vector<8x16xf32> -> vector<8x16xf32>
    %28 = vector.broadcast %20 : vector<1x16xf32> to vector<8x16xf32>
    %29 = arith.addf %27, %28 : vector<8x16xf32>
    %cst_20 = arith.constant dense<0xFF800000> : vector<8xf32>
    %30 = vector.multi_reduction <maximumf>, %29, %cst_20 [1] : vector<8x16xf32> to vector<8xf32>
    %31 = vector.shape_cast %30 : vector<8xf32> to vector<8x1xf32>
    %32 = vector.broadcast %31 : vector<8x1xf32> to vector<8x16xf32>
    %33 = arith.subf %29, %32 : vector<8x16xf32>
    %34 = math.exp %33 : vector<8x16xf32>
    %cst_21 = arith.constant dense<0.000000e+00> : vector<8xf32>
    %35 = vector.multi_reduction <add>, %34, %cst_21 [1] : vector<8x16xf32> to vector<8xf32>
    %36 = vector.shape_cast %35 : vector<8xf32> to vector<8x1xf32>
    %37 = tpu.reciprocal %36 {approx = true} : vector<8x1xf32> -> vector<8x1xf32>
    %38 = vector.broadcast %37 : vector<8x1xf32> to vector<8x16xf32>
    %39 = arith.mulf %34, %38 : vector<8x16xf32>
    %40 = arith.truncf %39 : vector<8x16xf32> to vector<8x16xbf16>
    %cst_22 = arith.constant dense<0.000000e+00> : vector<8x8xf32>
    %41 = tpu.matmul %40, %25, %cst_22 {dimension_numbers = #tpu.dot_dimension_numbers<[1], [0], [0], [1], [0, 0, 1, 1], [], []>} : vector<8x16xbf16>, vector<16x8xbf16>, vector<8x8xf32> -> vector<8x8xf32>
    %42 = arith.truncf %41 : vector<8x8xf32> to vector<8x8xbf16>
    %43 = vector.extract_strided_slice %22 {offsets = [0, 0], sizes = [8, 32], strides = [1, 1]} : vector<32x32xbf16> to vector<8x32xbf16>
    %cst_23 = arith.constant dense<0.000000e+00> : vector<8x32xf32>
    %44 = tpu.matmul %42, %43, %cst_23 {dimension_numbers = #tpu.dot_dimension_numbers<[1], [0], [0], [1], [0, 0, 1, 1], [], []>} : vector<8x8xbf16>, vector<8x32xbf16>, vector<8x32xf32> -> vector<8x32xf32>
    %45 = arith.addf %23, %44 : vector<8x32xf32>
    %46 = vector.extract_strided_slice %21 {offsets = [0, 8], sizes = [16, 8], strides = [1, 1]} : vector<16x64xbf16> to vector<16x8xbf16>
    %47 = vector.extract_strided_slice %21 {offsets = [0, 40], sizes = [16, 8], strides = [1, 1]} : vector<16x64xbf16> to vector<16x8xbf16>
    %48 = vector.extract_strided_slice %13 {offsets = [0, 8], sizes = [8, 8], strides = [1, 1]} : vector<8x32xbf16> to vector<8x8xbf16>
    %cst_24 = arith.constant dense<0.000000e+00> : vector<8x16xf32>
    %49 = tpu.matmul %48, %46, %cst_24 {dimension_numbers = #tpu.dot_dimension_numbers<[1], [1], [0], [0], [0, 0, 1, 0], [], []>} : vector<8x8xbf16>, vector<16x8xbf16>, vector<8x16xf32> -> vector<8x16xf32>
    %50 = vector.broadcast %20 : vector<1x16xf32> to vector<8x16xf32>
    %51 = arith.addf %49, %50 : vector<8x16xf32>
    %cst_25 = arith.constant dense<0xFF800000> : vector<8xf32>
    %52 = vector.multi_reduction <maximumf>, %51, %cst_25 [1] : vector<8x16xf32> to vector<8xf32>
    %53 = vector.shape_cast %52 : vector<8xf32> to vector<8x1xf32>
    %54 = vector.broadcast %53 : vector<8x1xf32> to vector<8x16xf32>
    %55 = arith.subf %51, %54 : vector<8x16xf32>
    %56 = math.exp %55 : vector<8x16xf32>
    %cst_26 = arith.constant dense<0.000000e+00> : vector<8xf32>
    %57 = vector.multi_reduction <add>, %56, %cst_26 [1] : vector<8x16xf32> to vector<8xf32>
    %58 = vector.shape_cast %57 : vector<8xf32> to vector<8x1xf32>
    %59 = tpu.reciprocal %58 {approx = true} : vector<8x1xf32> -> vector<8x1xf32>
    %60 = vector.broadcast %59 : vector<8x1xf32> to vector<8x16xf32>
    %61 = arith.mulf %56, %60 : vector<8x16xf32>
    %62 = arith.truncf %61 : vector<8x16xf32> to vector<8x16xbf16>
    %cst_27 = arith.constant dense<0.000000e+00> : vector<8x8xf32>
    %63 = tpu.matmul %62, %47, %cst_27 {dimension_numbers = #tpu.dot_dimension_numbers<[1], [0], [0], [1], [0, 0, 1, 1], [], []>} : vector<8x16xbf16>, vector<16x8xbf16>, vector<8x8xf32> -> vector<8x8xf32>
    %64 = arith.truncf %63 : vector<8x8xf32> to vector<8x8xbf16>
    %65 = vector.extract_strided_slice %22 {offsets = [8, 0], sizes = [8, 32], strides = [1, 1]} : vector<32x32xbf16> to vector<8x32xbf16>
    %cst_28 = arith.constant dense<0.000000e+00> : vector<8x32xf32>
    %66 = tpu.matmul %64, %65, %cst_28 {dimension_numbers = #tpu.dot_dimension_numbers<[1], [0], [0], [1], [0, 0, 1, 1], [], []>} : vector<8x8xbf16>, vector<8x32xbf16>, vector<8x32xf32> -> vector<8x32xf32>
    %67 = arith.addf %45, %66 : vector<8x32xf32>
    %68 = vector.extract_strided_slice %21 {offsets = [0, 16], sizes = [16, 8], strides = [1, 1]} : vector<16x64xbf16> to vector<16x8xbf16>
    %69 = vector.extract_strided_slice %21 {offsets = [0, 48], sizes = [16, 8], strides = [1, 1]} : vector<16x64xbf16> to vector<16x8xbf16>
    %70 = vector.extract_strided_slice %13 {offsets = [0, 16], sizes = [8, 8], strides = [1, 1]} : vector<8x32xbf16> to vector<8x8xbf16>
    %cst_29 = arith.constant dense<0.000000e+00> : vector<8x16xf32>
    %71 = tpu.matmul %70, %68, %cst_29 {dimension_numbers = #tpu.dot_dimension_numbers<[1], [1], [0], [0], [0, 0, 1, 0], [], []>} : vector<8x8xbf16>, vector<16x8xbf16>, vector<8x16xf32> -> vector<8x16xf32>
    %72 = vector.broadcast %20 : vector<1x16xf32> to vector<8x16xf32>
    %73 = arith.addf %71, %72 : vector<8x16xf32>
    %cst_30 = arith.constant dense<0xFF800000> : vector<8xf32>
    %74 = vector.multi_reduction <maximumf>, %73, %cst_30 [1] : vector<8x16xf32> to vector<8xf32>
    %75 = vector.shape_cast %74 : vector<8xf32> to vector<8x1xf32>
    %76 = vector.broadcast %75 : vector<8x1xf32> to vector<8x16xf32>
    %77 = arith.subf %73, %76 : vector<8x16xf32>
    %78 = math.exp %77 : vector<8x16xf32>
    %cst_31 = arith.constant dense<0.000000e+00> : vector<8xf32>
    %79 = vector.multi_reduction <add>, %78, %cst_31 [1] : vector<8x16xf32> to vector<8xf32>
    %80 = vector.shape_cast %79 : vector<8xf32> to vector<8x1xf32>
    %81 = tpu.reciprocal %80 {approx = true} : vector<8x1xf32> -> vector<8x1xf32>
    %82 = vector.broadcast %81 : vector<8x1xf32> to vector<8x16xf32>
    %83 = arith.mulf %78, %82 : vector<8x16xf32>
    %84 = arith.truncf %83 : vector<8x16xf32> to vector<8x16xbf16>
    %cst_32 = arith.constant dense<0.000000e+00> : vector<8x8xf32>
    %85 = tpu.matmul %84, %69, %cst_32 {dimension_numbers = #tpu.dot_dimension_numbers<[1], [0], [0], [1], [0, 0, 1, 1], [], []>} : vector<8x16xbf16>, vector<16x8xbf16>, vector<8x8xf32> -> vector<8x8xf32>
    %86 = arith.truncf %85 : vector<8x8xf32> to vector<8x8xbf16>
    %87 = vector.extract_strided_slice %22 {offsets = [16, 0], sizes = [8, 32], strides = [1, 1]} : vector<32x32xbf16> to vector<8x32xbf16>
    %cst_33 = arith.constant dense<0.000000e+00> : vector<8x32xf32>
    %88 = tpu.matmul %86, %87, %cst_33 {dimension_numbers = #tpu.dot_dimension_numbers<[1], [0], [0], [1], [0, 0, 1, 1], [], []>} : vector<8x8xbf16>, vector<8x32xbf16>, vector<8x32xf32> -> vector<8x32xf32>
    %89 = arith.addf %67, %88 : vector<8x32xf32>
    %90 = vector.extract_strided_slice %21 {offsets = [0, 24], sizes = [16, 8], strides = [1, 1]} : vector<16x64xbf16> to vector<16x8xbf16>
    %91 = vector.extract_strided_slice %21 {offsets = [0, 56], sizes = [16, 8], strides = [1, 1]} : vector<16x64xbf16> to vector<16x8xbf16>
    %92 = vector.extract_strided_slice %13 {offsets = [0, 24], sizes = [8, 8], strides = [1, 1]} : vector<8x32xbf16> to vector<8x8xbf16>
    %cst_34 = arith.constant dense<0.000000e+00> : vector<8x16xf32>
    %93 = tpu.matmul %92, %90, %cst_34 {dimension_numbers = #tpu.dot_dimension_numbers<[1], [1], [0], [0], [0, 0, 1, 0], [], []>} : vector<8x8xbf16>, vector<16x8xbf16>, vector<8x16xf32> -> vector<8x16xf32>
    %94 = vector.broadcast %20 : vector<1x16xf32> to vector<8x16xf32>
    %95 = arith.addf %93, %94 : vector<8x16xf32>
    %cst_35 = arith.constant dense<0xFF800000> : vector<8xf32>
    %96 = vector.multi_reduction <maximumf>, %95, %cst_35 [1] : vector<8x16xf32> to vector<8xf32>
    %97 = vector.shape_cast %96 : vector<8xf32> to vector<8x1xf32>
    %98 = vector.broadcast %97 : vector<8x1xf32> to vector<8x16xf32>
    %99 = arith.subf %95, %98 : vector<8x16xf32>
    %100 = math.exp %99 : vector<8x16xf32>
    %cst_36 = arith.constant dense<0.000000e+00> : vector<8xf32>
    %101 = vector.multi_reduction <add>, %100, %cst_36 [1] : vector<8x16xf32> to vector<8xf32>
    %102 = vector.shape_cast %101 : vector<8xf32> to vector<8x1xf32>
    %103 = tpu.reciprocal %102 {approx = true} : vector<8x1xf32> -> vector<8x1xf32>
    %104 = vector.broadcast %103 : vector<8x1xf32> to vector<8x16xf32>
    %105 = arith.mulf %100, %104 : vector<8x16xf32>
    %106 = arith.truncf %105 : vector<8x16xf32> to vector<8x16xbf16>
    %cst_37 = arith.constant dense<0.000000e+00> : vector<8x8xf32>
    %107 = tpu.matmul %106, %91, %cst_37 {dimension_numbers = #tpu.dot_dimension_numbers<[1], [0], [0], [1], [0, 0, 1, 1], [], []>} : vector<8x16xbf16>, vector<16x8xbf16>, vector<8x8xf32> -> vector<8x8xf32>
    %108 = arith.truncf %107 : vector<8x8xf32> to vector<8x8xbf16>
    %109 = vector.extract_strided_slice %22 {offsets = [24, 0], sizes = [8, 32], strides = [1, 1]} : vector<32x32xbf16> to vector<8x32xbf16>
    %cst_38 = arith.constant dense<0.000000e+00> : vector<8x32xf32>
    %110 = tpu.matmul %108, %109, %cst_38 {dimension_numbers = #tpu.dot_dimension_numbers<[1], [0], [0], [1], [0, 0, 1, 1], [], []>} : vector<8x8xbf16>, vector<8x32xbf16>, vector<8x32xf32> -> vector<8x32xf32>
    %111 = arith.addf %89, %110 : vector<8x32xf32>
    %c0_39 = arith.constant 0 : index
    %c0_40 = arith.constant 0 : index
    %112 = vector.load %arg10[%c0_39, %c0_40] : memref<1x32xf32, #tpu.memory_space<vmem>>, vector<1x32xf32>
    %113 = vector.broadcast %112 : vector<1x32xf32> to vector<8x32xf32>
    %114 = arith.addf %111, %113 : vector<8x32xf32>
    %115 = arith.addf %4, %114 : vector<8x32xf32>
    %cst_41 = arith.constant dense<0.000000e+00> : vector<8xf32>
    %116 = vector.multi_reduction <add>, %115, %cst_41 [1] : vector<8x32xf32> to vector<8xf32>
    %117 = vector.shape_cast %116 : vector<8xf32> to vector<8x1xf32>
    %cst_42 = arith.constant 3.200000e+01 : f32
    %118 = vector.broadcast %cst_42 : f32 to vector<8x1xf32>
    %119 = arith.divf %117, %118 : vector<8x1xf32>
    %120 = vector.broadcast %119 : vector<8x1xf32> to vector<8x32xf32>
    %121 = arith.subf %115, %120 : vector<8x32xf32>
    %122 = arith.mulf %121, %121 : vector<8x32xf32>
    %cst_43 = arith.constant dense<0.000000e+00> : vector<8xf32>
    %123 = vector.multi_reduction <add>, %122, %cst_43 [1] : vector<8x32xf32> to vector<8xf32>
    %124 = vector.shape_cast %123 : vector<8xf32> to vector<8x1xf32>
    %cst_44 = arith.constant 3.200000e+01 : f32
    %125 = vector.broadcast %cst_44 : f32 to vector<8x1xf32>
    %126 = arith.divf %124, %125 : vector<8x1xf32>
    %127 = vector.broadcast %119 : vector<8x1xf32> to vector<8x32xf32>
    %128 = arith.subf %115, %127 : vector<8x32xf32>
    %cst_45 = arith.constant 9.99999974E-6 : f32
    %129 = vector.broadcast %cst_45 : f32 to vector<8x1xf32>
    %130 = arith.addf %126, %129 : vector<8x1xf32>
    %131 = math.rsqrt %130 : vector<8x1xf32>
    %132 = vector.broadcast %131 : vector<8x1xf32> to vector<8x32xf32>
    %133 = arith.mulf %128, %132 : vector<8x32xf32>
    %c0_46 = arith.constant 0 : index
    %c0_47 = arith.constant 0 : index
    %134 = vector.load %arg11[%c0_46, %c0_47] : memref<1x32xf32, #tpu.memory_space<vmem>>, vector<1x32xf32>
    %135 = vector.broadcast %134 : vector<1x32xf32> to vector<8x32xf32>
    %136 = arith.mulf %133, %135 : vector<8x32xf32>
    %c0_48 = arith.constant 0 : index
    %c0_49 = arith.constant 0 : index
    %137 = vector.load %arg12[%c0_48, %c0_49] : memref<1x32xf32, #tpu.memory_space<vmem>>, vector<1x32xf32>
    %138 = vector.broadcast %137 : vector<1x32xf32> to vector<8x32xf32>
    %139 = arith.addf %136, %138 : vector<8x32xf32>
    %140 = arith.truncf %139 : vector<8x32xf32> to vector<8x32xbf16>
    %c0_50 = arith.constant 0 : index
    %c0_51 = arith.constant 0 : index
    %141 = vector.load %arg13[%c0_50, %c0_51] : memref<32x64xbf16, #tpu.memory_space<vmem>>, vector<32x64xbf16>
    %cst_52 = arith.constant dense<0.000000e+00> : vector<8x64xf32>
    %142 = tpu.matmul %140, %141, %cst_52 {dimension_numbers = #tpu.dot_dimension_numbers<[1], [0], [0], [1], [0, 0, 1, 1], [], []>} : vector<8x32xbf16>, vector<32x64xbf16>, vector<8x64xf32> -> vector<8x64xf32>
    %c0_53 = arith.constant 0 : index
    %c0_54 = arith.constant 0 : index
    %143 = vector.load %arg14[%c0_53, %c0_54] : memref<1x64xf32, #tpu.memory_space<vmem>>, vector<1x64xf32>
    %144 = vector.broadcast %143 : vector<1x64xf32> to vector<8x64xf32>
    %145 = arith.addf %142, %144 : vector<8x64xf32>
    %cst_55 = arith.constant 0.000000e+00 : f32
    %146 = vector.broadcast %cst_55 : f32 to vector<8x64xf32>
    %147 = arith.maximumf %145, %146 : vector<8x64xf32>
    %148 = arith.truncf %147 : vector<8x64xf32> to vector<8x64xbf16>
    %c0_56 = arith.constant 0 : index
    %c0_57 = arith.constant 0 : index
    %149 = vector.load %arg15[%c0_56, %c0_57] : memref<64x32xbf16, #tpu.memory_space<vmem>>, vector<64x32xbf16>
    %cst_58 = arith.constant dense<0.000000e+00> : vector<8x32xf32>
    %150 = tpu.matmul %148, %149, %cst_58 {dimension_numbers = #tpu.dot_dimension_numbers<[1], [0], [0], [1], [0, 0, 1, 1], [], []>} : vector<8x64xbf16>, vector<64x32xbf16>, vector<8x32xf32> -> vector<8x32xf32>
    %c0_59 = arith.constant 0 : index
    %c0_60 = arith.constant 0 : index
    %151 = vector.load %arg16[%c0_59, %c0_60] : memref<1x32xf32, #tpu.memory_space<vmem>>, vector<1x32xf32>
    %152 = vector.broadcast %151 : vector<1x32xf32> to vector<8x32xf32>
    %153 = arith.addf %150, %152 : vector<8x32xf32>
    %154 = arith.addf %139, %153 : vector<8x32xf32>
    %cst_61 = arith.constant dense<0.000000e+00> : vector<8xf32>
    %155 = vector.multi_reduction <add>, %154, %cst_61 [1] : vector<8x32xf32> to vector<8xf32>
    %156 = vector.shape_cast %155 : vector<8xf32> to vector<8x1xf32>
    %cst_62 = arith.constant 3.200000e+01 : f32
    %157 = vector.broadcast %cst_62 : f32 to vector<8x1xf32>
    %158 = arith.divf %156, %157 : vector<8x1xf32>
    %159 = vector.broadcast %158 : vector<8x1xf32> to vector<8x32xf32>
    %160 = arith.subf %154, %159 : vector<8x32xf32>
    %161 = arith.mulf %160, %160 : vector<8x32xf32>
    %cst_63 = arith.constant dense<0.000000e+00> : vector<8xf32>
    %162 = vector.multi_reduction <add>, %161, %cst_63 [1] : vector<8x32xf32> to vector<8xf32>
    %163 = vector.shape_cast %162 : vector<8xf32> to vector<8x1xf32>
    %cst_64 = arith.constant 3.200000e+01 : f32
    %164 = vector.broadcast %cst_64 : f32 to vector<8x1xf32>
    %165 = arith.divf %163, %164 : vector<8x1xf32>
    %166 = vector.broadcast %158 : vector<8x1xf32> to vector<8x32xf32>
    %167 = arith.subf %154, %166 : vector<8x32xf32>
    %cst_65 = arith.constant 9.99999974E-6 : f32
    %168 = vector.broadcast %cst_65 : f32 to vector<8x1xf32>
    %169 = arith.addf %165, %168 : vector<8x1xf32>
    %170 = math.rsqrt %169 : vector<8x1xf32>
    %171 = vector.broadcast %170 : vector<8x1xf32> to vector<8x32xf32>
    %172 = arith.mulf %167, %171 : vector<8x32xf32>
    %c0_66 = arith.constant 0 : index
    %c0_67 = arith.constant 0 : index
    %173 = vector.load %arg17[%c0_66, %c0_67] : memref<1x32xf32, #tpu.memory_space<vmem>>, vector<1x32xf32>
    %174 = vector.broadcast %173 : vector<1x32xf32> to vector<8x32xf32>
    %175 = arith.mulf %172, %174 : vector<8x32xf32>
    %c0_68 = arith.constant 0 : index
    %c0_69 = arith.constant 0 : index
    %176 = vector.load %arg18[%c0_68, %c0_69] : memref<1x32xf32, #tpu.memory_space<vmem>>, vector<1x32xf32>
    %177 = vector.broadcast %176 : vector<1x32xf32> to vector<8x32xf32>
    %178 = arith.addf %175, %177 : vector<8x32xf32>
    %c0_70 = arith.constant 0 : index
    %c0_71 = arith.constant 0 : index
    %c0_72 = arith.constant 0 : index
    %179 = vector.load %arg19[%c0_70, %c0_71, %c0_72] : memref<1x8x32xf32, #tpu.memory_space<vmem>>, vector<1x8x32xf32>
    %180 = vector.shape_cast %179 : vector<1x8x32xf32> to vector<8x32xf32>
    %181 = vector.shape_cast %178 : vector<8x32xf32> to vector<1x8x32xf32>
    tpu.vector_store %arg19[%c0_70, %c0_71, %c0_72], %181 {strides = array<i32>} : memref<1x8x32xf32, #tpu.memory_space<vmem>>, vector<1x8x32xf32>,
    return
  }
  func.func @transform_0(%arg0: i32, %arg1: i32) -> (i32, i32, i32) {
    %c0_i32 = arith.constant 0 : i32
    %c0_i32_0 = arith.constant 0 : i32
    %c0_i32_1 = arith.constant 0 : i32
    return %arg0, %c0_i32, %c0_i32_0 : i32, i32, i32
  }
  func.func @transform_1(%arg0: i32, %arg1: i32) -> (i32, i32, i32) {
    %c0_i32 = arith.constant 0 : i32
    %c0_i32_0 = arith.constant 0 : i32
    return %arg0, %arg1, %c0_i32 : i32, i32, i32
  }
  func.func @transform_2(%arg0: i32, %arg1: i32) -> (i32, i32, i32) {
    %c0_i32 = arith.constant 0 : i32
    %c0_i32_0 = arith.constant 0 : i32
    %c0_i32_1 = arith.constant 0 : i32
    return %arg0, %c0_i32, %c0_i32_0 : i32, i32, i32
  }
  func.func @transform_3(%arg0: i32, %arg1: i32) -> (i32, i32) {
    %c0_i32 = arith.constant 0 : i32
    %c0_i32_0 = arith.constant 0 : i32
    %c0_i32_1 = arith.constant 0 : i32
    return %c0_i32, %c0_i32_0 : i32, i32
  }
  func.func @transform_4(%arg0: i32, %arg1: i32) -> (i32, i32) {
    %c0_i32 = arith.constant 0 : i32
    %c0_i32_0 = arith.constant 0 : i32
    %c0_i32_1 = arith.constant 0 : i32
    return %c0_i32, %c0_i32_0 : i32, i32
  }
  func.func @transform_5(%arg0: i32, %arg1: i32) -> (i32, i32) {
    %c0_i32 = arith.constant 0 : i32
    %c0_i32_0 = arith.constant 0 : i32
    %c0_i32_1 = arith.constant 0 : i32
    return %c0_i32, %c0_i32_0 : i32, i32
  }
  func.func @transform_6(%arg0: i32, %arg1: i32) -> (i32, i32) {
    %c0_i32 = arith.constant 0 : i32
    %c0_i32_0 = arith.constant 0 : i32
    %c0_i32_1 = arith.constant 0 : i32
    return %c0_i32, %c0_i32_0 : i32, i32
  }
  func.func @transform_7(%arg0: i32, %arg1: i32) -> (i32, i32) {
    %c0_i32 = arith.constant 0 : i32
    %c0_i32_0 = arith.constant 0 : i32
    %c0_i32_1 = arith.constant 0 : i32
    return %c0_i32, %c0_i32_0 : i32, i32
  }
  func.func @transform_8(%arg0: i32, %arg1: i32) -> (i32, i32) {
    %c0_i32 = arith.constant 0 : i32
    %c0_i32_0 = arith.constant 0 : i32
    %c0_i32_1 = arith.constant 0 : i32
    return %c0_i32, %c0_i32_0 : i32, i32
  }
  func.func @transform_9(%arg0: i32, %arg1: i32) -> (i32, i32) {
    %c0_i32 = arith.constant 0 : i32
    %c0_i32_0 = arith.constant 0 : i32
    %c0_i32_1 = arith.constant 0 : i32
    return %c0_i32, %c0_i32_0 : i32, i32
  }
  func.func @transform_10(%arg0: i32, %arg1: i32) -> (i32, i32) {
    %c0_i32 = arith.constant 0 : i32
    %c0_i32_0 = arith.constant 0 : i32
    %c0_i32_1 = arith.constant 0 : i32
    return %c0_i32, %c0_i32_0 : i32, i32
  }
  func.func @transform_11(%arg0: i32, %arg1: i32) -> (i32, i32) {
    %c0_i32 = arith.constant 0 : i32
    %c0_i32_0 = arith.constant 0 : i32
    %c0_i32_1 = arith.constant 0 : i32
    return %c0_i32, %c0_i32_0 : i32, i32
  }
  func.func @transform_12(%arg0: i32, %arg1: i32) -> (i32, i32) {
    %c0_i32 = arith.constant 0 : i32
    %c0_i32_0 = arith.constant 0 : i32
    %c0_i32_1 = arith.constant 0 : i32
    return %c0_i32, %c0_i32_0 : i32, i32
  }
  func.func @transform_13(%arg0: i32, %arg1: i32) -> (i32, i32) {
    %c0_i32 = arith.constant 0 : i32
    %c0_i32_0 = arith.constant 0 : i32
    %c0_i32_1 = arith.constant 0 : i32
    return %c0_i32, %c0_i32_0 : i32, i32
  }
  func.func @transform_14(%arg0: i32, %arg1: i32) -> (i32, i32) {
    %c0_i32 = arith.constant 0 : i32
    %c0_i32_0 = arith.constant 0 : i32
    %c0_i32_1 = arith.constant 0 : i32
    return %c0_i32, %c0_i32_0 : i32, i32
  }
  func.func @transform_15(%arg0: i32, %arg1: i32) -> (i32, i32) {
    %c0_i32 = arith.constant 0 : i32
    %c0_i32_0 = arith.constant 0 : i32
    %c0_i32_1 = arith.constant 0 : i32
    return %c0_i32, %c0_i32_0 : i32, i32
  }
  func.func @transform_16(%arg0: i32, %arg1: i32) -> (i32, i32) {
    %c0_i32 = arith.constant 0 : i32
    %c0_i32_0 = arith.constant 0 : i32
    %c0_i32_1 = arith.constant 0 : i32
    return %c0_i32, %c0_i32_0 : i32, i32
  }
  func.func @transform_17(%arg0: i32, %arg1: i32) -> (i32, i32, i32) {
    %c0_i32 = arith.constant 0 : i32
    %c0_i32_0 = arith.constant 0 : i32
    return %arg0, %arg1, %c0_i32 : i32, i32, i32
  }
}

module attributes {stable_mosaic.version = 11 : i64} {
  func.func @_encoder_kernel(%arg0: i32, %arg1: i32, %arg2: memref<1x16x32xf32, #tpu.memory_space<vmem>>, %arg3: memref<1x8x32xf32, #tpu.memory_space<vmem>>, %arg4: memref<1x1x16xf32, #tpu.memory_space<vmem>>, %arg5: memref<32x32xbf16, #tpu.memory_space<vmem>>, %arg6: memref<1x32xf32, #tpu.memory_space<vmem>>, %arg7: memref<32x64xbf16, #tpu.memory_space<vmem>>, %arg8: memref<1x64xf32, #tpu.memory_space<vmem>>, %arg9: memref<32x32xbf16, #tpu.memory_space<vmem>>, %arg10: memref<1x32xf32, #tpu.memory_space<vmem>>, %arg11: memref<1x32xf32, #tpu.memory_space<vmem>>, %arg12: memref<1x32xf32, #tpu.memory_space<vmem>>, %arg13: memref<32x64xbf16, #tpu.memory_space<vmem>>, %arg14: memref<1x64xf32, #tpu.memory_space<vmem>>, %arg15: memref<64x32xbf16, #tpu.memory_space<vmem>>, %arg16: memref<1x32xf32, #tpu.memory_space<vmem>>, %arg17: memref<1x32xf32, #tpu.memory_space<vmem>>, %arg18: memref<1x32xf32, #tpu.memory_space<vmem>>, %arg19: memref<1x8x32xf32, #tpu.memory_space<vmem>>, %arg20: memref<16x64xbf16, #tpu.memory_space<vmem>>) attributes {dimension_semantics = [#tpu.dimension_semantics<parallel>, #tpu.dimension_semantics<arbitrary>], iteration_bounds = array<i64: 2, 2>, scalar_prefetch = 0 : i64, scratch_operands = 1 : i64, tpu.core_type = #tpu.core_type<tc>, window_params = [{transform_indices = @transform_0, window_bounds = array<i64: 1, 16, 32>}, {transform_indices = @transform_1, window_bounds = array<i64: 1, 8, 32>}, {transform_indices = @transform_2, window_bounds = array<i64: 1, 1, 16>}, {pipeline_mode = #tpu.pipeline_mode<synchronous>, transform_indices = @transform_3, window_bounds = array<i64: 32, 32>}, {pipeline_mode = #tpu.pipeline_mode<synchronous>, transform_indices = @transform_4, window_bounds = array<i64: 1, 32>}, {pipeline_mode = #tpu.pipeline_mode<synchronous>, transform_indices = @transform_5, window_bounds = array<i64: 32, 64>}, {pipeline_mode = #tpu.pipeline_mode<synchronous>, transform_indices = @transform_6, window_bounds = array<i64: 1, 64>}, {pipeline_mode = #tpu.pipeline_mode<synchronous>, transform_indices = @transform_7, window_bounds = array<i64: 32, 32>}, {pipeline_mode = #tpu.pipeline_mode<synchronous>, transform_indices = @transform_8, window_bounds = array<i64: 1, 32>}, {pipeline_mode = #tpu.pipeline_mode<synchronous>, transform_indices = @transform_9, window_bounds = array<i64: 1, 32>}, {pipeline_mode = #tpu.pipeline_mode<synchronous>, transform_indices = @transform_10, window_bounds = array<i64: 1, 32>}, {pipeline_mode = #tpu.pipeline_mode<synchronous>, transform_indices = @transform_11, window_bounds = array<i64: 32, 64>}, {pipeline_mode = #tpu.pipeline_mode<synchronous>, transform_indices = @transform_12, window_bounds = array<i64: 1, 64>}, {pipeline_mode = #tpu.pipeline_mode<synchronous>, transform_indices = @transform_13, window_bounds = array<i64: 64, 32>}, {pipeline_mode = #tpu.pipeline_mode<synchronous>, transform_indices = @transform_14, window_bounds = array<i64: 1, 32>}, {pipeline_mode = #tpu.pipeline_mode<synchronous>, transform_indices = @transform_15, window_bounds = array<i64: 1, 32>}, {pipeline_mode = #tpu.pipeline_mode<synchronous>, transform_indices = @transform_16, window_bounds = array<i64: 1, 32>}, {transform_indices = @transform_17, window_bounds = array<i64: 1, 8, 32>}]} {
    %c0_i32 = arith.constant 0 : i32
    %0 = arith.cmpi eq, %arg1, %c0_i32 : i32
    %1 = arith.extui %0 : i1 to i32
    %c0_i32_0 = arith.constant 0 : i32
    %2 = arith.cmpi ne, %1, %c0_i32_0 : i32
    scf.if %2 {
      %c0_73 = arith.constant 0 : index
      %c0_74 = arith.constant 0 : index
      %c0_75 = arith.constant 0 : index
      %182 = vector.load %arg2[%c0_73, %c0_74, %c0_75] : memref<1x16x32xf32, #tpu.memory_space<vmem>>, vector<1x16x32xf32>
      %183 = vector.shape_cast %182 : vector<1x16x32xf32> to vector<16x32xf32>
      %184 = arith.truncf %183 : vector<16x32xf32> to vector<16x32xbf16>
      %c0_76 = arith.constant 0 : index
      %c0_77 = arith.constant 0 : index
      %185 = vector.load %arg7[%c0_76, %c0_77] : memref<32x64xbf16, #tpu.memory_space<vmem>>, vector<32x64xbf16>
      %cst_78 = arith.constant dense<0.000000e+00> : vector<16x64xf32>
      %186 = tpu.matmul %184, %185, %cst_78 {dimension_numbers = #tpu.dot_dimension_numbers<[1], [0], [0], [1], [0, 0, 1, 1], [], []>} : vector<16x32xbf16>, vector<32x64xbf16>, vector<16x64xf32> -> vector<16x64xf32>
      %c0_79 = arith.constant 0 : index
      %c0_80 = arith.constant 0 : index
      %187 = vector.load %arg8[%c0_79, %c0_80] : memref<1x64xf32, #tpu.memory_space<vmem>>, vector<1x64xf32>
      %188 = vector.broadcast %187 : vector<1x64xf32> to vector<16x64xf32>
      %189 = arith.addf %186, %188 : vector<16x64xf32>
      %190 = arith.truncf %189 : vector<16x64xf32> to vector<16x64xbf16>
      %c0_81 = arith.constant 0 : index
      %c0_82 = arith.constant 0 : index
      %191 = vector.load %arg20[%c0_81, %c0_82] : memref<16x64xbf16, #tpu.memory_space<vmem>>, vector<16x64xbf16>
      tpu.vector_store %arg20[%c0_81, %c0_82], %190 {strides = array<i32>} : memref<16x64xbf16, #tpu.memory_space<vmem>>, vector<16x64xbf16>,
    } else {
    }
    %c0 = arith.constant 0 : index
    %c0_1 = arith.constant 0 : index
    %c0_2 = arith.constant 0 : index
    %3 = vector.load %arg3[%c0, %c0_1, %c0_2] : memref<1x8x32xf32, #tpu.memory_space<vmem>>, vector<1x8x32xf32>
    %4 = vector.shape_cast %3 : vector<1x8x32xf32> to vector<8x32xf32>
    %5 = arith.truncf %4 : vector<8x32xf32> to vector<8x32xbf16>
    %c0_3 = arith.constant 0 : index
    %c0_4 = arith.constant 0 : index
    %6 = vector.load %arg5[%c0_3, %c0_4] : memref<32x32xbf16, #tpu.memory_space<vmem>>, vector<32x32xbf16>
    %cst = arith.constant dense<0.000000e+00> : vector<8x32xf32>
    %7 = tpu.matmul %5, %6, %cst {dimension_numbers = #tpu.dot_dimension_numbers<[1], [0], [0], [1], [0, 0, 1, 1], [], []>} : vector<8x32xbf16>, vector<32x32xbf16>, vector<8x32xf32> -> vector<8x32xf32>
    %c0_5 = arith.constant 0 : index
    %c0_6 = arith.constant 0 : index
    %8 = vector.load %arg6[%c0_5, %c0_6] : memref<1x32xf32, #tpu.memory_space<vmem>>, vector<1x32xf32>
    %9 = vector.broadcast %8 : vector<1x32xf32> to vector<8x32xf32>
    %10 = arith.addf %7, %9 : vector<8x32xf32>
    %cst_7 = arith.constant 0.353553385 : f32
    %11 = vector.broadcast %cst_7 : f32 to vector<8x32xf32>
    %12 = arith.mulf %10, %11 : vector<8x32xf32>
    %13 = arith.truncf %12 : vector<8x32xf32> to vector<8x32xbf16>
    %c0_8 = arith.constant 0 : index
    %c0_9 = arith.constant 0 : index
    %c0_10 = arith.constant 0 : index
    %14 = vector.load %arg4[%c0_8, %c0_9, %c0_10] : memref<1x1x16xf32, #tpu.memory_space<vmem>>, vector<1x1x16xf32>
    %15 = vector.shape_cast %14 : vector<1x1x16xf32> to vector<1x16xf32>
    %cst_11 = arith.constant 0.000000e+00 : f32
    %16 = vector.broadcast %cst_11 : f32 to vector<1x16xf32>
    %17 = arith.cmpf ogt, %15, %16 : vector<1x16xf32>
    %cst_12 = arith.constant 0.000000e+00 : f32
    %cst_13 = arith.constant -1.000000e+09 : f32
    %18 = vector.broadcast %cst_12 : f32 to vector<1x16xf32>
    %19 = vector.broadcast %cst_13 : f32 to vector<1x16xf32>
    %20 = arith.select %17, %18, %19 : vector<1x16xi1>, vector<1x16xf32>
    %c0_14 = arith.constant 0 : index
    %c0_15 = arith.constant 0 : index
    %21 = vector.load %arg20[%c0_14, %c0_15] : memref<16x64xbf16, #tpu.memory_space<vmem>>, vector<16x64xbf16>
    %c0_16 = arith.constant 0 : index
    %c0_17 = arith.constant 0 : index
    %22 = vector.load %arg9[%c0_16, %c0_17] : memref<32x32xbf16, #tpu.memory_space<vmem>>, vector<32x32xbf16>
    %cst_18 = arith.constant 0.000000e+00 : f32
    %23 = vector.broadcast %cst_18 : f32 to vector<8x32xf32>
    %24 = vector.extract_strided_slice %21 {offsets = [0, 0], sizes = [16, 8], strides = [1, 1]} : vector<16x64xbf16> to vector<16x8xbf16>
    %25 = vector.extract_strided_slice %21 {offsets = [0, 32], sizes = [16, 8], strides = [1, 1]} : vector<16x64xbf16> to vector<16x8xbf16>
    %26 = vector.extract_strided_slice %13 {offsets = [0, 0], sizes = [8, 8], strides = [1, 1]} : vector<8x32xbf16> to vector<8x8xbf16>
    %cst_19 = arith.constant dense<0.000000e+00> : vector<8x16xf32>
    %27 = tpu.matmul %26, %24, %cst_19 {dimension_numbers = #tpu.dot_dimension_numbers<[1], [1], [0], [0], [0, 0, 1, 0], [], []>} : vector<8x8xbf16>, vector<16x8xbf16>, vector<8x16xf32> -> vector<8x16xf32>
    %28 = vector.broadcast %20 : vector<1x16xf32> to vector<8x16xf32>
    %29 = arith.addf %27, %28 : vector<8x16xf32>
    %cst_20 = arith.constant dense<0xFF800000> : vector<8xf32>
    %30 = vector.multi_reduction <maximumf>, %29, %cst_20 [1] : vector<8x16xf32> to vector<8xf32>
    %31 = vector.shape_cast %30 : vector<8xf32> to vector<8x1xf32>
    %32 = vector.broadcast %31 : vector<8x1xf32> to vector<8x16xf32>
    %33 = arith.subf %29, %32 : vector<8x16xf32>
    %34 = math.exp %33 : vector<8x16xf32>
    %cst_21 = arith.constant dense<0.000000e+00> : vector<8xf32>
    %35 = vector.multi_reduction <add>, %34, %cst_21 [1] : vector<8x16xf32> to vector<8xf32>
    %36 = vector.shape_cast %35 : vector<8xf32> to vector<8x1xf32>
    %37 = tpu.reciprocal %36 {approx = true} : vector<8x1xf32> -> vector<8x1xf32>
    %38 = vector.broadcast %37 : vector<8x1xf32> to vector<8x16xf32>
    %39 = arith.mulf %34, %38 : vector<8x16xf32>
    %40 = arith.truncf %39 : vector<8x16xf32> to vector<8x16xbf16>
    %cst_22 = arith.constant dense<0.000000e+00> : vector<8x8xf32>
    %41 = tpu.matmul %40, %25, %cst_22 {dimension_numbers = #tpu.dot_dimension_numbers<[1], [0], [0], [1], [0, 0, 1, 1], [], []>} : vector<8x16xbf16>, vector<16x8xbf16>, vector<8x8xf32> -> vector<8x8xf32>
    %42 = arith.truncf %41 : vector<8x8xf32> to vector<8x8xbf16>
    %43 = vector.extract_strided_slice %22 {offsets = [0, 0], sizes = [8, 32], strides = [1, 1]} : vector<32x32xbf16> to vector<8x32xbf16>
    %cst_23 = arith.constant dense<0.000000e+00> : vector<8x32xf32>
    %44 = tpu.matmul %42, %43, %cst_23 {dimension_numbers = #tpu.dot_dimension_numbers<[1], [0], [0], [1], [0, 0, 1, 1], [], []>} : vector<8x8xbf16>, vector<8x32xbf16>, vector<8x32xf32> -> vector<8x32xf32>
    %45 = arith.addf %23, %44 : vector<8x32xf32>
    %46 = vector.extract_strided_slice %21 {offsets = [0, 8], sizes = [16, 8], strides = [1, 1]} : vector<16x64xbf16> to vector<16x8xbf16>
    %47 = vector.extract_strided_slice %21 {offsets = [0, 40], sizes = [16, 8], strides = [1, 1]} : vector<16x64xbf16> to vector<16x8xbf16>
    %48 = vector.extract_strided_slice %13 {offsets = [0, 8], sizes = [8, 8], strides = [1, 1]} : vector<8x32xbf16> to vector<8x8xbf16>
    %cst_24 = arith.constant dense<0.000000e+00> : vector<8x16xf32>
    %49 = tpu.matmul %48, %46, %cst_24 {dimension_numbers = #tpu.dot_dimension_numbers<[1], [1], [0], [0], [0, 0, 1, 0], [], []>} : vector<8x8xbf16>, vector<16x8xbf16>, vector<8x16xf32> -> vector<8x16xf32>
    %50 = vector.broadcast %20 : vector<1x16xf32> to vector<8x16xf32>
    %51 = arith.addf %49, %50 : vector<8x16xf32>
    %cst_25 = arith.constant dense<0xFF800000> : vector<8xf32>
    %52 = vector.multi_reduction <maximumf>, %51, %cst_25 [1] : vector<8x16xf32> to vector<8xf32>
    %53 = vector.shape_cast %52 : vector<8xf32> to vector<8x1xf32>
    %54 = vector.broadcast %53 : vector<8x1xf32> to vector<8x16xf32>
    %55 = arith.subf %51, %54 : vector<8x16xf32>
    %56 = math.exp %55 : vector<8x16xf32>
    %cst_26 = arith.constant dense<0.000000e+00> : vector<8xf32>
    %57 = vector.multi_reduction <add>, %56, %cst_26 [1] : vector<8x16xf32> to vector<8xf32>
    %58 = vector.shape_cast %57 : vector<8xf32> to vector<8x1xf32>
    %59 = tpu.reciprocal %58 {approx = true} : vector<8x1xf32> -> vector<8x1xf32>
    %60 = vector.broadcast %59 : vector<8x1xf32> to vector<8x16xf32>
    %61 = arith.mulf %56, %60 : vector<8x16xf32>
    %62 = arith.truncf %61 : vector<8x16xf32> to vector<8x16xbf16>
    %cst_27 = arith.constant dense<0.000000e+00> : vector<8x8xf32>
    %63 = tpu.matmul %62, %47, %cst_27 {dimension_numbers = #tpu.dot_dimension_numbers<[1], [0], [0], [1], [0, 0, 1, 1], [], []>} : vector<8x16xbf16>, vector<16x8xbf16>, vector<8x8xf32> -> vector<8x8xf32>
    %64 = arith.truncf %63 : vector<8x8xf32> to vector<8x8xbf16>
    %65 = vector.extract_strided_slice %22 {offsets = [8, 0], sizes = [8, 32], strides = [1, 1]} : vector<32x32xbf16> to vector<8x32xbf16>
    %cst_28 = arith.constant dense<0.000000e+00> : vector<8x32xf32>
    %66 = tpu.matmul %64, %65, %cst_28 {dimension_numbers = #tpu.dot_dimension_numbers<[1], [0], [0], [1], [0, 0, 1, 1], [], []>} : vector<8x8xbf16>, vector<8x32xbf16>, vector<8x32xf32> -> vector<8x32xf32>
    %67 = arith.addf %45, %66 : vector<8x32xf32>
    %68 = vector.extract_strided_slice %21 {offsets = [0, 16], sizes = [16, 8], strides = [1, 1]} : vector<16x64xbf16> to vector<16x8xbf16>
    %69 = vector.extract_strided_slice %21 {offsets = [0, 48], sizes = [16, 8], strides = [1, 1]} : vector<16x64xbf16> to vector<16x8xbf16>
    %70 = vector.extract_strided_slice %13 {offsets = [0, 16], sizes = [8, 8], strides = [1, 1]} : vector<8x32xbf16> to vector<8x8xbf16>
    %cst_29 = arith.constant dense<0.000000e+00> : vector<8x16xf32>
    %71 = tpu.matmul %70, %68, %cst_29 {dimension_numbers = #tpu.dot_dimension_numbers<[1], [1], [0], [0], [0, 0, 1, 0], [], []>} : vector<8x8xbf16>, vector<16x8xbf16>, vector<8x16xf32> -> vector<8x16xf32>
    %72 = vector.broadcast %20 : vector<1x16xf32> to vector<8x16xf32>
    %73 = arith.addf %71, %72 : vector<8x16xf32>
    %cst_30 = arith.constant dense<0xFF800000> : vector<8xf32>
    %74 = vector.multi_reduction <maximumf>, %73, %cst_30 [1] : vector<8x16xf32> to vector<8xf32>
    %75 = vector.shape_cast %74 : vector<8xf32> to vector<8x1xf32>
    %76 = vector.broadcast %75 : vector<8x1xf32> to vector<8x16xf32>
    %77 = arith.subf %73, %76 : vector<8x16xf32>
    %78 = math.exp %77 : vector<8x16xf32>
    %cst_31 = arith.constant dense<0.000000e+00> : vector<8xf32>
    %79 = vector.multi_reduction <add>, %78, %cst_31 [1] : vector<8x16xf32> to vector<8xf32>
    %80 = vector.shape_cast %79 : vector<8xf32> to vector<8x1xf32>
    %81 = tpu.reciprocal %80 {approx = true} : vector<8x1xf32> -> vector<8x1xf32>
    %82 = vector.broadcast %81 : vector<8x1xf32> to vector<8x16xf32>
    %83 = arith.mulf %78, %82 : vector<8x16xf32>
    %84 = arith.truncf %83 : vector<8x16xf32> to vector<8x16xbf16>
    %cst_32 = arith.constant dense<0.000000e+00> : vector<8x8xf32>
    %85 = tpu.matmul %84, %69, %cst_32 {dimension_numbers = #tpu.dot_dimension_numbers<[1], [0], [0], [1], [0, 0, 1, 1], [], []>} : vector<8x16xbf16>, vector<16x8xbf16>, vector<8x8xf32> -> vector<8x8xf32>
    %86 = arith.truncf %85 : vector<8x8xf32> to vector<8x8xbf16>
    %87 = vector.extract_strided_slice %22 {offsets = [16, 0], sizes = [8, 32], strides = [1, 1]} : vector<32x32xbf16> to vector<8x32xbf16>
    %cst_33 = arith.constant dense<0.000000e+00> : vector<8x32xf32>
    %88 = tpu.matmul %86, %87, %cst_33 {dimension_numbers = #tpu.dot_dimension_numbers<[1], [0], [0], [1], [0, 0, 1, 1], [], []>} : vector<8x8xbf16>, vector<8x32xbf16>, vector<8x32xf32> -> vector<8x32xf32>
    %89 = arith.addf %67, %88 : vector<8x32xf32>
    %90 = vector.extract_strided_slice %21 {offsets = [0, 24], sizes = [16, 8], strides = [1, 1]} : vector<16x64xbf16> to vector<16x8xbf16>
    %91 = vector.extract_strided_slice %21 {offsets = [0, 56], sizes = [16, 8], strides = [1, 1]} : vector<16x64xbf16> to vector<16x8xbf16>
    %92 = vector.extract_strided_slice %13 {offsets = [0, 24], sizes = [8, 8], strides = [1, 1]} : vector<8x32xbf16> to vector<8x8xbf16>
    %cst_34 = arith.constant dense<0.000000e+00> : vector<8x16xf32>
    %93 = tpu.matmul %92, %90, %cst_34 {dimension_numbers = #tpu.dot_dimension_numbers<[1], [1], [0], [0], [0, 0, 1, 0], [], []>} : vector<8x8xbf16>, vector<16x8xbf16>, vector<8x16xf32> -> vector<8x16xf32>
    %94 = vector.broadcast %20 : vector<1x16xf32> to vector<8x16xf32>
    %95 = arith.addf %93, %94 : vector<8x16xf32>
    %cst_35 = arith.constant dense<0xFF800000> : vector<8xf32>
    %96 = vector.multi_reduction <maximumf>, %95, %cst_35 [1] : vector<8x16xf32> to vector<8xf32>
    %97 = vector.shape_cast %96 : vector<8xf32> to vector<8x1xf32>
    %98 = vector.broadcast %97 : vector<8x1xf32> to vector<8x16xf32>
    %99 = arith.subf %95, %98 : vector<8x16xf32>
    %100 = math.exp %99 : vector<8x16xf32>
    %cst_36 = arith.constant dense<0.000000e+00> : vector<8xf32>
    %101 = vector.multi_reduction <add>, %100, %cst_36 [1] : vector<8x16xf32> to vector<8xf32>
    %102 = vector.shape_cast %101 : vector<8xf32> to vector<8x1xf32>
    %103 = tpu.reciprocal %102 {approx = true} : vector<8x1xf32> -> vector<8x1xf32>
    %104 = vector.broadcast %103 : vector<8x1xf32> to vector<8x16xf32>
    %105 = arith.mulf %100, %104 : vector<8x16xf32>
    %106 = arith.truncf %105 : vector<8x16xf32> to vector<8x16xbf16>
    %cst_37 = arith.constant dense<0.000000e+00> : vector<8x8xf32>
    %107 = tpu.matmul %106, %91, %cst_37 {dimension_numbers = #tpu.dot_dimension_numbers<[1], [0], [0], [1], [0, 0, 1, 1], [], []>} : vector<8x16xbf16>, vector<16x8xbf16>, vector<8x8xf32> -> vector<8x8xf32>
    %108 = arith.truncf %107 : vector<8x8xf32> to vector<8x8xbf16>
    %109 = vector.extract_strided_slice %22 {offsets = [24, 0], sizes = [8, 32], strides = [1, 1]} : vector<32x32xbf16> to vector<8x32xbf16>
    %cst_38 = arith.constant dense<0.000000e+00> : vector<8x32xf32>
    %110 = tpu.matmul %108, %109, %cst_38 {dimension_numbers = #tpu.dot_dimension_numbers<[1], [0], [0], [1], [0, 0, 1, 1], [], []>} : vector<8x8xbf16>, vector<8x32xbf16>, vector<8x32xf32> -> vector<8x32xf32>
    %111 = arith.addf %89, %110 : vector<8x32xf32>
    %c0_39 = arith.constant 0 : index
    %c0_40 = arith.constant 0 : index
    %112 = vector.load %arg10[%c0_39, %c0_40] : memref<1x32xf32, #tpu.memory_space<vmem>>, vector<1x32xf32>
    %113 = vector.broadcast %112 : vector<1x32xf32> to vector<8x32xf32>
    %114 = arith.addf %111, %113 : vector<8x32xf32>
    %115 = arith.addf %4, %114 : vector<8x32xf32>
    %cst_41 = arith.constant dense<0.000000e+00> : vector<8xf32>
    %116 = vector.multi_reduction <add>, %115, %cst_41 [1] : vector<8x32xf32> to vector<8xf32>
    %117 = vector.shape_cast %116 : vector<8xf32> to vector<8x1xf32>
    %cst_42 = arith.constant 3.200000e+01 : f32
    %118 = vector.broadcast %cst_42 : f32 to vector<8x1xf32>
    %119 = arith.divf %117, %118 : vector<8x1xf32>
    %120 = vector.broadcast %119 : vector<8x1xf32> to vector<8x32xf32>
    %121 = arith.subf %115, %120 : vector<8x32xf32>
    %122 = arith.mulf %121, %121 : vector<8x32xf32>
    %cst_43 = arith.constant dense<0.000000e+00> : vector<8xf32>
    %123 = vector.multi_reduction <add>, %122, %cst_43 [1] : vector<8x32xf32> to vector<8xf32>
    %124 = vector.shape_cast %123 : vector<8xf32> to vector<8x1xf32>
    %cst_44 = arith.constant 3.200000e+01 : f32
    %125 = vector.broadcast %cst_44 : f32 to vector<8x1xf32>
    %126 = arith.divf %124, %125 : vector<8x1xf32>
    %127 = vector.broadcast %119 : vector<8x1xf32> to vector<8x32xf32>
    %128 = arith.subf %115, %127 : vector<8x32xf32>
    %cst_45 = arith.constant 9.99999974E-6 : f32
    %129 = vector.broadcast %cst_45 : f32 to vector<8x1xf32>
    %130 = arith.addf %126, %129 : vector<8x1xf32>
    %131 = math.rsqrt %130 : vector<8x1xf32>
    %132 = vector.broadcast %131 : vector<8x1xf32> to vector<8x32xf32>
    %133 = arith.mulf %128, %132 : vector<8x32xf32>
    %c0_46 = arith.constant 0 : index
    %c0_47 = arith.constant 0 : index
    %134 = vector.load %arg11[%c0_46, %c0_47] : memref<1x32xf32, #tpu.memory_space<vmem>>, vector<1x32xf32>
    %135 = vector.broadcast %134 : vector<1x32xf32> to vector<8x32xf32>
    %136 = arith.mulf %133, %135 : vector<8x32xf32>
    %c0_48 = arith.constant 0 : index
    %c0_49 = arith.constant 0 : index
    %137 = vector.load %arg12[%c0_48, %c0_49] : memref<1x32xf32, #tpu.memory_space<vmem>>, vector<1x32xf32>
    %138 = vector.broadcast %137 : vector<1x32xf32> to vector<8x32xf32>
    %139 = arith.addf %136, %138 : vector<8x32xf32>
    %140 = arith.truncf %139 : vector<8x32xf32> to vector<8x32xbf16>
    %c0_50 = arith.constant 0 : index
    %c0_51 = arith.constant 0 : index
    %141 = vector.load %arg13[%c0_50, %c0_51] : memref<32x64xbf16, #tpu.memory_space<vmem>>, vector<32x64xbf16>
    %cst_52 = arith.constant dense<0.000000e+00> : vector<8x64xf32>
    %142 = tpu.matmul %140, %141, %cst_52 {dimension_numbers = #tpu.dot_dimension_numbers<[1], [0], [0], [1], [0, 0, 1, 1], [], []>} : vector<8x32xbf16>, vector<32x64xbf16>, vector<8x64xf32> -> vector<8x64xf32>
    %c0_53 = arith.constant 0 : index
    %c0_54 = arith.constant 0 : index
    %143 = vector.load %arg14[%c0_53, %c0_54] : memref<1x64xf32, #tpu.memory_space<vmem>>, vector<1x64xf32>
    %144 = vector.broadcast %143 : vector<1x64xf32> to vector<8x64xf32>
    %145 = arith.addf %142, %144 : vector<8x64xf32>
    %cst_55 = arith.constant 0.000000e+00 : f32
    %146 = vector.broadcast %cst_55 : f32 to vector<8x64xf32>
    %147 = arith.maximumf %145, %146 : vector<8x64xf32>
    %148 = arith.truncf %147 : vector<8x64xf32> to vector<8x64xbf16>
    %c0_56 = arith.constant 0 : index
    %c0_57 = arith.constant 0 : index
    %149 = vector.load %arg15[%c0_56, %c0_57] : memref<64x32xbf16, #tpu.memory_space<vmem>>, vector<64x32xbf16>
    %cst_58 = arith.constant dense<0.000000e+00> : vector<8x32xf32>
    %150 = tpu.matmul %148, %149, %cst_58 {dimension_numbers = #tpu.dot_dimension_numbers<[1], [0], [0], [1], [0, 0, 1, 1], [], []>} : vector<8x64xbf16>, vector<64x32xbf16>, vector<8x32xf32> -> vector<8x32xf32>
    %c0_59 = arith.constant 0 : index
    %c0_60 = arith.constant 0 : index
    %151 = vector.load %arg16[%c0_59, %c0_60] : memref<1x32xf32, #tpu.memory_space<vmem>>, vector<1x32xf32>
    %152 = vector.broadcast %151 : vector<1x32xf32> to vector<8x32xf32>
    %153 = arith.addf %150, %152 : vector<8x32xf32>
    %154 = arith.addf %139, %153 : vector<8x32xf32>
    %cst_61 = arith.constant dense<0.000000e+00> : vector<8xf32>
    %155 = vector.multi_reduction <add>, %154, %cst_61 [1] : vector<8x32xf32> to vector<8xf32>
    %156 = vector.shape_cast %155 : vector<8xf32> to vector<8x1xf32>
    %cst_62 = arith.constant 3.200000e+01 : f32
    %157 = vector.broadcast %cst_62 : f32 to vector<8x1xf32>
    %158 = arith.divf %156, %157 : vector<8x1xf32>
    %159 = vector.broadcast %158 : vector<8x1xf32> to vector<8x32xf32>
    %160 = arith.subf %154, %159 : vector<8x32xf32>
    %161 = arith.mulf %160, %160 : vector<8x32xf32>
    %cst_63 = arith.constant dense<0.000000e+00> : vector<8xf32>
    %162 = vector.multi_reduction <add>, %161, %cst_63 [1] : vector<8x32xf32> to vector<8xf32>
    %163 = vector.shape_cast %162 : vector<8xf32> to vector<8x1xf32>
    %cst_64 = arith.constant 3.200000e+01 : f32
    %164 = vector.broadcast %cst_64 : f32 to vector<8x1xf32>
    %165 = arith.divf %163, %164 : vector<8x1xf32>
    %166 = vector.broadcast %158 : vector<8x1xf32> to vector<8x32xf32>
    %167 = arith.subf %154, %166 : vector<8x32xf32>
    %cst_65 = arith.constant 9.99999974E-6 : f32
    %168 = vector.broadcast %cst_65 : f32 to vector<8x1xf32>
    %169 = arith.addf %165, %168 : vector<8x1xf32>
    %170 = math.rsqrt %169 : vector<8x1xf32>
    %171 = vector.broadcast %170 : vector<8x1xf32> to vector<8x32xf32>
    %172 = arith.mulf %167, %171 : vector<8x32xf32>
    %c0_66 = arith.constant 0 : index
    %c0_67 = arith.constant 0 : index
    %173 = vector.load %arg17[%c0_66, %c0_67] : memref<1x32xf32, #tpu.memory_space<vmem>>, vector<1x32xf32>
    %174 = vector.broadcast %173 : vector<1x32xf32> to vector<8x32xf32>
    %175 = arith.mulf %172, %174 : vector<8x32xf32>
    %c0_68 = arith.constant 0 : index
    %c0_69 = arith.constant 0 : index
    %176 = vector.load %arg18[%c0_68, %c0_69] : memref<1x32xf32, #tpu.memory_space<vmem>>, vector<1x32xf32>
    %177 = vector.broadcast %176 : vector<1x32xf32> to vector<8x32xf32>
    %178 = arith.addf %175, %177 : vector<8x32xf32>
    %c0_70 = arith.constant 0 : index
    %c0_71 = arith.constant 0 : index
    %c0_72 = arith.constant 0 : index
    %179 = vector.load %arg19[%c0_70, %c0_71, %c0_72] : memref<1x8x32xf32, #tpu.memory_space<vmem>>, vector<1x8x32xf32>
    %180 = vector.shape_cast %179 : vector<1x8x32xf32> to vector<8x32xf32>
    %181 = vector.shape_cast %178 : vector<8x32xf32> to vector<1x8x32xf32>
    tpu.vector_store %arg19[%c0_70, %c0_71, %c0_72], %181 {strides = array<i32>} : memref<1x8x32xf32, #tpu.memory_space<vmem>>, vector<1x8x32xf32>,
    return
  }
  func.func @transform_0(%arg0: i32, %arg1: i32) -> (i32, i32, i32) {
    %c0_i32 = arith.constant 0 : i32
    %c0_i32_0 = arith.constant 0 : i32
    %c0_i32_1 = arith.constant 0 : i32
    return %arg0, %c0_i32, %c0_i32_0 : i32, i32, i32
  }
  func.func @transform_1(%arg0: i32, %arg1: i32) -> (i32, i32, i32) {
    %c0_i32 = arith.constant 0 : i32
    %c0_i32_0 = arith.constant 0 : i32
    return %arg0, %arg1, %c0_i32 : i32, i32, i32
  }
  func.func @transform_2(%arg0: i32, %arg1: i32) -> (i32, i32, i32) {
    %c0_i32 = arith.constant 0 : i32
    %c0_i32_0 = arith.constant 0 : i32
    %c0_i32_1 = arith.constant 0 : i32
    return %arg0, %c0_i32, %c0_i32_0 : i32, i32, i32
  }
  func.func @transform_3(%arg0: i32, %arg1: i32) -> (i32, i32) {
    %c0_i32 = arith.constant 0 : i32
    %c0_i32_0 = arith.constant 0 : i32
    %c0_i32_1 = arith.constant 0 : i32
    return %c0_i32, %c0_i32_0 : i32, i32
  }
  func.func @transform_4(%arg0: i32, %arg1: i32) -> (i32, i32) {
    %c0_i32 = arith.constant 0 : i32
    %c0_i32_0 = arith.constant 0 : i32
    %c0_i32_1 = arith.constant 0 : i32
    return %c0_i32, %c0_i32_0 : i32, i32
  }
  func.func @transform_5(%arg0: i32, %arg1: i32) -> (i32, i32) {
    %c0_i32 = arith.constant 0 : i32
    %c0_i32_0 = arith.constant 0 : i32
    %c0_i32_1 = arith.constant 0 : i32
    return %c0_i32, %c0_i32_0 : i32, i32
  }
  func.func @transform_6(%arg0: i32, %arg1: i32) -> (i32, i32) {
    %c0_i32 = arith.constant 0 : i32
    %c0_i32_0 = arith.constant 0 : i32
    %c0_i32_1 = arith.constant 0 : i32
    return %c0_i32, %c0_i32_0 : i32, i32
  }
  func.func @transform_7(%arg0: i32, %arg1: i32) -> (i32, i32) {
    %c0_i32 = arith.constant 0 : i32
    %c0_i32_0 = arith.constant 0 : i32
    %c0_i32_1 = arith.constant 0 : i32
    return %c0_i32, %c0_i32_0 : i32, i32
  }
  func.func @transform_8(%arg0: i32, %arg1: i32) -> (i32, i32) {
    %c0_i32 = arith.constant 0 : i32
    %c0_i32_0 = arith.constant 0 : i32
    %c0_i32_1 = arith.constant 0 : i32
    return %c0_i32, %c0_i32_0 : i32, i32
  }
  func.func @transform_9(%arg0: i32, %arg1: i32) -> (i32, i32) {
    %c0_i32 = arith.constant 0 : i32
    %c0_i32_0 = arith.constant 0 : i32
    %c0_i32_1 = arith.constant 0 : i32
    return %c0_i32, %c0_i32_0 : i32, i32
  }
  func.func @transform_10(%arg0: i32, %arg1: i32) -> (i32, i32) {
    %c0_i32 = arith.constant 0 : i32
    %c0_i32_0 = arith.constant 0 : i32
    %c0_i32_1 = arith.constant 0 : i32
    return %c0_i32, %c0_i32_0 : i32, i32
  }
  func.func @transform_11(%arg0: i32, %arg1: i32) -> (i32, i32) {
    %c0_i32 = arith.constant 0 : i32
    %c0_i32_0 = arith.constant 0 : i32
    %c0_i32_1 = arith.constant 0 : i32
    return %c0_i32, %c0_i32_0 : i32, i32
  }
  func.func @transform_12(%arg0: i32, %arg1: i32) -> (i32, i32) {
    %c0_i32 = arith.constant 0 : i32
    %c0_i32_0 = arith.constant 0 : i32
    %c0_i32_1 = arith.constant 0 : i32
    return %c0_i32, %c0_i32_0 : i32, i32
  }
  func.func @transform_13(%arg0: i32, %arg1: i32) -> (i32, i32) {
    %c0_i32 = arith.constant 0 : i32
    %c0_i32_0 = arith.constant 0 : i32
    %c0_i32_1 = arith.constant 0 : i32
    return %c0_i32, %c0_i32_0 : i32, i32
  }
  func.func @transform_14(%arg0: i32, %arg1: i32) -> (i32, i32) {
    %c0_i32 = arith.constant 0 : i32
    %c0_i32_0 = arith.constant 0 : i32
    %c0_i32_1 = arith.constant 0 : i32
    return %c0_i32, %c0_i32_0 : i32, i32
  }
  func.func @transform_15(%arg0: i32, %arg1: i32) -> (i32, i32) {
    %c0_i32 = arith.constant 0 : i32
    %c0_i32_0 = arith.constant 0 : i32
    %c0_i32_1 = arith.constant 0 : i32
    return %c0_i32, %c0_i32_0 : i32, i32
  }
  func.func @transform_16(%arg0: i32, %arg1: i32) -> (i32, i32) {
    %c0_i32 = arith.constant 0 : i32
    %c0_i32_0 = arith.constant 0 : i32
    %c0_i32_1 = arith.constant 0 : i32
    return %c0_i32, %c0_i32_0 : i32, i32
  }
  func.func @transform_17(%arg0: i32, %arg1: i32) -> (i32, i32, i32) {
    %c0_i32 = arith.constant 0 : i32
    %c0_i32_0 = arith.constant 0 : i32
    return %arg0, %arg1, %c0_i32 : i32, i32, i32
  }
}

</mosaic_0001>

<llo_original>
// kernel: tpu_custom_call.1
$region0: #{tpu_custom_call.1}
  #allocation0 [shape = 'u32[]', space=smem, size = 0x4, offset = 0x4, fixed_abs, tag = 'smem constant byte address 0x4 - core index']
  #allocation1 [shape = 'u32[72,128]{1,0:T(1,128)}', space=vmem, size = 0x9000, scoped, tag = 'internal scratch']
  #allocation2 [shape = 'bf16[16,64]{1,0:T(8,128)(2,1)}', space=vmem, size = 0x1000, scoped, tag = 'scratch operand']
  %s0 = inlined_call_operand.vmem [shape: f32[2,16,32], index: 0, kind: input, shape index: {}]
  %s1 = inlined_call_operand.hbm [shape: f32[2,16,32], index: 1, kind: input, shape index: {}]
  %s2 = inlined_call_operand.hbm [shape: f32[2,1,16], index: 2, kind: input, shape index: {}]
  %s3 = inlined_call_operand.vmem [shape: bf16[32,32], index: 3, kind: input, shape index: {}]
  %s4 = inlined_call_operand.vmem [shape: f32[1,32], index: 4, kind: input, shape index: {}]
  %s5 = inlined_call_operand.hbm [shape: bf16[32,64], index: 5, kind: input, shape index: {}]
  %s6 = inlined_call_operand.vmem [shape: f32[1,64], index: 6, kind: input, shape index: {}]
  %s7 = inlined_call_operand.hbm [shape: bf16[32,32], index: 7, kind: input, shape index: {}]
  %s8 = inlined_call_operand.vmem [shape: f32[1,32], index: 8, kind: input, shape index: {}]
  %s9 = inlined_call_operand.vmem [shape: f32[1,32], index: 9, kind: input, shape index: {}]
  %s10 = inlined_call_operand.vmem [shape: f32[1,32], index: 10, kind: input, shape index: {}]
  %s11 = inlined_call_operand.hbm [shape: bf16[32,64], index: 11, kind: input, shape index: {}]
  %s12 = inlined_call_operand.vmem [shape: f32[1,64], index: 12, kind: input, shape index: {}]
  %s13 = inlined_call_operand.vmem [shape: bf16[64,32], index: 13, kind: input, shape index: {}]
  %s14 = inlined_call_operand.vmem [shape: f32[1,32], index: 14, kind: input, shape index: {}]
  %s15 = inlined_call_operand.vmem [shape: f32[1,32], index: 15, kind: input, shape index: {}]
  %s16 = inlined_call_operand.vmem [shape: f32[1,32], index: 16, kind: input, shape index: {}]
  %s17 = inlined_call_operand.hbm [shape: f32[2,16,32], index: 17, kind: output, shape index: {}]
  %s18 = sld [smem:[#allocation0]]
  $region125: #{tpu_custom_call.1} parent=0
    _
  %s20 = ssub.s32 1, %s18
  %s21 = scalar_select 0, %s20, %s18
  $region1: #{tpu_custom_call.1} parent=0
    #allocation3 [shape = 'u8[8192]{0}', space=vmem, size = 0x2000, scoped, tag = 'input window, operand 1']
    #allocation4 [shape = 's32[2]{0}', space=sflag, size = 0x8, scoped, tag = 'scoped memory for tpu_custom_call.1']
    #allocation5 [shape = 's32[2]{0}', space=sflag, size = 0x8, scoped, tag = 'scoped memory for tpu_custom_call.1']
    #allocation6 [shape = 'u8[1024]{0}', space=vmem, size = 0x400, scoped, tag = 'input window, operand 2']
    #allocation7 [shape = 's32[2]{0}', space=sflag, size = 0x8, scoped, tag = 'scoped memory for tpu_custom_call.1']
    #allocation8 [shape = 'u8[8192]{0}', space=vmem, size = 0x2000, scoped, tag = 'input window, operand 5, single buffered']
    #allocation9 [shape = 'u8[8192]{0}', space=vmem, size = 0x2000, scoped, tag = 'input window, operand 7, single buffered']
    #allocation10 [shape = 's32[1]{0}', space=sflag, size = 0x4, scoped, tag = 'scoped memory for tpu_custom_call.1']
    #allocation11 [shape = 'u8[8192]{0}', space=vmem, size = 0x2000, scoped, tag = 'input window, operand 11, single buffered']
    #allocation12 [shape = 'u8[8192]{0}', space=vmem, size = 0x2000, scoped, tag = 'output window, operand 0']
    %22 = vsyncpa [#allocation4], 0
    %s23 = scalar_lea.sflag [#allocation4], 1
    %24 = vsyncpa %s23, 0
    %25 = vsyncpa [#allocation7], 0
    %s26 = scalar_lea.sflag [#allocation7], 1
    %27 = vsyncpa %s26, 0
    %28 = vsyncpa [#allocation10], 0
    %29 = vsyncpa [#allocation5], 0
    %s30 = scalar_lea.sflag [#allocation5], 1
    %31 = vsyncpa %s30, 0
    loop: start=0, step=1, limit=6
    $region2: #{tpu_custom_call.1} parent=1 // loop_pre_header
      _
    $region3: #{tpu_custom_call.1} parent=1 // loop_header
      %s33 = sphi 0, %s37
      %p34 = scmp.ge.s32.totalorder %s33, 6
      %s40 = sphi 0, %s52
      %s41 = sphi 0, %s48
      %s42 = sphi 0, %s40
      %s43 = sphi 0, %s41
      %s44 = sphi 0, %s42
      %s45 = sphi 0, %s43
      %s55 = sphi 0, %s57
      %s58 = sphi 0, %s55
      %s59 = sphi 0, %s58
      %s75 = sphi 0, %s59
      %s83 = sphi 0, %s85
      %s86 = sphi 0, %s83
      %s87 = sphi 0, %s86
      %s103 = sphi 0, %s87
      %s109 = sphi 0, %s111
      %s112 = sphi 0, %s109
      %s113 = sphi 0, %s112
      %s129 = sphi 0, %s113
      %s133 = sphi 0, %s133
      %s135 = sphi 0, %s133
      %s136 = sphi 0, %s135
      %s150 = sphi 0, %s136
      %s154 = sphi 0, %s154
      %s156 = sphi 0, %s154
      %s157 = sphi 0, %s156
      %s171 = sphi 0, %s157
      %s175 = sphi 0, %s175
      %s177 = sphi 0, %s175
      %s178 = sphi 0, %s177
      %s192 = sphi 0, %s178
      %s196 = sphi 0, %s196
      %s198 = sphi 0, %s196
      %s199 = sphi 0, %s198
      %s213 = sphi 0, %s199
      %s217 = sphi 0, %s217
      %s219 = sphi 0, %s217
      %s220 = sphi 0, %s219
      %s234 = sphi 0, %s220
      %s238 = sphi 0, %s238
      %s240 = sphi 0, %s238
      %s241 = sphi 0, %s240
      %s255 = sphi 0, %s241
      %s259 = sphi 0, %s259
      %s261 = sphi 0, %s259
      %s262 = sphi 0, %s261
      %s276 = sphi 0, %s262
      %s280 = sphi 0, %s280
      %s282 = sphi 0, %s280
      %s283 = sphi 0, %s282
      %s297 = sphi 0, %s283
      %s301 = sphi 0, %s301
      %s303 = sphi 0, %s301
      %s304 = sphi 0, %s303
      %s318 = sphi 0, %s304
      %s322 = sphi 0, %s322
      %s324 = sphi 0, %s322
      %s325 = sphi 0, %s324
      %s339 = sphi 0, %s325
      %s343 = sphi 0, %s343
      %s345 = sphi 0, %s343
      %s346 = sphi 0, %s345
      %s360 = sphi 0, %s346
      %s364 = sphi 0, %s364
      %s366 = sphi 0, %s364
      %s367 = sphi 0, %s366
      %s381 = sphi 0, %s367
      %s385 = sphi 0, %s385
      %s387 = sphi 0, %s385
      %s388 = sphi 0, %s387
      %s402 = sphi 0, %s388
      %s406 = sphi 0, %s406
      %s408 = sphi 0, %s406
      %s409 = sphi 0, %s408
      %s423 = sphi 0, %s409
      %s431 = sphi 0, %s433
      %s434 = sphi 0, %s431
      %s435 = sphi 0, %s434
      %s451 = sphi 0, %s435
    $region4: #{tpu_custom_call.1} parent=1 // loop_header_branch
      %36 = sbr.rel (%p34) target = $region8
    $region5: #{tpu_custom_call.1} parent=1 // loop_body
      %s38 = ssub.s32 %s33, 1
      %s39 = ssub.s32 %s33, 2
      %s46 = sadd.s32 1, %s41
      %p47 = scmp.ge.s32.totalorder %s46, 2
      %s48 = scalar_select %p47, 0, %s46
      %s49 = sadd.s32 1, %s40
      %s50 = scalar_select %p47, %s49, %s40
      %p51 = scmp.ge.s32.totalorder %s50, 2
      %s52 = scalar_select %p51, 0, %s50
      %s53 = ssub.s32 %s40, %s52
      %p54 = scmp.eq.s32.totalorder %s53, 0
      %s56 = sadd.s32 %s55, 1
      %s57 = scalar_select %p54, %s55, %s56
      %p60 = pneg %p54
      %p61 = scmp.eq.s32.totalorder %s33, 3
      %p62 = por %p60, %p61
      %p63 = scmp.ne.s32.totalorder %s55, %s58
      %p64 = scmp.eq.s32.totalorder %s33, 0
      %p65 = por %p63, %p64
      %p66 = scmp.ne.s32.totalorder %s55, %s58
      %p67 = scmp.eq.s32.totalorder %s38, 3
      %p68 = por %p66, %p67
      %p69 = scmp.ne.s32.totalorder %s58, %s59
      %p70 = scmp.eq.s32.totalorder %s38, 0
      %p71 = por %p69, %p70
      %p72 = scmp.ne.s32.totalorder %s58, %s59
      %p73 = scmp.eq.s32.totalorder %s39, 3
      %p74 = por %p72, %p73
      %p76 = scmp.ne.s32.totalorder %s59, %s75
      %p77 = scmp.eq.s32.totalorder %s39, 0
      %p78 = por %p76, %p77
      %s79 = ssub.s32 %s40, %s52
      %s80 = ssub.s32 %s41, %s48
      %s81 = sor.u32 %s79, %s80
      %p82 = scmp.eq.s32.totalorder %s81, 0
      %s84 = sadd.s32 %s83, 1
      %s85 = scalar_select %p82, %s83, %s84
      %p88 = pneg %p82
      %p89 = scmp.eq.s32.totalorder %s33, 3
      %p90 = por %p88, %p89
      %p91 = scmp.ne.s32.totalorder %s83, %s86
      %p92 = scmp.eq.s32.totalorder %s33, 0
      %p93 = por %p91, %p92
      %p94 = scmp.ne.s32.totalorder %s83, %s86
      %p95 = scmp.eq.s32.totalorder %s38, 3
      %p96 = por %p94, %p95
      %p97 = scmp.ne.s32.totalorder %s86, %s87
      %p98 = scmp.eq.s32.totalorder %s38, 0
      %p99 = por %p97, %p98
      %p100 = scmp.ne.s32.totalorder %s86, %s87
      %p101 = scmp.eq.s32.totalorder %s39, 3
      %p102 = por %p100, %p101
      %p104 = scmp.ne.s32.totalorder %s87, %s103
      %p105 = scmp.eq.s32.totalorder %s39, 0
      %p106 = por %p104, %p105
      %s107 = ssub.s32 %s40, %s52
      %p108 = scmp.eq.s32.totalorder %s107, 0
      %s110 = sadd.s32 %s109, 1
      %s111 = scalar_select %p108, %s109, %s110
      %p114 = pneg %p108
      %p115 = scmp.eq.s32.totalorder %s33, 3
      %p116 = por %p114, %p115
      %p117 = scmp.ne.s32.totalorder %s109, %s112
      %p118 = scmp.eq.s32.totalorder %s33, 0
      %p119 = por %p117, %p118
      %p120 = scmp.ne.s32.totalorder %s109, %s112
      %p121 = scmp.eq.s32.totalorder %s38, 3
      %p122 = por %p120, %p121
      %p123 = scmp.ne.s32.totalorder %s112, %s113
      %p124 = scmp.eq.s32.totalorder %s38, 0
      %p125 = por %p123, %p124
      %p126 = scmp.ne.s32.totalorder %s112, %s113
      %p127 = scmp.eq.s32.totalorder %s39, 3
      %p128 = por %p126, %p127
      %p130 = scmp.ne.s32.totalorder %s113, %s129
      %p131 = scmp.eq.s32.totalorder %s39, 0
      %p132 = por %p130, %p131
      %s134 = sadd.s32 %s133, 1
      %p137 = scmp.eq.s32.totalorder %s33, 3
      %p138 = scmp.ne.s32.totalorder %s133, %s135
      %p139 = scmp.eq.s32.totalorder %s33, 0
      %p140 = por %p138, %p139
      %p141 = scmp.ne.s32.totalorder %s133, %s135
      %p142 = scmp.eq.s32.totalorder %s38, 3
      %p143 = por %p141, %p142
      %p144 = scmp.ne.s32.totalorder %s135, %s136
      %p145 = scmp.eq.s32.totalorder %s38, 0
      %p146 = por %p144, %p145
      %p147 = scmp.ne.s32.totalorder %s135, %s136
      %p148 = scmp.eq.s32.totalorder %s39, 3
      %p149 = por %p147, %p148
      %p151 = scmp.ne.s32.totalorder %s136, %s150
      %p152 = scmp.eq.s32.totalorder %s39, 0
      %p153 = por %p151, %p152
      %s155 = sadd.s32 %s154, 1
      %p158 = scmp.eq.s32.totalorder %s33, 3
      %p159 = scmp.ne.s32.totalorder %s154, %s156
      %p160 = scmp.eq.s32.totalorder %s33, 0
      %p161 = por %p159, %p160
      %p162 = scmp.ne.s32.totalorder %s154, %s156
      %p163 = scmp.eq.s32.totalorder %s38, 3
      %p164 = por %p162, %p163
      %p165 = scmp.ne.s32.totalorder %s156, %s157
      %p166 = scmp.eq.s32.totalorder %s38, 0
      %p167 = por %p165, %p166
      %p168 = scmp.ne.s32.totalorder %s156, %s157
      %p169 = scmp.eq.s32.totalorder %s39, 3
      %p170 = por %p168, %p169
      %p172 = scmp.ne.s32.totalorder %s157, %s171
      %p173 = scmp.eq.s32.totalorder %s39, 0
      %p174 = por %p172, %p173
      %s176 = sadd.s32 %s175, 1
      %p179 = scmp.eq.s32.totalorder %s33, 3
      %p180 = scmp.ne.s32.totalorder %s175, %s177
      %p181 = scmp.eq.s32.totalorder %s33, 0
      %p182 = por %p180, %p181
      %p183 = scmp.ne.s32.totalorder %s175, %s177
      %p184 = scmp.eq.s32.totalorder %s38, 3
      %p185 = por %p183, %p184
      %p186 = scmp.ne.s32.totalorder %s177, %s178
      %p187 = scmp.eq.s32.totalorder %s38, 0
      %p188 = por %p186, %p187
      %p189 = scmp.ne.s32.totalorder %s177, %s178
      %p190 = scmp.eq.s32.totalorder %s39, 3
      %p191 = por %p189, %p190
      %p193 = scmp.ne.s32.totalorder %s178, %s192
      %p194 = scmp.eq.s32.totalorder %s39, 0
      %p195 = por %p193, %p194
      %s197 = sadd.s32 %s196, 1
      %p200 = scmp.eq.s32.totalorder %s33, 3
      %p201 = scmp.ne.s32.totalorder %s196, %s198
      %p202 = scmp.eq.s32.totalorder %s33, 0
      %p203 = por %p201, %p202
      %p204 = scmp.ne.s32.totalorder %s196, %s198
      %p205 = scmp.eq.s32.totalorder %s38, 3
      %p206 = por %p204, %p205
      %p207 = scmp.ne.s32.totalorder %s198, %s199
      %p208 = scmp.eq.s32.totalorder %s38, 0
      %p209 = por %p207, %p208
      %p210 = scmp.ne.s32.totalorder %s198, %s199
      %p211 = scmp.eq.s32.totalorder %s39, 3
      %p212 = por %p210, %p211
      %p214 = scmp.ne.s32.totalorder %s199, %s213
      %p215 = scmp.eq.s32.totalorder %s39, 0
      %p216 = por %p214, %p215
      %s218 = sadd.s32 %s217, 1
      %p221 = scmp.eq.s32.totalorder %s33, 3
      %p222 = scmp.ne.s32.totalorder %s217, %s219
      %p223 = scmp.eq.s32.totalorder %s33, 0
      %p224 = por %p222, %p223
      %p225 = scmp.ne.s32.totalorder %s217, %s219
      %p226 = scmp.eq.s32.totalorder %s38, 3
      %p227 = por %p225, %p226
      %p228 = scmp.ne.s32.totalorder %s219, %s220
      %p229 = scmp.eq.s32.totalorder %s38, 0
      %p230 = por %p228, %p229
      %p231 = scmp.ne.s32.totalorder %s219, %s220
      %p232 = scmp.eq.s32.totalorder %s39, 3
      %p233 = por %p231, %p232
      %p235 = scmp.ne.s32.totalorder %s220, %s234
      %p236 = scmp.eq.s32.totalorder %s39, 0
      %p237 = por %p235, %p236
      %s239 = sadd.s32 %s238, 1
      %p242 = scmp.eq.s32.totalorder %s33, 3
      %p243 = scmp.ne.s32.totalorder %s238, %s240
      %p244 = scmp.eq.s32.totalorder %s33, 0
      %p245 = por %p243, %p244
      %p246 = scmp.ne.s32.totalorder %s238, %s240
      %p247 = scmp.eq.s32.totalorder %s38, 3
      %p248 = por %p246, %p247
      %p249 = scmp.ne.s32.totalorder %s240, %s241
      %p250 = scmp.eq.s32.totalorder %s38, 0
      %p251 = por %p249, %p250
      %p252 = scmp.ne.s32.totalorder %s240, %s241
      %p253 = scmp.eq.s32.totalorder %s39, 3
      %p254 = por %p252, %p253
      %p256 = scmp.ne.s32.totalorder %s241, %s255
      %p257 = scmp.eq.s32.totalorder %s39, 0
      %p258 = por %p256, %p257
      %s260 = sadd.s32 %s259, 1
      %p263 = scmp.eq.s32.totalorder %s33, 3
      %p264 = scmp.ne.s32.totalorder %s259, %s261
      %p265 = scmp.eq.s32.totalorder %s33, 0
      %p266 = por %p264, %p265
      %p267 = scmp.ne.s32.totalorder %s259, %s261
      %p268 = scmp.eq.s32.totalorder %s38, 3
      %p269 = por %p267, %p268
      %p270 = scmp.ne.s32.totalorder %s261, %s262
      %p271 = scmp.eq.s32.totalorder %s38, 0
      %p272 = por %p270, %p271
      %p273 = scmp.ne.s32.totalorder %s261, %s262
      %p274 = scmp.eq.s32.totalorder %s39, 3
      %p275 = por %p273, %p274
      %p277 = scmp.ne.s32.totalorder %s262, %s276
      %p278 = scmp.eq.s32.totalorder %s39, 0
      %p279 = por %p277, %p278
      %s281 = sadd.s32 %s280, 1
      %p284 = scmp.eq.s32.totalorder %s33, 3
      %p285 = scmp.ne.s32.totalorder %s280, %s282
      %p286 = scmp.eq.s32.totalorder %s33, 0
      %p287 = por %p285, %p286
      %p288 = scmp.ne.s32.totalorder %s280, %s282
      %p289 = scmp.eq.s32.totalorder %s38, 3
      %p290 = por %p288, %p289
      %p291 = scmp.ne.s32.totalorder %s282, %s283
      %p292 = scmp.eq.s32.totalorder %s38, 0
      %p293 = por %p291, %p292
      %p294 = scmp.ne.s32.totalorder %s282, %s283
      %p295 = scmp.eq.s32.totalorder %s39, 3
      %p296 = por %p294, %p295
      %p298 = scmp.ne.s32.totalorder %s283, %s297
      %p299 = scmp.eq.s32.totalorder %s39, 0
      %p300 = por %p298, %p299
      %s302 = sadd.s32 %s301, 1
      %p305 = scmp.eq.s32.totalorder %s33, 3
      %p306 = scmp.ne.s32.totalorder %s301, %s303
      %p307 = scmp.eq.s32.totalorder %s33, 0
      %p308 = por %p306, %p307
      %p309 = scmp.ne.s32.totalorder %s301, %s303
      %p310 = scmp.eq.s32.totalorder %s38, 3
      %p311 = por %p309, %p310
      %p312 = scmp.ne.s32.totalorder %s303, %s304
      %p313 = scmp.eq.s32.totalorder %s38, 0
      %p314 = por %p312, %p313
      %p315 = scmp.ne.s32.totalorder %s303, %s304
      %p316 = scmp.eq.s32.totalorder %s39, 3
      %p317 = por %p315, %p316
      %p319 = scmp.ne.s32.totalorder %s304, %s318
      %p320 = scmp.eq.s32.totalorder %s39, 0
      %p321 = por %p319, %p320
      %s323 = sadd.s32 %s322, 1
      %p326 = scmp.eq.s32.totalorder %s33, 3
      %p327 = scmp.ne.s32.totalorder %s322, %s324
      %p328 = scmp.eq.s32.totalorder %s33, 0
      %p329 = por %p327, %p328
      %p330 = scmp.ne.s32.totalorder %s322, %s324
      %p331 = scmp.eq.s32.totalorder %s38, 3
      %p332 = por %p330, %p331
      %p333 = scmp.ne.s32.totalorder %s324, %s325
      %p334 = scmp.eq.s32.totalorder %s38, 0
      %p335 = por %p333, %p334
      %p336 = scmp.ne.s32.totalorder %s324, %s325
      %p337 = scmp.eq.s32.totalorder %s39, 3
      %p338 = por %p336, %p337
      %p340 = scmp.ne.s32.totalorder %s325, %s339
      %p341 = scmp.eq.s32.totalorder %s39, 0
      %p342 = por %p340, %p341
      %s344 = sadd.s32 %s343, 1
      %p347 = scmp.eq.s32.totalorder %s33, 3
      %p348 = scmp.ne.s32.totalorder %s343, %s345
      %p349 = scmp.eq.s32.totalorder %s33, 0
      %p350 = por %p348, %p349
      %p351 = scmp.ne.s32.totalorder %s343, %s345
      %p352 = scmp.eq.s32.totalorder %s38, 3
      %p353 = por %p351, %p352
      %p354 = scmp.ne.s32.totalorder %s345, %s346
      %p355 = scmp.eq.s32.totalorder %s38, 0
      %p356 = por %p354, %p355
      %p357 = scmp.ne.s32.totalorder %s345, %s346
      %p358 = scmp.eq.s32.totalorder %s39, 3
      %p359 = por %p357, %p358
      %p361 = scmp.ne.s32.totalorder %s346, %s360
      %p362 = scmp.eq.s32.totalorder %s39, 0
      %p363 = por %p361, %p362
      %s365 = sadd.s32 %s364, 1
      %p368 = scmp.eq.s32.totalorder %s33, 3
      %p369 = scmp.ne.s32.totalorder %s364, %s366
      %p370 = scmp.eq.s32.totalorder %s33, 0
      %p371 = por %p369, %p370
      %p372 = scmp.ne.s32.totalorder %s364, %s366
      %p373 = scmp.eq.s32.totalorder %s38, 3
      %p374 = por %p372, %p373
      %p375 = scmp.ne.s32.totalorder %s366, %s367
      %p376 = scmp.eq.s32.totalorder %s38, 0
      %p377 = por %p375, %p376
      %p378 = scmp.ne.s32.totalorder %s366, %s367
      %p379 = scmp.eq.s32.totalorder %s39, 3
      %p380 = por %p378, %p379
      %p382 = scmp.ne.s32.totalorder %s367, %s381
      %p383 = scmp.eq.s32.totalorder %s39, 0
      %p384 = por %p382, %p383
      %s386 = sadd.s32 %s385, 1
      %p389 = scmp.eq.s32.totalorder %s33, 3
      %p390 = scmp.ne.s32.totalorder %s385, %s387
      %p391 = scmp.eq.s32.totalorder %s33, 0
      %p392 = por %p390, %p391
      %p393 = scmp.ne.s32.totalorder %s385, %s387
      %p394 = scmp.eq.s32.totalorder %s38, 3
      %p395 = por %p393, %p394
      %p396 = scmp.ne.s32.totalorder %s387, %s388
      %p397 = scmp.eq.s32.totalorder %s38, 0
      %p398 = por %p396, %p397
      %p399 = scmp.ne.s32.totalorder %s387, %s388
      %p400 = scmp.eq.s32.totalorder %s39, 3
      %p401 = por %p399, %p400
      %p403 = scmp.ne.s32.totalorder %s388, %s402
      %p404 = scmp.eq.s32.totalorder %s39, 0
      %p405 = por %p403, %p404
      %s407 = sadd.s32 %s406, 1
      %p410 = scmp.eq.s32.totalorder %s33, 3
      %p411 = scmp.ne.s32.totalorder %s406, %s408
      %p412 = scmp.eq.s32.totalorder %s33, 0
      %p413 = por %p411, %p412
      %p414 = scmp.ne.s32.totalorder %s406, %s408
      %p415 = scmp.eq.s32.totalorder %s38, 3
      %p416 = por %p414, %p415
      %p417 = scmp.ne.s32.totalorder %s408, %s409
      %p418 = scmp.eq.s32.totalorder %s38, 0
      %p419 = por %p417, %p418
      %p420 = scmp.ne.s32.totalorder %s408, %s409
      %p421 = scmp.eq.s32.totalorder %s39, 3
      %p422 = por %p420, %p421
      %p424 = scmp.ne.s32.totalorder %s409, %s423
      %p425 = scmp.eq.s32.totalorder %s39, 0
      %p426 = por %p424, %p425
      %s427 = ssub.s32 %s40, %s52
      %s428 = ssub.s32 %s41, %s48
      %s429 = sor.u32 %s427, %s428
      %p430 = scmp.eq.s32.totalorder %s429, 0
      %s432 = sadd.s32 %s431, 1
      %s433 = scalar_select %p430, %s431, %s432
      %p436 = pneg %p430
      %p437 = scmp.eq.s32.totalorder %s33, 3
      %p438 = por %p436, %p437
      %p439 = scmp.ne.s32.totalorder %s431, %s434
      %p440 = scmp.eq.s32.totalorder %s33, 0
      %p441 = por %p439, %p440
      %p442 = scmp.ne.s32.totalorder %s431, %s434
      %p443 = scmp.eq.s32.totalorder %s38, 3
      %p444 = por %p442, %p443
      %p445 = scmp.ne.s32.totalorder %s434, %s435
      %p446 = scmp.eq.s32.totalorder %s38, 0
      %p447 = por %p445, %p446
      %p448 = scmp.ne.s32.totalorder %s434, %s435
      %p449 = scmp.eq.s32.totalorder %s39, 3
      %p450 = por %p448, %p449
      %p452 = scmp.ne.s32.totalorder %s435, %s451
      %p453 = scmp.eq.s32.totalorder %s39, 0
      %p454 = por %p452, %p453
      %p455 = scmp.le.s32.totalorder 1, %s33
      %p456 = scmp.lt.s32.totalorder %s33, 5
      %p457 = pnand %p455, %p456
      %p458 = pneg %p457
      // Predicated region
      $region9: #{tpu_custom_call.1} parent=5 // pred_check
        _
      $region10: #{tpu_custom_call.1} parent=5 // pred_check_branch
        %460 = sbr.rel (%p457) target = $region12
      $region11: #{tpu_custom_call.1} parent=5 // pred_region
        %s461 = ssub.s32 %s33, 1
        // Predicated region
        $region13: #{tpu_custom_call.1} parent=11 // pred_check
          %p462 = pneg %p146
        $region14: #{tpu_custom_call.1} parent=11 // pred_check_branch
          %464 = sbr.rel (%p462) target = $region16
        $region15: #{tpu_custom_call.1} parent=11 // pred_region
          _
        $region16: #{tpu_custom_call.1} parent=11 // pred_fallthru
          _
        // Predicated region
        $region17: #{tpu_custom_call.1} parent=11 // pred_check
          %p465 = pneg %p167
        $region18: #{tpu_custom_call.1} parent=11 // pred_check_branch
          %467 = sbr.rel (%p465) target = $region20
        $region19: #{tpu_custom_call.1} parent=11 // pred_region
          _
        $region20: #{tpu_custom_call.1} parent=11 // pred_fallthru
          _
        // Predicated region
        $region21: #{tpu_custom_call.1} parent=11 // pred_check
          %p468 = pneg %p188
        $region22: #{tpu_custom_call.1} parent=11 // pred_check_branch
          %470 = sbr.rel (%p468) target = $region24
        $region23: #{tpu_custom_call.1} parent=11 // pred_region
          %472 = vsyncadd [#allocation7], 0
          %s473 = sshll.u32 %s5, 4
          %s474 = int_to_ptr.hbm [resolvable:$true] %s473
          %s475 = sshll.u32 [#allocation8], 4
          %s476 = int_to_ptr.vmem [resolvable:$true] %s475
          %481 = dma.hbm_to_vmem [thread:$0]  %s474, 256, %s476, [#allocation7], 64, 64, 4
        $region24: #{tpu_custom_call.1} parent=11 // pred_fallthru
          _
        // Predicated region
        $region25: #{tpu_custom_call.1} parent=11 // pred_check
          %p482 = pneg %p209
        $region26: #{tpu_custom_call.1} parent=11 // pred_check_branch
          %484 = sbr.rel (%p482) target = $region28
        $region27: #{tpu_custom_call.1} parent=11 // pred_region
          _
        $region28: #{tpu_custom_call.1} parent=11 // pred_fallthru
          _
        // Predicated region
        $region29: #{tpu_custom_call.1} parent=11 // pred_check
          %p485 = pneg %p230
        $region30: #{tpu_custom_call.1} parent=11 // pred_check_branch
          %487 = sbr.rel (%p485) target = $region32
        $region31: #{tpu_custom_call.1} parent=11 // pred_region
          %489 = vsyncadd [#allocation10], 0
          %s490 = sshll.u32 %s7, 4
          %s491 = int_to_ptr.hbm [resolvable:$true] %s490
          %s492 = sshll.u32 [#allocation9], 4
          %s493 = int_to_ptr.vmem [resolvable:$true] %s492
          %498 = dma.hbm_to_vmem [thread:$0]  %s491, 256, %s493, [#allocation10], 64, 64, 4
        $region32: #{tpu_custom_call.1} parent=11 // pred_fallthru
          _
        // Predicated region
        $region33: #{tpu_custom_call.1} parent=11 // pred_check
          %p499 = pneg %p251
        $region34: #{tpu_custom_call.1} parent=11 // pred_check_branch
          %501 = sbr.rel (%p499) target = $region36
        $region35: #{tpu_custom_call.1} parent=11 // pred_region
          _
        $region36: #{tpu_custom_call.1} parent=11 // pred_fallthru
          _
        // Predicated region
        $region37: #{tpu_custom_call.1} parent=11 // pred_check
          %p502 = pneg %p272
        $region38: #{tpu_custom_call.1} parent=11 // pred_check_branch
          %504 = sbr.rel (%p502) target = $region40
        $region39: #{tpu_custom_call.1} parent=11 // pred_region
          _
        $region40: #{tpu_custom_call.1} parent=11 // pred_fallthru
          _
        // Predicated region
        $region41: #{tpu_custom_call.1} parent=11 // pred_check
          %p505 = pneg %p293
        $region42: #{tpu_custom_call.1} parent=11 // pred_check_branch
          %507 = sbr.rel (%p505) target = $region44
        $region43: #{tpu_custom_call.1} parent=11 // pred_region
          _
        $region44: #{tpu_custom_call.1} parent=11 // pred_fallthru
          _
        // Predicated region
        $region45: #{tpu_custom_call.1} parent=11 // pred_check
          %p508 = pneg %p314
        $region46: #{tpu_custom_call.1} parent=11 // pred_check_branch
          %510 = sbr.rel (%p508) target = $region48
        $region47: #{tpu_custom_call.1} parent=11 // pred_region
          %512 = vsyncadd [#allocation10], 0
          %s513 = sshll.u32 %s11, 4
          %s514 = int_to_ptr.hbm [resolvable:$true] %s513
          %s515 = sshll.u32 [#allocation11], 4
          %s516 = int_to_ptr.vmem [resolvable:$true] %s515
          %521 = dma.hbm_to_vmem [thread:$0]  %s514, 256, %s516, [#allocation10], 64, 64, 4
        $region48: #{tpu_custom_call.1} parent=11 // pred_fallthru
          _
        // Predicated region
        $region49: #{tpu_custom_call.1} parent=11 // pred_check
          %p522 = pneg %p335
        $region50: #{tpu_custom_call.1} parent=11 // pred_check_branch
          %524 = sbr.rel (%p522) target = $region52
        $region51: #{tpu_custom_call.1} parent=11 // pred_region
          _
        $region52: #{tpu_custom_call.1} parent=11 // pred_fallthru
          _
        // Predicated region
        $region53: #{tpu_custom_call.1} parent=11 // pred_check
          %p525 = pneg %p356
        $region54: #{tpu_custom_call.1} parent=11 // pred_check_branch
          %527 = sbr.rel (%p525) target = $region56
        $region55: #{tpu_custom_call.1} parent=11 // pred_region
          _
        $region56: #{tpu_custom_call.1} parent=11 // pred_fallthru
          _
        // Predicated region
        $region57: #{tpu_custom_call.1} parent=11 // pred_check
          %p528 = pneg %p377
        $region58: #{tpu_custom_call.1} parent=11 // pred_check_branch
          %530 = sbr.rel (%p528) target = $region60
        $region59: #{tpu_custom_call.1} parent=11 // pred_region
          _
        $region60: #{tpu_custom_call.1} parent=11 // pred_fallthru
          _
        // Predicated region
        $region61: #{tpu_custom_call.1} parent=11 // pred_check
          %p531 = pneg %p398
        $region62: #{tpu_custom_call.1} parent=11 // pred_check_branch
          %533 = sbr.rel (%p531) target = $region64
        $region63: #{tpu_custom_call.1} parent=11 // pred_region
          _
        $region64: #{tpu_custom_call.1} parent=11 // pred_fallthru
          _
        // Predicated region
        $region65: #{tpu_custom_call.1} parent=11 // pred_check
          %p534 = pneg %p419
        $region66: #{tpu_custom_call.1} parent=11 // pred_check_branch
          %536 = sbr.rel (%p534) target = $region68
        $region67: #{tpu_custom_call.1} parent=11 // pred_region
          _
        $region68: #{tpu_custom_call.1} parent=11 // pred_fallthru
          _
      $region12: #{tpu_custom_call.1} parent=5 // pred_fallthru
        _
      %p537 = scmp.lt.s32.totalorder %s33, 4
      // Predicated region
      $region69: #{tpu_custom_call.1} parent=5 // pred_check
        %p538 = pneg %p537
      $region70: #{tpu_custom_call.1} parent=5 // pred_check_branch
        %540 = sbr.rel (%p538) target = $region72
      $region71: #{tpu_custom_call.1} parent=5 // pred_region
        // Predicated region
        $region73: #{tpu_custom_call.1} parent=71 // pred_check
          %p541 = pneg %p65
        $region74: #{tpu_custom_call.1} parent=71 // pred_check_branch
          %543 = sbr.rel (%p541) target = $region76
        $region75: #{tpu_custom_call.1} parent=71 // pred_region
          %p544 = scmp.lt.s32.totalorder %s40, 1
          %s545 = scalar_select %p544, %s40, 1
          %s546 = smul.addr %s545, 2
          %s547 = smul.addr %s546, 8
          %s548 = scalar_lea.vmem %s0, %s547
        $region76: #{tpu_custom_call.1} parent=71 // pred_fallthru
          _
        // Predicated region
        $region77: #{tpu_custom_call.1} parent=71 // pred_check
          %p549 = pneg %p93
        $region78: #{tpu_custom_call.1} parent=71 // pred_check_branch
          %551 = sbr.rel (%p549) target = $region80
        $region79: #{tpu_custom_call.1} parent=71 // pred_region
          %s552 = sand.u32 %s83, 1
          %s553 = scalar_lea.sflag [#allocation4], %s552
          %s554 = sand.u32 %s83, 1
          %s555 = smul.addr %s554, 8
          %s556 = scalar_lea.vmem [#allocation3], %s555
          %558 = vsyncadd %s553, 0
          %s559 = smul.addr %s40, 2
          %s560 = sadd.s32 %s41, %s559
          %s561 = smul.addr %s560, 8
          %s562 = scalar_lea.hbm %s1, %s561
          %s564 = sshll.u32 %s562, 4
          %s565 = int_to_ptr.hbm [resolvable:$true] %s564
          %s566 = sshll.u32 %s556, 4
          %s567 = int_to_ptr.vmem [resolvable:$true] %s566
          %569 = dma.hbm_to_vmem [thread:$0]  %s565, 128, %s567, %s553
        $region80: #{tpu_custom_call.1} parent=71 // pred_fallthru
          _
        // Predicated region
        $region81: #{tpu_custom_call.1} parent=71 // pred_check
          %p570 = pneg %p119
        $region82: #{tpu_custom_call.1} parent=71 // pred_check_branch
          %572 = sbr.rel (%p570) target = $region84
        $region83: #{tpu_custom_call.1} parent=71 // pred_region
          %s573 = sand.u32 %s33, 1
          %s574 = scalar_lea.sflag [#allocation7], %s573
          %s575 = sand.u32 %s109, 1
          %s576 = scalar_lea.vmem [#allocation6], %s575
          %578 = vsyncadd %s574, 0
          %s579 = scalar_lea.hbm %s2, %s40
          %s581 = sshll.u32 %s579, 4
          %s582 = int_to_ptr.hbm [resolvable:$true] %s581
          %s583 = sshll.u32 %s576, 4
          %s584 = int_to_ptr.vmem [resolvable:$true] %s583
          %586 = dma.hbm_to_vmem [thread:$0]  %s582, 16, %s584, %s574
        $region84: #{tpu_custom_call.1} parent=71 // pred_fallthru
          _
      $region72: #{tpu_custom_call.1} parent=5 // pred_fallthru
        _
      %p587 = scmp.le.s32.totalorder 1, %s33
      %p588 = scmp.lt.s32.totalorder %s33, 5
      %p589 = pnand %p587, %p588
      %p590 = pneg %p589
      // Predicated region
      $region85: #{tpu_custom_call.1} parent=5 // pred_check
        _
      $region86: #{tpu_custom_call.1} parent=5 // pred_check_branch
        %592 = sbr.rel (%p589) target = $region88
      $region87: #{tpu_custom_call.1} parent=5 // pred_region
        %s593 = ssub.s32 %s33, 1
        %s594 = sand.u32 %s86, 1
        %s595 = scalar_lea.sflag [#allocation4], %s594
        %s596 = sand.u32 %s86, 1
        %s597 = smul.addr %s596, 8
        %s598 = scalar_lea.vmem [#allocation3], %s597
        // Predicated region
        $region89: #{tpu_custom_call.1} parent=87 // pred_check
          %p599 = pneg %p99
        $region90: #{tpu_custom_call.1} parent=87 // pred_check_branch
          %601 = sbr.rel (%p599) target = $region92
        $region91: #{tpu_custom_call.1} parent=87 // pred_region
          %603 = dma.done %s595, 128
        $region92: #{tpu_custom_call.1} parent=87 // pred_fallthru
          _
        %s604 = sand.u32 %s38, 1
        %s605 = scalar_lea.sflag [#allocation7], %s604
        %s606 = sand.u32 %s112, 1
        %s607 = scalar_lea.vmem [#allocation6], %s606
        // Predicated region
        $region93: #{tpu_custom_call.1} parent=87 // pred_check
          %p608 = pneg %p125
        $region94: #{tpu_custom_call.1} parent=87 // pred_check_branch
          %610 = sbr.rel (%p608) target = $region96
        $region95: #{tpu_custom_call.1} parent=87 // pred_region
          %612 = dma.done %s605, 16
        $region96: #{tpu_custom_call.1} parent=87 // pred_fallthru
          _
        // Predicated region
        $region97: #{tpu_custom_call.1} parent=87 // pred_check
          %p613 = pneg %p188
        $region98: #{tpu_custom_call.1} parent=87 // pred_check_branch
          %615 = sbr.rel (%p613) target = $region100
        $region99: #{tpu_custom_call.1} parent=87 // pred_region
          %617 = dma.done [#allocation7], 256
        $region100: #{tpu_custom_call.1} parent=87 // pred_fallthru
          _
        // Predicated region
        $region101: #{tpu_custom_call.1} parent=87 // pred_check
          %p618 = pneg %p230
        $region102: #{tpu_custom_call.1} parent=87 // pred_check_branch
          %620 = sbr.rel (%p618) target = $region104
        $region103: #{tpu_custom_call.1} parent=87 // pred_region
          %622 = dma.done [#allocation10], 256
        $region104: #{tpu_custom_call.1} parent=87 // pred_fallthru
          _
        // Predicated region
        $region105: #{tpu_custom_call.1} parent=87 // pred_check
          %p623 = pneg %p314
        $region106: #{tpu_custom_call.1} parent=87 // pred_check_branch
          %625 = sbr.rel (%p623) target = $region108
        $region107: #{tpu_custom_call.1} parent=87 // pred_region
          %627 = dma.done [#allocation10], 256
        $region108: #{tpu_custom_call.1} parent=87 // pred_fallthru
          _
        %p628 = scmp.lt.s32.totalorder %s42, 1
        %s629 = scalar_select %p628, %s42, 1
        %s630 = smul.addr %s629, 2
        %s631 = smul.addr %s630, 8
        %s632 = scalar_lea.vmem %s0, %s631
        %p633 = pneg %p71
        %p634 = pneg %p68
        %s635 = sand.u32 %s86, 1
        %s636 = scalar_lea.sflag [#allocation4], %s635
        %s637 = sand.u32 %s86, 1
        %s638 = smul.addr %s637, 8
        %s639 = scalar_lea.vmem [#allocation3], %s638
        %p640 = pneg %p99
        %p641 = pneg %p96
        %s642 = sand.u32 %s38, 1
        %s643 = scalar_lea.sflag [#allocation7], %s642
        %s644 = sand.u32 %s112, 1
        %s645 = scalar_lea.vmem [#allocation6], %s644
        %p646 = pneg %p125
        %p647 = pneg %p122
        %p648 = pneg %p146
        %p649 = pneg %p143
        %p650 = pneg %p167
        %p651 = pneg %p164
        %p652 = pneg %p188
        %p653 = pneg %p185
        %p654 = pneg %p209
        %p655 = pneg %p206
        %p656 = pneg %p230
        %p657 = pneg %p227
        %p658 = pneg %p251
        %p659 = pneg %p248
        %p660 = pneg %p272
        %p661 = pneg %p269
        %p662 = pneg %p293
        %p663 = pneg %p290
        %p664 = pneg %p314
        %p665 = pneg %p311
        %p666 = pneg %p335
        %p667 = pneg %p332
        %p668 = pneg %p356
        %p669 = pneg %p353
        %p670 = pneg %p377
        %p671 = pneg %p374
        %p672 = pneg %p398
        %p673 = pneg %p395
        %p674 = pneg %p419
        %p675 = pneg %p416
        %p676 = pneg %p447
        %p677 = pneg %p444
        %s678 = sand.u32 %s434, 1
        %s679 = scalar_lea.sflag [#allocation5], %s678
        %s680 = sand.u32 %s434, 1
        %s681 = smul.addr %s680, 8
        %s682 = scalar_lea.vmem [#allocation12], %s681
        %p683 = scmp.lt.s32.totalorder %s42, 1
        %s684 = scalar_select %p683, %s42, 1
        %s685 = smul.addr %s684, 2
        %s686 = smul.addr %s685, 8
        %s687 = scalar_lea.vmem %s0, %s686
        %p689 = scmp.eq.s32.totalorder %s43, 0
        // Predicated region
        $region109: #{tpu_custom_call.1} parent=87 // pred_check
          %p690 = pneg %p689
        $region110: #{tpu_custom_call.1} parent=87 // pred_check_branch
          %692 = sbr.rel (%p690) target = $region112
        $region111: #{tpu_custom_call.1} parent=87 // pred_region
          %v693 = vld [vmem:[%s687] sm:$0xff]
          %v694 = vld [vmem:[%s687 + $0x8] sm:$0xff]
          %v695 = vpack.c.bf16 %v694, %v693
          %v696 = vld [vmem:[#allocation8] sm:$0xf]
          %v697 = vld [vmem:[#allocation8 + $0x4] sm:$0xf]
          %v698 = vld [vmem:[#allocation8 + $0x8] sm:$0xf]
          %v699 = vld [vmem:[#allocation8 + $0xc] sm:$0xf]
          %v700 = vld [vmem:[%s6] sm:$0x1]
          %v702 = vperm.slane %v700, 0
          %v708 = vunpack.c.l.b16 %v696
          %v709 = vunpack.c.l.b16 %v697
          %v710 = vunpack.c.l.b16 %v698
          %v711 = vunpack.c.l.b16 %v699
          %v712 = vpack.c.b16 %v709, %v708
          %v713 = vpack.c.b16 %v711, %v710
          %vm716 = vcmask 261120
          %v718 = vsel %vm716, %v695, 0
          %720 = vmatpush.bf16.msra.mxu0 0
          %721 = vmatpush.bf16.msra.mxu0 0
          %722 = vmatpush.bf16.msra.mxu0 0
          %723 = vmatpush.bf16.msra.mxu0 0
          %724 = vmatpush.bf16.msra.mxu0 0
          %725 = vmatpush.bf16.msra.mxu0 0
          %726 = vmatpush.bf16.msra.mxu0 %v713
          %727 = vmatpush.bf16.msra.mxu0 %v712
          %728 = vmatmul.bf16.gmra.mxu0 %v718
          %v729 = vpop.f32.mrf.mxu0
          %v730 = vadd.f32 %v702, %v729
          %v731 = vpop.f32.mrf.mxu0
          %v732 = vadd.f32 %v702, %v731
          %733 = vdwg.mxu0
          %v734 = vpack.c.bf16 %v730, %v730
          %v735 = vpack.c.bf16 %v732, %v732
          %vm736 = vcmask 519168
          %737 = vst.msk [vmem:[#allocation2] sm:$0xf] %vm736, %v734
          %738 = vst.msk [vmem:[#allocation2 + $0x4] sm:$0xf] %vm736, %v735
        $region112: #{tpu_custom_call.1} parent=87 // pred_fallthru
          _
        %v739 = vld [vmem:[%s598] sm:$0xff]
        %v740 = vpack.c.bf16 %v739, %v739
        %v741 = vld [vmem:[%s3] sm:$0xf]
        %v742 = vld [vmem:[%s3 + $0x4] sm:$0xf]
        %v743 = vld [vmem:[%s3 + $0x8] sm:$0xf]
        %v744 = vld [vmem:[%s3 + $0xc] sm:$0xf]
        %v745 = vld [vmem:[%s4] sm:$0x1]
        %v747 = vperm.slane %v745, 0
        %v753 = vunpack.c.l.b16 %v741
        %v754 = vunpack.c.l.b16 %v742
        %v755 = vunpack.c.l.b16 %v743
        %v756 = vunpack.c.l.b16 %v744
        %v757 = vpack.c.b16 %v754, %v753
        %v758 = vpack.c.b16 %v756, %v755
        %vm761 = vcmask 261120
        %v763 = vsel %vm761, %v740, 0
        %765 = vmatpush.bf16.msra.mxu0 0
        %766 = vmatpush.bf16.msra.mxu0 0
        %767 = vmatpush.bf16.msra.mxu0 0
        %768 = vmatpush.bf16.msra.mxu0 0
        %769 = vmatpush.bf16.msra.mxu0 0
        %770 = vmatpush.bf16.msra.mxu0 0
        %771 = vmatpush.bf16.msra.mxu0 %v758
        %772 = vmatpush.bf16.msra.mxu0 %v757
        %773 = vmatmul.bf16.gmra.mxu0 %v763
        %v774 = vpop.f32.mrf.mxu0
        %v775 = vadd.f32 %v747, %v774
        %v776 = vpop.f32.mrf.mxu0
        %777 = vdwg.mxu0
        %v778 = vmul.f32 %v775, 0.35355338
        %v779 = vpack.c.bf16 %v778, %v778
        %v780 = vld [vmem:[%s607] sm:$0x1]
        %vm781 = vcmp.gt.f32.partialorder %v780, 0.0
        %v782 = vsel %vm781, 0.0, -1e+09
        %v783 = vld [vmem:[#allocation2] sm:$0xf]
        %v784 = vld [vmem:[#allocation2 + $0x4] sm:$0xf]
        %v785 = vld [vmem:[#allocation9] sm:$0xf]
        %v786 = vld [vmem:[#allocation9 + $0x4] sm:$0xf]
        %v787 = vld [vmem:[#allocation9 + $0x8] sm:$0xf]
        %v788 = vld [vmem:[#allocation9 + $0xc] sm:$0xf]
        %v790 = vperm.slane %v782, 0
        %v794 = vunpack.c.l.b16 %v783
        %v795 = vunpack.c.l.b16 %v784
        %v796 = vpack.c.b16 %v795, %v794
        %vm797 = vcmask 64512
        %v799 = vsel %vm797, %v779, 0
        %v802 = vsel %vm797, %v796, 0
        %804 = vmatpush.bf16.xpose.msra.mxu0 0
        %805 = vmatpush.bf16.xpose.msra.mxu0 0
        %806 = vmatpush.bf16.xpose.msra.mxu0 0
        %807 = vmatpush.bf16.xpose.msra.mxu0 0
        %808 = vmatpush.bf16.xpose.msra.mxu0 0
        %809 = vmatpush.bf16.xpose.msra.mxu0 0
        %810 = vmatpush.bf16.xpose.msra.mxu0 0
        %811 = vmatpush.bf16.xpose.msra.mxu0 %v802
        %812 = vmatmul.bf16.gmra.mxu0 %v799
        %v813 = vpop.f32.mrf.mxu0
        %v814 = vadd.f32 %v790, %v813
        %v815 = vpop.f32.mrf.mxu0
        %816 = vdwg.mxu0
        %vm817 = vcmask 130048
        %v818 = vsel %vm817, %v814, -inf
        %819 = vmax.xlane.f32.xlu0 %v818
        %v820 = vpop.xlane.xlu0 %819
        %v821 = vsub.f32 %v814, %v820
        %v822 = vmul.f32 %v821, 1.442695
        %v823 = vpow.pop %v822
        %v824 = vsel %vm817, %v823, 0.0
        %825 = vadd.xlane.f32.xlu0 %v824
        %v826 = vpop.xlane.xlu0 %825
        %v827 = vrcp.pop %v826
        %v828 = vmul.f32 %v823, %v827
        %v829 = vpack.c.bf16 %v828, %v828
        %830 = vrot.lane.b32.xlu0 %v796, 96
        %v831 = vpop.permute.xlu0 %830
        %v834 = vsel %vm817, %v829, 0
        %836 = vmatpush.bf16.msra.mxu0 0
        %837 = vmatpush.bf16.msra.mxu0 0
        %838 = vmatpush.bf16.msra.mxu0 0
        %839 = vmatpush.bf16.msra.mxu0 0
        %840 = vmatpush.bf16.msra.mxu0 0
        %841 = vmatpush.bf16.msra.mxu0 0
        %842 = vmatpush.bf16.msra.mxu0 0
        %843 = vmatpush.bf16.msra.mxu0 %v831
        %844 = vmatmul.bf16.gmra.mxu0 %v834
        %v845 = vpop.f32.mrf.mxu0
        %v846 = vadd.f32 0.0, %v845
        %v847 = vpop.f32.mrf.mxu0
        %848 = vdwg.mxu0
        %v849 = vpack.c.bf16 %v846, %v846
        %v851 = vunpack.c.l.b16 %v779
        %v852 = vpack.c.b16 %v851, %v851
        %853 = vrot.lane.b32.xlu0 %v852, 120
        %v854 = vpop.permute.xlu0 %853
        %855 = vrot.lane.b32.xlu0 %v796, 120
        %v856 = vpop.permute.xlu0 %855
        %v858 = vsel %vm797, %v854, 0
        %v861 = vsel %vm797, %v856, 0
        %863 = vmatpush.bf16.xpose.msra.mxu0 0
        %864 = vmatpush.bf16.xpose.msra.mxu0 0
        %865 = vmatpush.bf16.xpose.msra.mxu0 0
        %866 = vmatpush.bf16.xpose.msra.mxu0 0
        %867 = vmatpush.bf16.xpose.msra.mxu0 0
        %868 = vmatpush.bf16.xpose.msra.mxu0 0
        %869 = vmatpush.bf16.xpose.msra.mxu0 0
        %870 = vmatpush.bf16.xpose.msra.mxu0 %v861
        %871 = vmatmul.bf16.gmra.mxu0 %v858
        %v872 = vpop.f32.mrf.mxu0
        %v873 = vadd.f32 %v790, %v872
        %v874 = vpop.f32.mrf.mxu0
        %875 = vdwg.mxu0
        %v876 = vsel %vm817, %v873, -inf
        %877 = vmax.xlane.f32.xlu0 %v876
        %v878 = vpop.xlane.xlu0 %877
        %v879 = vsub.f32 %v873, %v878
        %v880 = vmul.f32 %v879, 1.442695
        %v881 = vpow.pop %v880
        %v882 = vsel %vm817, %v881, 0.0
        %883 = vadd.xlane.f32.xlu0 %v882
        %v884 = vpop.xlane.xlu0 %883
        %v885 = vrcp.pop %v884
        %v886 = vmul.f32 %v881, %v885
        %v887 = vpack.c.bf16 %v886, %v886
        %888 = vrot.lane.b32.xlu0 %v796, 88
        %v889 = vpop.permute.xlu0 %888
        %v892 = vsel %vm817, %v887, 0
        %894 = vmatpush.bf16.msra.mxu0 0
        %895 = vmatpush.bf16.msra.mxu0 0
        %896 = vmatpush.bf16.msra.mxu0 0
        %897 = vmatpush.bf16.msra.mxu0 0
        %898 = vmatpush.bf16.msra.mxu0 0
        %899 = vmatpush.bf16.msra.mxu0 0
        %900 = vmatpush.bf16.msra.mxu0 0
        %901 = vmatpush.bf16.msra.mxu0 %v889
        %902 = vmatmul.bf16.gmra.mxu0 %v892
        %v903 = vpop.f32.mrf.mxu0
        %v904 = vadd.f32 0.0, %v903
        %v905 = vpop.f32.mrf.mxu0
        %906 = vdwg.mxu0
        %v907 = vpack.c.bf16 %v904, %v904
        %v909 = vsel %vm797, %v907, 0
        %vm911 = vcmask 1043456
        %v913 = vsel %vm911, %v786, 0
        %915 = vmatpush.bf16.msra.mxu0 0
        %916 = vmatpush.bf16.msra.mxu0 0
        %917 = vmatpush.bf16.msra.mxu0 0
        %918 = vmatpush.bf16.msra.mxu0 0
        %919 = vmatpush.bf16.msra.mxu0 0
        %920 = vmatpush.bf16.msra.mxu0 0
        %921 = vmatpush.bf16.msra.mxu0 0
        %922 = vmatpush.bf16.msra.mxu0 %v913
        %923 = vmatmul.bf16.gmra.mxu0 %v909
        %v924 = vpop.f32.mrf.mxu0
        %v925 = vadd.f32 0.0, %v924
        %v926 = vpop.f32.mrf.mxu0
        %927 = vdwg.mxu0
        %v929 = vsel %vm797, %v849, 0
        %v932 = vsel %vm911, %v785, 0
        %934 = vmatpush.bf16.msra.mxu0 0
        %935 = vmatpush.bf16.msra.mxu0 0
        %936 = vmatpush.bf16.msra.mxu0 0
        %937 = vmatpush.bf16.msra.mxu0 0
        %938 = vmatpush.bf16.msra.mxu0 0
        %939 = vmatpush.bf16.msra.mxu0 0
        %940 = vmatpush.bf16.msra.mxu0 0
        %941 = vmatpush.bf16.msra.mxu0 %v932
        %942 = vmatmul.bf16.gmra.mxu0 %v929
        %v943 = vpop.f32.mrf.mxu0
        %v944 = vadd.f32 %v925, %v943
        %v945 = vpop.f32.mrf.mxu0
        %946 = vdwg.mxu0
        %947 = vrot.lane.b32.xlu0 %v852, 112
        %v948 = vpop.permute.xlu0 %947
        %949 = vrot.lane.b32.xlu0 %v796, 112
        %v950 = vpop.permute.xlu0 %949
        %v952 = vsel %vm797, %v948, 0
        %v955 = vsel %vm797, %v950, 0
        %957 = vmatpush.bf16.xpose.msra.mxu0 0
        %958 = vmatpush.bf16.xpose.msra.mxu0 0
        %959 = vmatpush.bf16.xpose.msra.mxu0 0
        %960 = vmatpush.bf16.xpose.msra.mxu0 0
        %961 = vmatpush.bf16.xpose.msra.mxu0 0
        %962 = vmatpush.bf16.xpose.msra.mxu0 0
        %963 = vmatpush.bf16.xpose.msra.mxu0 0
        %964 = vmatpush.bf16.xpose.msra.mxu0 %v955
        %965 = vmatmul.bf16.gmra.mxu0 %v952
        %v966 = vpop.f32.mrf.mxu0
        %v967 = vadd.f32 %v790, %v966
        %v968 = vpop.f32.mrf.mxu0
        %969 = vdwg.mxu0
        %v970 = vsel %vm817, %v967, -inf
        %971 = vmax.xlane.f32.xlu0 %v970
        %v972 = vpop.xlane.xlu0 %971
        %v973 = vsub.f32 %v967, %v972
        %v974 = vmul.f32 %v973, 1.442695
        %v975 = vpow.pop %v974
        %v976 = vsel %vm817, %v975, 0.0
        %977 = vadd.xlane.f32.xlu0 %v976
        %v978 = vpop.xlane.xlu0 %977
        %v979 = vrcp.pop %v978
        %v980 = vmul.f32 %v975, %v979
        %v981 = vpack.c.bf16 %v980, %v980
        %982 = vrot.lane.b32.xlu0 %v796, 80
        %v983 = vpop.permute.xlu0 %982
        %v986 = vsel %vm817, %v981, 0
        %988 = vmatpush.bf16.msra.mxu0 0
        %989 = vmatpush.bf16.msra.mxu0 0
        %990 = vmatpush.bf16.msra.mxu0 0
        %991 = vmatpush.bf16.msra.mxu0 0
        %992 = vmatpush.bf16.msra.mxu0 0
        %993 = vmatpush.bf16.msra.mxu0 0
        %994 = vmatpush.bf16.msra.mxu0 0
        %995 = vmatpush.bf16.msra.mxu0 %v983
        %996 = vmatmul.bf16.gmra.mxu0 %v986
        %v997 = vpop.f32.mrf.mxu0
        %v998 = vadd.f32 0.0, %v997
        %v999 = vpop.f32.mrf.mxu0
        %1000 = vdwg.mxu0
        %v1001 = vpack.c.bf16 %v998, %v998
        %v1003 = vsel %vm797, %v1001, 0
        %v1006 = vsel %vm911, %v787, 0
        %1008 = vmatpush.bf16.msra.mxu0 0
        %1009 = vmatpush.bf16.msra.mxu0 0
        %1010 = vmatpush.bf16.msra.mxu0 0
        %1011 = vmatpush.bf16.msra.mxu0 0
        %1012 = vmatpush.bf16.msra.mxu0 0
        %1013 = vmatpush.bf16.msra.mxu0 0
        %1014 = vmatpush.bf16.msra.mxu0 0
        %1015 = vmatpush.bf16.msra.mxu0 %v1006
        %1016 = vmatmul.bf16.gmra.mxu0 %v1003
        %v1017 = vpop.f32.mrf.mxu0
        %v1018 = vadd.f32 0.0, %v1017
        %v1019 = vpop.f32.mrf.mxu0
        %1020 = vdwg.mxu0
        %v1021 = vadd.f32 %v944, %v1018
        %1022 = vrot.lane.b32.xlu0 %v852, 104
        %v1023 = vpop.permute.xlu0 %1022
        %1024 = vrot.lane.b32.xlu0 %v796, 104
        %v1025 = vpop.permute.xlu0 %1024
        %v1027 = vsel %vm797, %v1023, 0
        %v1030 = vsel %vm797, %v1025, 0
        %1032 = vmatpush.bf16.xpose.msra.mxu0 0
        %1033 = vmatpush.bf16.xpose.msra.mxu0 0
        %1034 = vmatpush.bf16.xpose.msra.mxu0 0
        %1035 = vmatpush.bf16.xpose.msra.mxu0 0
        %1036 = vmatpush.bf16.xpose.msra.mxu0 0
        %1037 = vmatpush.bf16.xpose.msra.mxu0 0
        %1038 = vmatpush.bf16.xpose.msra.mxu0 0
        %1039 = vmatpush.bf16.xpose.msra.mxu0 %v1030
        %1040 = vmatmul.bf16.gmra.mxu0 %v1027
        %v1041 = vpop.f32.mrf.mxu0
        %v1042 = vadd.f32 %v790, %v1041
        %v1043 = vpop.f32.mrf.mxu0
        %1044 = vdwg.mxu0
        %v1045 = vsel %vm817, %v1042, -inf
        %1046 = vmax.xlane.f32.xlu0 %v1045
        %v1047 = vpop.xlane.xlu0 %1046
        %v1048 = vsub.f32 %v1042, %v1047
        %v1049 = vmul.f32 %v1048, 1.442695
        %v1050 = vpow.pop %v1049
        %v1051 = vsel %vm817, %v1050, 0.0
        %1052 = vadd.xlane.f32.xlu0 %v1051
        %v1053 = vpop.xlane.xlu0 %1052
        %v1054 = vrcp.pop %v1053
        %v1055 = vmul.f32 %v1050, %v1054
        %v1056 = vpack.c.bf16 %v1055, %v1055
        %1057 = vrot.lane.b32.xlu0 %v796, 72
        %v1058 = vpop.permute.xlu0 %1057
        %v1061 = vsel %vm817, %v1056, 0
        %1063 = vmatpush.bf16.msra.mxu0 0
        %1064 = vmatpush.bf16.msra.mxu0 0
        %1065 = vmatpush.bf16.msra.mxu0 0
        %1066 = vmatpush.bf16.msra.mxu0 0
        %1067 = vmatpush.bf16.msra.mxu0 0
        %1068 = vmatpush.bf16.msra.mxu0 0
        %1069 = vmatpush.bf16.msra.mxu0 0
        %1070 = vmatpush.bf16.msra.mxu0 %v1058
        %1071 = vmatmul.bf16.gmra.mxu0 %v1061
        %v1072 = vpop.f32.mrf.mxu0
        %v1073 = vadd.f32 0.0, %v1072
        %v1074 = vpop.f32.mrf.mxu0
        %1075 = vdwg.mxu0
        %v1076 = vpack.c.bf16 %v1073, %v1073
        %v1078 = vsel %vm797, %v1076, 0
        %v1081 = vsel %vm911, %v788, 0
        %1083 = vmatpush.bf16.msra.mxu0 0
        %1084 = vmatpush.bf16.msra.mxu0 0
        %1085 = vmatpush.bf16.msra.mxu0 0
        %1086 = vmatpush.bf16.msra.mxu0 0
        %1087 = vmatpush.bf16.msra.mxu0 0
        %1088 = vmatpush.bf16.msra.mxu0 0
        %1089 = vmatpush.bf16.msra.mxu0 0
        %1090 = vmatpush.bf16.msra.mxu0 %v1081
        %1091 = vmatmul.bf16.gmra.mxu0 %v1078
        %v1092 = vpop.f32.mrf.mxu0
        %v1093 = vadd.f32 0.0, %v1092
        %v1094 = vpop.f32.mrf.mxu0
        %1095 = vdwg.mxu0
        %v1096 = vadd.f32 %v1021, %v1093
        %v1097 = vld [vmem:[%s8] sm:$0x1]
        %v1099 = vperm.slane %v1097, 0
        %v1101 = vadd.f32 %v1096, %v1099
        %v1102 = vadd.f32 %v739, %v1101
        %v1103 = vsel %vm761, %v1102, 0.0
        %1104 = vadd.xlane.f32.xlu0 %v1103
        %v1105 = vpop.xlane.xlu0 %1104
        %v1106 = vrcp.pop 32.0
        %v1107 = vmul.f32 32.0, %v1106
        %v1108 = vsub.f32 1.0, %v1107
        %v1109 = vmul.f32 %v1106, %v1108
        %v1110 = vadd.f32 %v1106, %v1109
        %vm1111 = vweird.f32 %v1106
        %v1112 = vsel %vm1111, %v1106, %v1110
        %v1113 = vmul.f32 %v1105, %v1112
        %v1114 = vsub.f32 %v1102, %v1113
        %v1115 = vmul.f32 %v1114, %v1114
        %v1116 = vsel %vm761, %v1115, 0.0
        %1117 = vadd.xlane.f32.xlu0 %v1116
        %v1118 = vpop.xlane.xlu0 %1117
        %v1119 = vmul.f32 %v1118, %v1112
        %v1120 = vadd.f32 %v1119, 1e-05
        %v1121 = vrsqrt.pop %v1120
        %v1122 = vmul.f32 %v1121, %v1120
        %v1123 = vmul.f32 %v1122, %v1121
        %v1124 = vmul.f32 0.5, %v1123
        %v1125 = vsub.f32 1.5, %v1124
        %v1126 = vmul.f32 %v1121, %v1125
        %vm1127 = vweird.f32 %v1120
        %vm1128 = vweird.f32 %v1121
        %vm1129 = vmor %vm1127, %vm1128
        %v1130 = vsel %vm1129, %v1121, %v1126
        %v1131 = vmul.f32 %v1114, %v1130
        %v1132 = vld [vmem:[%s9] sm:$0x1]
        %v1134 = vperm.slane %v1132, 0
        %v1136 = vmul.f32 %v1131, %v1134
        %v1137 = vld [vmem:[%s10] sm:$0x1]
        %v1139 = vperm.slane %v1137, 0
        %v1141 = vadd.f32 %v1136, %v1139
        %v1142 = vpack.c.bf16 %v1141, %v1141
        %v1143 = vld [vmem:[#allocation11] sm:$0xf]
        %v1144 = vld [vmem:[#allocation11 + $0x4] sm:$0xf]
        %v1145 = vld [vmem:[#allocation11 + $0x8] sm:$0xf]
        %v1146 = vld [vmem:[#allocation11 + $0xc] sm:$0xf]
        %v1147 = vld [vmem:[%s12] sm:$0x1]
        %v1149 = vperm.slane %v1147, 0
        %v1155 = vunpack.c.l.b16 %v1143
        %v1156 = vunpack.c.l.b16 %v1144
        %v1157 = vunpack.c.l.b16 %v1145
        %v1158 = vunpack.c.l.b16 %v1146
        %v1159 = vpack.c.b16 %v1156, %v1155
        %v1160 = vpack.c.b16 %v1158, %v1157
        %v1164 = vsel %vm761, %v1142, 0
        %1166 = vmatpush.bf16.msra.mxu0 0
        %1167 = vmatpush.bf16.msra.mxu0 0
        %1168 = vmatpush.bf16.msra.mxu0 0
        %1169 = vmatpush.bf16.msra.mxu0 0
        %1170 = vmatpush.bf16.msra.mxu0 0
        %1171 = vmatpush.bf16.msra.mxu0 0
        %1172 = vmatpush.bf16.msra.mxu0 %v1160
        %1173 = vmatpush.bf16.msra.mxu0 %v1159
        %1174 = vmatmul.bf16.gmra.mxu0 %v1164
        %v1175 = vpop.f32.mrf.mxu0
        %v1176 = vadd.f32 %v1149, %v1175
        %v1177 = vpop.f32.mrf.mxu0
        %1178 = vdwg.mxu0
        %v1179 = vmax.f32 %v1176, 0.0
        %v1180 = vpack.c.bf16 %v1179, %v1179
        %v1181 = vld [vmem:[%s13] sm:$0xf]
        %v1182 = vld [vmem:[%s13 + $0x4] sm:$0xf]
        %v1183 = vld [vmem:[%s13 + $0x8] sm:$0xf]
        %v1184 = vld [vmem:[%s13 + $0xc] sm:$0xf]
        %v1185 = vld [vmem:[%s13 + $0x10] sm:$0xf]
        %v1186 = vld [vmem:[%s13 + $0x14] sm:$0xf]
        %v1187 = vld [vmem:[%s13 + $0x18] sm:$0xf]
        %v1188 = vld [vmem:[%s13 + $0x1c] sm:$0xf]
        %v1189 = vld [vmem:[%s14] sm:$0x1]
        %v1191 = vperm.slane %v1189, 0
        %v1201 = vunpack.c.l.b16 %v1181
        %v1202 = vunpack.c.l.b16 %v1182
        %v1203 = vunpack.c.l.b16 %v1183
        %v1204 = vunpack.c.l.b16 %v1184
        %v1205 = vunpack.c.l.b16 %v1185
        %v1206 = vunpack.c.l.b16 %v1186
        %v1207 = vunpack.c.l.b16 %v1187
        %v1208 = vunpack.c.l.b16 %v1188
        %v1209 = vpack.c.b16 %v1202, %v1201
        %v1210 = vpack.c.b16 %v1204, %v1203
        %v1211 = vpack.c.b16 %v1206, %v1205
        %v1212 = vpack.c.b16 %v1208, %v1207
        %vm1217 = vcmask 523264
        %v1219 = vsel %vm1217, %v1180, 0
        %1221 = vmatpush.bf16.msra.mxu0 0
        %1222 = vmatpush.bf16.msra.mxu0 0
        %1223 = vmatpush.bf16.msra.mxu0 0
        %1224 = vmatpush.bf16.msra.mxu0 0
        %1225 = vmatpush.bf16.msra.mxu0 %v1212
        %1226 = vmatpush.bf16.msra.mxu0 %v1211
        %1227 = vmatpush.bf16.msra.mxu0 %v1210
        %1228 = vmatpush.bf16.msra.mxu0 %v1209
        %1229 = vmatmul.bf16.gmra.mxu0 %v1219
        %v1230 = vpop.f32.mrf.mxu0
        %v1231 = vadd.f32 %v1191, %v1230
        %v1232 = vpop.f32.mrf.mxu0
        %1233 = vdwg.mxu0
        %v1234 = vadd.f32 %v1141, %v1231
        %v1235 = vsel %vm761, %v1234, 0.0
        %1236 = vadd.xlane.f32.xlu0 %v1235
        %v1237 = vpop.xlane.xlu0 %1236
        %v1238 = vmul.f32 %v1237, %v1112
        %v1239 = vsub.f32 %v1234, %v1238
        %v1240 = vmul.f32 %v1239, %v1239
        %v1241 = vsel %vm761, %v1240, 0.0
        %1242 = vadd.xlane.f32.xlu0 %v1241
        %v1243 = vpop.xlane.xlu0 %1242
        %v1244 = vmul.f32 %v1243, %v1112
        %v1245 = vadd.f32 %v1244, 1e-05
        %v1246 = vrsqrt.pop %v1245
        %v1247 = vmul.f32 %v1246, %v1245
        %v1248 = vmul.f32 %v1247, %v1246
        %v1249 = vmul.f32 0.5, %v1248
        %v1250 = vsub.f32 1.5, %v1249
        %v1251 = vmul.f32 %v1246, %v1250
        %vm1252 = vweird.f32 %v1245
        %vm1253 = vweird.f32 %v1246
        %vm1254 = vmor %vm1252, %vm1253
        %v1255 = vsel %vm1254, %v1246, %v1251
        %v1256 = vmul.f32 %v1239, %v1255
        %v1257 = vld [vmem:[%s15] sm:$0x1]
        %v1259 = vperm.slane %v1257, 0
        %v1261 = vmul.f32 %v1256, %v1259
        %v1262 = vld [vmem:[%s16] sm:$0x1]
        %v1264 = vperm.slane %v1262, 0
        %v1266 = vadd.f32 %v1261, %v1264
        %1267 = vst.msk [vmem:[%s682] sm:$0xff] %vm761, %v1266
        %s1268 = sand.u32 %s434, 1
        %s1269 = scalar_lea.sflag [#allocation5], %s1268
        %s1270 = sand.u32 %s434, 1
        %s1271 = smul.addr %s1270, 8
        %s1272 = scalar_lea.vmem [#allocation12], %s1271
        // Predicated region
        $region113: #{tpu_custom_call.1} parent=87 // pred_check
          %p1273 = pneg %p444
        $region114: #{tpu_custom_call.1} parent=87 // pred_check_branch
          %1275 = sbr.rel (%p1273) target = $region116
        $region115: #{tpu_custom_call.1} parent=87 // pred_region
          %1277 = vsyncadd %s1269, 0
          %s1278 = smul.addr %s42, 2
          %s1279 = sadd.s32 %s43, %s1278
          %s1280 = smul.addr %s1279, 8
          %s1281 = scalar_lea.hbm %s17, %s1280
          %s1283 = sshll.u32 %s1272, 4
          %s1284 = int_to_ptr.vmem [resolvable:$true] %s1283
          %s1285 = sshll.u32 %s1281, 4
          %s1286 = int_to_ptr.hbm [resolvable:$true] %s1285
          %1288 = dma.vmem_to_hbm [thread:$0]  %s1284, 128, %s1286, %s1269
        $region116: #{tpu_custom_call.1} parent=87 // pred_fallthru
          _
      $region88: #{tpu_custom_call.1} parent=5 // pred_fallthru
        _
      %p1289 = scmp.le.s32.totalorder 2, %s33
      // Predicated region
      $region117: #{tpu_custom_call.1} parent=5 // pred_check
        %p1290 = pneg %p1289
      $region118: #{tpu_custom_call.1} parent=5 // pred_check_branch
        %1292 = sbr.rel (%p1290) target = $region120
      $region119: #{tpu_custom_call.1} parent=5 // pred_region
        %s1293 = ssub.s32 %s33, 2
        // Predicated region
        $region121: #{tpu_custom_call.1} parent=119 // pred_check
          %p1294 = pneg %p450
        $region122: #{tpu_custom_call.1} parent=119 // pred_check_branch
          %1296 = sbr.rel (%p1294) target = $region124
        $region123: #{tpu_custom_call.1} parent=119 // pred_region
          %s1297 = sand.u32 %s435, 1
          %s1298 = scalar_lea.sflag [#allocation5], %s1297
          %s1299 = sand.u32 %s435, 1
          %s1300 = smul.addr %s1299, 8
          %s1301 = scalar_lea.vmem [#allocation12], %s1300
          %1303 = dma.done %s1298, 128
        $region124: #{tpu_custom_call.1} parent=119 // pred_fallthru
          _
      $region120: #{tpu_custom_call.1} parent=5 // pred_fallthru
        _
    $region6: #{tpu_custom_call.1} parent=1 // loop_footer
      %s37 = sadd.s32 1, %s33
    $region7: #{tpu_custom_call.1} parent=1 // loop_footer_branch
      %32 = sbr.rel target = $region3
    $region8: #{tpu_custom_call.1} parent=1 // loop_exit
      _
    %1304 = vsyncpa [#allocation4], 1
    %s1305 = scalar_lea.sflag [#allocation4], 1
    %1306 = vsyncpa %s1305, 1
    %1307 = vsyncpa [#allocation7], 1
    %s1308 = scalar_lea.sflag [#allocation7], 1
    %1309 = vsyncpa %s1308, 1
    %1310 = vsyncpa [#allocation10], 1
    %1311 = vsyncpa [#allocation5], 1
    %s1312 = scalar_lea.sflag [#allocation5], 1
    %1313 = vsyncpa %s1312, 1

// kernel: tpu_custom_call.1
$region0: #{tpu_custom_call.1}
  #allocation0 [shape = 'u32[]', space=smem, size = 0x4, offset = 0x4, fixed_abs, tag = 'smem constant byte address 0x4 - core index']
  #allocation1 [shape = 'u32[72,128]{1,0:T(1,128)}', space=vmem, size = 0x9000, scoped, tag = 'internal scratch']
  #allocation2 [shape = 'bf16[16,64]{1,0:T(8,128)(2,1)}', space=vmem, size = 0x1000, scoped, tag = 'scratch operand']
  %s0 = inlined_call_operand.vmem [shape: f32[2,16,32], index: 0, kind: input, shape index: {}]
  %s1 = inlined_call_operand.hbm [shape: f32[2,16,32], index: 1, kind: input, shape index: {}]
  %s2 = inlined_call_operand.hbm [shape: f32[2,1,16], index: 2, kind: input, shape index: {}]
  %s3 = inlined_call_operand.vmem [shape: bf16[32,32], index: 3, kind: input, shape index: {}]
  %s4 = inlined_call_operand.vmem [shape: f32[1,32], index: 4, kind: input, shape index: {}]
  %s5 = inlined_call_operand.hbm [shape: bf16[32,64], index: 5, kind: input, shape index: {}]
  %s6 = inlined_call_operand.vmem [shape: f32[1,64], index: 6, kind: input, shape index: {}]
  %s7 = inlined_call_operand.hbm [shape: bf16[32,32], index: 7, kind: input, shape index: {}]
  %s8 = inlined_call_operand.vmem [shape: f32[1,32], index: 8, kind: input, shape index: {}]
  %s9 = inlined_call_operand.vmem [shape: f32[1,32], index: 9, kind: input, shape index: {}]
  %s10 = inlined_call_operand.vmem [shape: f32[1,32], index: 10, kind: input, shape index: {}]
  %s11 = inlined_call_operand.hbm [shape: bf16[32,64], index: 11, kind: input, shape index: {}]
  %s12 = inlined_call_operand.vmem [shape: f32[1,64], index: 12, kind: input, shape index: {}]
  %s13 = inlined_call_operand.vmem [shape: bf16[64,32], index: 13, kind: input, shape index: {}]
  %s14 = inlined_call_operand.vmem [shape: f32[1,32], index: 14, kind: input, shape index: {}]
  %s15 = inlined_call_operand.vmem [shape: f32[1,32], index: 15, kind: input, shape index: {}]
  %s16 = inlined_call_operand.vmem [shape: f32[1,32], index: 16, kind: input, shape index: {}]
  %s17 = inlined_call_operand.hbm [shape: f32[2,16,32], index: 17, kind: output, shape index: {}]
  %s18 = sld [smem:[#allocation0]]
  $region125: #{tpu_custom_call.1} parent=0
    _
  %s20 = ssub.s32 1, %s18
  %s21 = scalar_select 0, %s20, %s18
  $region1: #{tpu_custom_call.1} parent=0
    #allocation3 [shape = 'u8[8192]{0}', space=vmem, size = 0x2000, scoped, tag = 'input window, operand 1']
    #allocation4 [shape = 's32[2]{0}', space=sflag, size = 0x8, scoped, tag = 'scoped memory for tpu_custom_call.1']
    #allocation5 [shape = 's32[2]{0}', space=sflag, size = 0x8, scoped, tag = 'scoped memory for tpu_custom_call.1']
    #allocation6 [shape = 'u8[1024]{0}', space=vmem, size = 0x400, scoped, tag = 'input window, operand 2']
    #allocation7 [shape = 's32[2]{0}', space=sflag, size = 0x8, scoped, tag = 'scoped memory for tpu_custom_call.1']
    #allocation8 [shape = 'u8[8192]{0}', space=vmem, size = 0x2000, scoped, tag = 'input window, operand 5, single buffered']
    #allocation9 [shape = 'u8[8192]{0}', space=vmem, size = 0x2000, scoped, tag = 'input window, operand 7, single buffered']
    #allocation10 [shape = 's32[1]{0}', space=sflag, size = 0x4, scoped, tag = 'scoped memory for tpu_custom_call.1']
    #allocation11 [shape = 'u8[8192]{0}', space=vmem, size = 0x2000, scoped, tag = 'input window, operand 11, single buffered']
    #allocation12 [shape = 'u8[8192]{0}', space=vmem, size = 0x2000, scoped, tag = 'output window, operand 0']
    %22 = vsyncpa [#allocation4], 0
    %s23 = scalar_lea.sflag [#allocation4], 1
    %24 = vsyncpa %s23, 0
    %25 = vsyncpa [#allocation7], 0
    %s26 = scalar_lea.sflag [#allocation7], 1
    %27 = vsyncpa %s26, 0
    %28 = vsyncpa [#allocation10], 0
    %29 = vsyncpa [#allocation5], 0
    %s30 = scalar_lea.sflag [#allocation5], 1
    %31 = vsyncpa %s30, 0
    loop: start=0, step=1, limit=6
    $region2: #{tpu_custom_call.1} parent=1 // loop_pre_header
      _
    $region3: #{tpu_custom_call.1} parent=1 // loop_header
      %s33 = sphi 0, %s37
      %p34 = scmp.ge.s32.totalorder %s33, 6
      %s40 = sphi 0, %s52
      %s41 = sphi 0, %s48
      %s42 = sphi 0, %s40
      %s43 = sphi 0, %s41
      %s44 = sphi 0, %s42
      %s45 = sphi 0, %s43
      %s55 = sphi 0, %s57
      %s58 = sphi 0, %s55
      %s59 = sphi 0, %s58
      %s75 = sphi 0, %s59
      %s83 = sphi 0, %s85
      %s86 = sphi 0, %s83
      %s87 = sphi 0, %s86
      %s103 = sphi 0, %s87
      %s109 = sphi 0, %s111
      %s112 = sphi 0, %s109
      %s113 = sphi 0, %s112
      %s129 = sphi 0, %s113
      %s133 = sphi 0, %s133
      %s135 = sphi 0, %s133
      %s136 = sphi 0, %s135
      %s150 = sphi 0, %s136
      %s154 = sphi 0, %s154
      %s156 = sphi 0, %s154
      %s157 = sphi 0, %s156
      %s171 = sphi 0, %s157
      %s175 = sphi 0, %s175
      %s177 = sphi 0, %s175
      %s178 = sphi 0, %s177
      %s192 = sphi 0, %s178
      %s196 = sphi 0, %s196
      %s198 = sphi 0, %s196
      %s199 = sphi 0, %s198
      %s213 = sphi 0, %s199
      %s217 = sphi 0, %s217
      %s219 = sphi 0, %s217
      %s220 = sphi 0, %s219
      %s234 = sphi 0, %s220
      %s238 = sphi 0, %s238
      %s240 = sphi 0, %s238
      %s241 = sphi 0, %s240
      %s255 = sphi 0, %s241
      %s259 = sphi 0, %s259
      %s261 = sphi 0, %s259
      %s262 = sphi 0, %s261
      %s276 = sphi 0, %s262
      %s280 = sphi 0, %s280
      %s282 = sphi 0, %s280
      %s283 = sphi 0, %s282
      %s297 = sphi 0, %s283
      %s301 = sphi 0, %s301
      %s303 = sphi 0, %s301
      %s304 = sphi 0, %s303
      %s318 = sphi 0, %s304
      %s322 = sphi 0, %s322
      %s324 = sphi 0, %s322
      %s325 = sphi 0, %s324
      %s339 = sphi 0, %s325
      %s343 = sphi 0, %s343
      %s345 = sphi 0, %s343
      %s346 = sphi 0, %s345
      %s360 = sphi 0, %s346
      %s364 = sphi 0, %s364
      %s366 = sphi 0, %s364
      %s367 = sphi 0, %s366
      %s381 = sphi 0, %s367
      %s385 = sphi 0, %s385
      %s387 = sphi 0, %s385
      %s388 = sphi 0, %s387
      %s402 = sphi 0, %s388
      %s406 = sphi 0, %s406
      %s408 = sphi 0, %s406
      %s409 = sphi 0, %s408
      %s423 = sphi 0, %s409
      %s431 = sphi 0, %s433
      %s434 = sphi 0, %s431
      %s435 = sphi 0, %s434
      %s451 = sphi 0, %s435
    $region4: #{tpu_custom_call.1} parent=1 // loop_header_branch
      %36 = sbr.rel (%p34) target = $region8
    $region5: #{tpu_custom_call.1} parent=1 // loop_body
      %s38 = ssub.s32 %s33, 1
      %s39 = ssub.s32 %s33, 2
      %s46 = sadd.s32 1, %s41
      %p47 = scmp.ge.s32.totalorder %s46, 2
      %s48 = scalar_select %p47, 0, %s46
      %s49 = sadd.s32 1, %s40
      %s50 = scalar_select %p47, %s49, %s40
      %p51 = scmp.ge.s32.totalorder %s50, 2
      %s52 = scalar_select %p51, 0, %s50
      %s53 = ssub.s32 %s40, %s52
      %p54 = scmp.eq.s32.totalorder %s53, 0
      %s56 = sadd.s32 %s55, 1
      %s57 = scalar_select %p54, %s55, %s56
      %p60 = pneg %p54
      %p61 = scmp.eq.s32.totalorder %s33, 3
      %p62 = por %p60, %p61
      %p63 = scmp.ne.s32.totalorder %s55, %s58
      %p64 = scmp.eq.s32.totalorder %s33, 0
      %p65 = por %p63, %p64
      %p66 = scmp.ne.s32.totalorder %s55, %s58
      %p67 = scmp.eq.s32.totalorder %s38, 3
      %p68 = por %p66, %p67
      %p69 = scmp.ne.s32.totalorder %s58, %s59
      %p70 = scmp.eq.s32.totalorder %s38, 0
      %p71 = por %p69, %p70
      %p72 = scmp.ne.s32.totalorder %s58, %s59
      %p73 = scmp.eq.s32.totalorder %s39, 3
      %p74 = por %p72, %p73
      %p76 = scmp.ne.s32.totalorder %s59, %s75
      %p77 = scmp.eq.s32.totalorder %s39, 0
      %p78 = por %p76, %p77
      %s79 = ssub.s32 %s40, %s52
      %s80 = ssub.s32 %s41, %s48
      %s81 = sor.u32 %s79, %s80
      %p82 = scmp.eq.s32.totalorder %s81, 0
      %s84 = sadd.s32 %s83, 1
      %s85 = scalar_select %p82, %s83, %s84
      %p88 = pneg %p82
      %p89 = scmp.eq.s32.totalorder %s33, 3
      %p90 = por %p88, %p89
      %p91 = scmp.ne.s32.totalorder %s83, %s86
      %p92 = scmp.eq.s32.totalorder %s33, 0
      %p93 = por %p91, %p92
      %p94 = scmp.ne.s32.totalorder %s83, %s86
      %p95 = scmp.eq.s32.totalorder %s38, 3
      %p96 = por %p94, %p95
      %p97 = scmp.ne.s32.totalorder %s86, %s87
      %p98 = scmp.eq.s32.totalorder %s38, 0
      %p99 = por %p97, %p98
      %p100 = scmp.ne.s32.totalorder %s86, %s87
      %p101 = scmp.eq.s32.totalorder %s39, 3
      %p102 = por %p100, %p101
      %p104 = scmp.ne.s32.totalorder %s87, %s103
      %p105 = scmp.eq.s32.totalorder %s39, 0
      %p106 = por %p104, %p105
      %s107 = ssub.s32 %s40, %s52
      %p108 = scmp.eq.s32.totalorder %s107, 0
      %s110 = sadd.s32 %s109, 1
      %s111 = scalar_select %p108, %s109, %s110
      %p114 = pneg %p108
      %p115 = scmp.eq.s32.totalorder %s33, 3
      %p116 = por %p114, %p115
      %p117 = scmp.ne.s32.totalorder %s109, %s112
      %p118 = scmp.eq.s32.totalorder %s33, 0
      %p119 = por %p117, %p118
      %p120 = scmp.ne.s32.totalorder %s109, %s112
      %p121 = scmp.eq.s32.totalorder %s38, 3
      %p122 = por %p120, %p121
      %p123 = scmp.ne.s32.totalorder %s112, %s113
      %p124 = scmp.eq.s32.totalorder %s38, 0
      %p125 = por %p123, %p124
      %p126 = scmp.ne.s32.totalorder %s112, %s113
      %p127 = scmp.eq.s32.totalorder %s39, 3
      %p128 = por %p126, %p127
      %p130 = scmp.ne.s32.totalorder %s113, %s129
      %p131 = scmp.eq.s32.totalorder %s39, 0
      %p132 = por %p130, %p131
      %s134 = sadd.s32 %s133, 1
      %p137 = scmp.eq.s32.totalorder %s33, 3
      %p138 = scmp.ne.s32.totalorder %s133, %s135
      %p139 = scmp.eq.s32.totalorder %s33, 0
      %p140 = por %p138, %p139
      %p141 = scmp.ne.s32.totalorder %s133, %s135
      %p142 = scmp.eq.s32.totalorder %s38, 3
      %p143 = por %p141, %p142
      %p144 = scmp.ne.s32.totalorder %s135, %s136
      %p145 = scmp.eq.s32.totalorder %s38, 0
      %p146 = por %p144, %p145
      %p147 = scmp.ne.s32.totalorder %s135, %s136
      %p148 = scmp.eq.s32.totalorder %s39, 3
      %p149 = por %p147, %p148
      %p151 = scmp.ne.s32.totalorder %s136, %s150
      %p152 = scmp.eq.s32.totalorder %s39, 0
      %p153 = por %p151, %p152
      %s155 = sadd.s32 %s154, 1
      %p158 = scmp.eq.s32.totalorder %s33, 3
      %p159 = scmp.ne.s32.totalorder %s154, %s156
      %p160 = scmp.eq.s32.totalorder %s33, 0
      %p161 = por %p159, %p160
      %p162 = scmp.ne.s32.totalorder %s154, %s156
      %p163 = scmp.eq.s32.totalorder %s38, 3
      %p164 = por %p162, %p163
      %p165 = scmp.ne.s32.totalorder %s156, %s157
      %p166 = scmp.eq.s32.totalorder %s38, 0
      %p167 = por %p165, %p166
      %p168 = scmp.ne.s32.totalorder %s156, %s157
      %p169 = scmp.eq.s32.totalorder %s39, 3
      %p170 = por %p168, %p169
      %p172 = scmp.ne.s32.totalorder %s157, %s171
      %p173 = scmp.eq.s32.totalorder %s39, 0
      %p174 = por %p172, %p173
      %s176 = sadd.s32 %s175, 1
      %p179 = scmp.eq.s32.totalorder %s33, 3
      %p180 = scmp.ne.s32.totalorder %s175, %s177
      %p181 = scmp.eq.s32.totalorder %s33, 0
      %p182 = por %p180, %p181
      %p183 = scmp.ne.s32.totalorder %s175, %s177
      %p184 = scmp.eq.s32.totalorder %s38, 3
      %p185 = por %p183, %p184
      %p186 = scmp.ne.s32.totalorder %s177, %s178
      %p187 = scmp.eq.s32.totalorder %s38, 0
      %p188 = por %p186, %p187
      %p189 = scmp.ne.s32.totalorder %s177, %s178
      %p190 = scmp.eq.s32.totalorder %s39, 3
      %p191 = por %p189, %p190
      %p193 = scmp.ne.s32.totalorder %s178, %s192
      %p194 = scmp.eq.s32.totalorder %s39, 0
      %p195 = por %p193, %p194
      %s197 = sadd.s32 %s196, 1
      %p200 = scmp.eq.s32.totalorder %s33, 3
      %p201 = scmp.ne.s32.totalorder %s196, %s198
      %p202 = scmp.eq.s32.totalorder %s33, 0
      %p203 = por %p201, %p202
      %p204 = scmp.ne.s32.totalorder %s196, %s198
      %p205 = scmp.eq.s32.totalorder %s38, 3
      %p206 = por %p204, %p205
      %p207 = scmp.ne.s32.totalorder %s198, %s199
      %p208 = scmp.eq.s32.totalorder %s38, 0
      %p209 = por %p207, %p208
      %p210 = scmp.ne.s32.totalorder %s198, %s199
      %p211 = scmp.eq.s32.totalorder %s39, 3
      %p212 = por %p210, %p211
      %p214 = scmp.ne.s32.totalorder %s199, %s213
      %p215 = scmp.eq.s32.totalorder %s39, 0
      %p216 = por %p214, %p215
      %s218 = sadd.s32 %s217, 1
      %p221 = scmp.eq.s32.totalorder %s33, 3
      %p222 = scmp.ne.s32.totalorder %s217, %s219
      %p223 = scmp.eq.s32.totalorder %s33, 0
      %p224 = por %p222, %p223
      %p225 = scmp.ne.s32.totalorder %s217, %s219
      %p226 = scmp.eq.s32.totalorder %s38, 3
      %p227 = por %p225, %p226
      %p228 = scmp.ne.s32.totalorder %s219, %s220
      %p229 = scmp.eq.s32.totalorder %s38, 0
      %p230 = por %p228, %p229
      %p231 = scmp.ne.s32.totalorder %s219, %s220
      %p232 = scmp.eq.s32.totalorder %s39, 3
      %p233 = por %p231, %p232
      %p235 = scmp.ne.s32.totalorder %s220, %s234
      %p236 = scmp.eq.s32.totalorder %s39, 0
      %p237 = por %p235, %p236
      %s239 = sadd.s32 %s238, 1
      %p242 = scmp.eq.s32.totalorder %s33, 3
      %p243 = scmp.ne.s32.totalorder %s238, %s240
      %p244 = scmp.eq.s32.totalorder %s33, 0
      %p245 = por %p243, %p244
      %p246 = scmp.ne.s32.totalorder %s238, %s240
      %p247 = scmp.eq.s32.totalorder %s38, 3
      %p248 = por %p246, %p247
      %p249 = scmp.ne.s32.totalorder %s240, %s241
      %p250 = scmp.eq.s32.totalorder %s38, 0
      %p251 = por %p249, %p250
      %p252 = scmp.ne.s32.totalorder %s240, %s241
      %p253 = scmp.eq.s32.totalorder %s39, 3
      %p254 = por %p252, %p253
      %p256 = scmp.ne.s32.totalorder %s241, %s255
      %p257 = scmp.eq.s32.totalorder %s39, 0
      %p258 = por %p256, %p257
      %s260 = sadd.s32 %s259, 1
      %p263 = scmp.eq.s32.totalorder %s33, 3
      %p264 = scmp.ne.s32.totalorder %s259, %s261
      %p265 = scmp.eq.s32.totalorder %s33, 0
      %p266 = por %p264, %p265
      %p267 = scmp.ne.s32.totalorder %s259, %s261
      %p268 = scmp.eq.s32.totalorder %s38, 3
      %p269 = por %p267, %p268
      %p270 = scmp.ne.s32.totalorder %s261, %s262
      %p271 = scmp.eq.s32.totalorder %s38, 0
      %p272 = por %p270, %p271
      %p273 = scmp.ne.s32.totalorder %s261, %s262
      %p274 = scmp.eq.s32.totalorder %s39, 3
      %p275 = por %p273, %p274
      %p277 = scmp.ne.s32.totalorder %s262, %s276
      %p278 = scmp.eq.s32.totalorder %s39, 0
      %p279 = por %p277, %p278
      %s281 = sadd.s32 %s280, 1
      %p284 = scmp.eq.s32.totalorder %s33, 3
      %p285 = scmp.ne.s32.totalorder %s280, %s282
      %p286 = scmp.eq.s32.totalorder %s33, 0
      %p287 = por %p285, %p286
      %p288 = scmp.ne.s32.totalorder %s280, %s282
      %p289 = scmp.eq.s32.totalorder %s38, 3
      %p290 = por %p288, %p289
      %p291 = scmp.ne.s32.totalorder %s282, %s283
      %p292 = scmp.eq.s32.totalorder %s38, 0
      %p293 = por %p291, %p292
      %p294 = scmp.ne.s32.totalorder %s282, %s283
      %p295 = scmp.eq.s32.totalorder %s39, 3
      %p296 = por %p294, %p295
      %p298 = scmp.ne.s32.totalorder %s283, %s297
      %p299 = scmp.eq.s32.totalorder %s39, 0
      %p300 = por %p298, %p299
      %s302 = sadd.s32 %s301, 1
      %p305 = scmp.eq.s32.totalorder %s33, 3
      %p306 = scmp.ne.s32.totalorder %s301, %s303
      %p307 = scmp.eq.s32.totalorder %s33, 0
      %p308 = por %p306, %p307
      %p309 = scmp.ne.s32.totalorder %s301, %s303
      %p310 = scmp.eq.s32.totalorder %s38, 3
      %p311 = por %p309, %p310
      %p312 = scmp.ne.s32.totalorder %s303, %s304
      %p313 = scmp.eq.s32.totalorder %s38, 0
      %p314 = por %p312, %p313
      %p315 = scmp.ne.s32.totalorder %s303, %s304
      %p316 = scmp.eq.s32.totalorder %s39, 3
      %p317 = por %p315, %p316
      %p319 = scmp.ne.s32.totalorder %s304, %s318
      %p320 = scmp.eq.s32.totalorder %s39, 0
      %p321 = por %p319, %p320
      %s323 = sadd.s32 %s322, 1
      %p326 = scmp.eq.s32.totalorder %s33, 3
      %p327 = scmp.ne.s32.totalorder %s322, %s324
      %p328 = scmp.eq.s32.totalorder %s33, 0
      %p329 = por %p327, %p328
      %p330 = scmp.ne.s32.totalorder %s322, %s324
      %p331 = scmp.eq.s32.totalorder %s38, 3
      %p332 = por %p330, %p331
      %p333 = scmp.ne.s32.totalorder %s324, %s325
      %p334 = scmp.eq.s32.totalorder %s38, 0
      %p335 = por %p333, %p334
      %p336 = scmp.ne.s32.totalorder %s324, %s325
      %p337 = scmp.eq.s32.totalorder %s39, 3
      %p338 = por %p336, %p337
      %p340 = scmp.ne.s32.totalorder %s325, %s339
      %p341 = scmp.eq.s32.totalorder %s39, 0
      %p342 = por %p340, %p341
      %s344 = sadd.s32 %s343, 1
      %p347 = scmp.eq.s32.totalorder %s33, 3
      %p348 = scmp.ne.s32.totalorder %s343, %s345
      %p349 = scmp.eq.s32.totalorder %s33, 0
      %p350 = por %p348, %p349
      %p351 = scmp.ne.s32.totalorder %s343, %s345
      %p352 = scmp.eq.s32.totalorder %s38, 3
      %p353 = por %p351, %p352
      %p354 = scmp.ne.s32.totalorder %s345, %s346
      %p355 = scmp.eq.s32.totalorder %s38, 0
      %p356 = por %p354, %p355
      %p357 = scmp.ne.s32.totalorder %s345, %s346
      %p358 = scmp.eq.s32.totalorder %s39, 3
      %p359 = por %p357, %p358
      %p361 = scmp.ne.s32.totalorder %s346, %s360
      %p362 = scmp.eq.s32.totalorder %s39, 0
      %p363 = por %p361, %p362
      %s365 = sadd.s32 %s364, 1
      %p368 = scmp.eq.s32.totalorder %s33, 3
      %p369 = scmp.ne.s32.totalorder %s364, %s366
      %p370 = scmp.eq.s32.totalorder %s33, 0
      %p371 = por %p369, %p370
      %p372 = scmp.ne.s32.totalorder %s364, %s366
      %p373 = scmp.eq.s32.totalorder %s38, 3
      %p374 = por %p372, %p373
      %p375 = scmp.ne.s32.totalorder %s366, %s367
      %p376 = scmp.eq.s32.totalorder %s38, 0
      %p377 = por %p375, %p376
      %p378 = scmp.ne.s32.totalorder %s366, %s367
      %p379 = scmp.eq.s32.totalorder %s39, 3
      %p380 = por %p378, %p379
      %p382 = scmp.ne.s32.totalorder %s367, %s381
      %p383 = scmp.eq.s32.totalorder %s39, 0
      %p384 = por %p382, %p383
      %s386 = sadd.s32 %s385, 1
      %p389 = scmp.eq.s32.totalorder %s33, 3
      %p390 = scmp.ne.s32.totalorder %s385, %s387
      %p391 = scmp.eq.s32.totalorder %s33, 0
      %p392 = por %p390, %p391
      %p393 = scmp.ne.s32.totalorder %s385, %s387
      %p394 = scmp.eq.s32.totalorder %s38, 3
      %p395 = por %p393, %p394
      %p396 = scmp.ne.s32.totalorder %s387, %s388
      %p397 = scmp.eq.s32.totalorder %s38, 0
      %p398 = por %p396, %p397
      %p399 = scmp.ne.s32.totalorder %s387, %s388
      %p400 = scmp.eq.s32.totalorder %s39, 3
      %p401 = por %p399, %p400
      %p403 = scmp.ne.s32.totalorder %s388, %s402
      %p404 = scmp.eq.s32.totalorder %s39, 0
      %p405 = por %p403, %p404
      %s407 = sadd.s32 %s406, 1
      %p410 = scmp.eq.s32.totalorder %s33, 3
      %p411 = scmp.ne.s32.totalorder %s406, %s408
      %p412 = scmp.eq.s32.totalorder %s33, 0
      %p413 = por %p411, %p412
      %p414 = scmp.ne.s32.totalorder %s406, %s408
      %p415 = scmp.eq.s32.totalorder %s38, 3
      %p416 = por %p414, %p415
      %p417 = scmp.ne.s32.totalorder %s408, %s409
      %p418 = scmp.eq.s32.totalorder %s38, 0
      %p419 = por %p417, %p418
      %p420 = scmp.ne.s32.totalorder %s408, %s409
      %p421 = scmp.eq.s32.totalorder %s39, 3
      %p422 = por %p420, %p421
      %p424 = scmp.ne.s32.totalorder %s409, %s423
      %p425 = scmp.eq.s32.totalorder %s39, 0
      %p426 = por %p424, %p425
      %s427 = ssub.s32 %s40, %s52
      %s428 = ssub.s32 %s41, %s48
      %s429 = sor.u32 %s427, %s428
      %p430 = scmp.eq.s32.totalorder %s429, 0
      %s432 = sadd.s32 %s431, 1
      %s433 = scalar_select %p430, %s431, %s432
      %p436 = pneg %p430
      %p437 = scmp.eq.s32.totalorder %s33, 3
      %p438 = por %p436, %p437
      %p439 = scmp.ne.s32.totalorder %s431, %s434
      %p440 = scmp.eq.s32.totalorder %s33, 0
      %p441 = por %p439, %p440
      %p442 = scmp.ne.s32.totalorder %s431, %s434
      %p443 = scmp.eq.s32.totalorder %s38, 3
      %p444 = por %p442, %p443
      %p445 = scmp.ne.s32.totalorder %s434, %s435
      %p446 = scmp.eq.s32.totalorder %s38, 0
      %p447 = por %p445, %p446
      %p448 = scmp.ne.s32.totalorder %s434, %s435
      %p449 = scmp.eq.s32.totalorder %s39, 3
      %p450 = por %p448, %p449
      %p452 = scmp.ne.s32.totalorder %s435, %s451
      %p453 = scmp.eq.s32.totalorder %s39, 0
      %p454 = por %p452, %p453
      %p455 = scmp.le.s32.totalorder 1, %s33
      %p456 = scmp.lt.s32.totalorder %s33, 5
      %p457 = pnand %p455, %p456
      %p458 = pneg %p457
      // Predicated region
      $region9: #{tpu_custom_call.1} parent=5 // pred_check
        _
      $region10: #{tpu_custom_call.1} parent=5 // pred_check_branch
        %460 = sbr.rel (%p457) target = $region12
      $region11: #{tpu_custom_call.1} parent=5 // pred_region
        %s461 = ssub.s32 %s33, 1
        // Predicated region
        $region13: #{tpu_custom_call.1} parent=11 // pred_check
          %p462 = pneg %p146
        $region14: #{tpu_custom_call.1} parent=11 // pred_check_branch
          %464 = sbr.rel (%p462) target = $region16
        $region15: #{tpu_custom_call.1} parent=11 // pred_region
          _
        $region16: #{tpu_custom_call.1} parent=11 // pred_fallthru
          _
        // Predicated region
        $region17: #{tpu_custom_call.1} parent=11 // pred_check
          %p465 = pneg %p167
        $region18: #{tpu_custom_call.1} parent=11 // pred_check_branch
          %467 = sbr.rel (%p465) target = $region20
        $region19: #{tpu_custom_call.1} parent=11 // pred_region
          _
        $region20: #{tpu_custom_call.1} parent=11 // pred_fallthru
          _
        // Predicated region
        $region21: #{tpu_custom_call.1} parent=11 // pred_check
          %p468 = pneg %p188
        $region22: #{tpu_custom_call.1} parent=11 // pred_check_branch
          %470 = sbr.rel (%p468) target = $region24
        $region23: #{tpu_custom_call.1} parent=11 // pred_region
          %472 = vsyncadd [#allocation7], 0
          %s473 = sshll.u32 %s5, 4
          %s474 = int_to_ptr.hbm [resolvable:$true] %s473
          %s475 = sshll.u32 [#allocation8], 4
          %s476 = int_to_ptr.vmem [resolvable:$true] %s475
          %481 = dma.hbm_to_vmem [thread:$0]  %s474, 256, %s476, [#allocation7], 64, 64, 4
        $region24: #{tpu_custom_call.1} parent=11 // pred_fallthru
          _
        // Predicated region
        $region25: #{tpu_custom_call.1} parent=11 // pred_check
          %p482 = pneg %p209
        $region26: #{tpu_custom_call.1} parent=11 // pred_check_branch
          %484 = sbr.rel (%p482) target = $region28
        $region27: #{tpu_custom_call.1} parent=11 // pred_region
          _
        $region28: #{tpu_custom_call.1} parent=11 // pred_fallthru
          _
        // Predicated region
        $region29: #{tpu_custom_call.1} parent=11 // pred_check
          %p485 = pneg %p230
        $region30: #{tpu_custom_call.1} parent=11 // pred_check_branch
          %487 = sbr.rel (%p485) target = $region32
        $region31: #{tpu_custom_call.1} parent=11 // pred_region
          %489 = vsyncadd [#allocation10], 0
          %s490 = sshll.u32 %s7, 4
          %s491 = int_to_ptr.hbm [resolvable:$true] %s490
          %s492 = sshll.u32 [#allocation9], 4
          %s493 = int_to_ptr.vmem [resolvable:$true] %s492
          %498 = dma.hbm_to_vmem [thread:$0]  %s491, 256, %s493, [#allocation10], 64, 64, 4
        $region32: #{tpu_custom_call.1} parent=11 // pred_fallthru
          _
        // Predicated region
        $region33: #{tpu_custom_call.1} parent=11 // pred_check
          %p499 = pneg %p251
        $region34: #{tpu_custom_call.1} parent=11 // pred_check_branch
          %501 = sbr.rel (%p499) target = $region36
        $region35: #{tpu_custom_call.1} parent=11 // pred_region
          _
        $region36: #{tpu_custom_call.1} parent=11 // pred_fallthru
          _
        // Predicated region
        $region37: #{tpu_custom_call.1} parent=11 // pred_check
          %p502 = pneg %p272
        $region38: #{tpu_custom_call.1} parent=11 // pred_check_branch
          %504 = sbr.rel (%p502) target = $region40
        $region39: #{tpu_custom_call.1} parent=11 // pred_region
          _
        $region40: #{tpu_custom_call.1} parent=11 // pred_fallthru
          _
        // Predicated region
        $region41: #{tpu_custom_call.1} parent=11 // pred_check
          %p505 = pneg %p293
        $region42: #{tpu_custom_call.1} parent=11 // pred_check_branch
          %507 = sbr.rel (%p505) target = $region44
        $region43: #{tpu_custom_call.1} parent=11 // pred_region
          _
        $region44: #{tpu_custom_call.1} parent=11 // pred_fallthru
          _
        // Predicated region
        $region45: #{tpu_custom_call.1} parent=11 // pred_check
          %p508 = pneg %p314
        $region46: #{tpu_custom_call.1} parent=11 // pred_check_branch
          %510 = sbr.rel (%p508) target = $region48
        $region47: #{tpu_custom_call.1} parent=11 // pred_region
          %512 = vsyncadd [#allocation10], 0
          %s513 = sshll.u32 %s11, 4
          %s514 = int_to_ptr.hbm [resolvable:$true] %s513
          %s515 = sshll.u32 [#allocation11], 4
          %s516 = int_to_ptr.vmem [resolvable:$true] %s515
          %521 = dma.hbm_to_vmem [thread:$0]  %s514, 256, %s516, [#allocation10], 64, 64, 4
        $region48: #{tpu_custom_call.1} parent=11 // pred_fallthru
          _
        // Predicated region
        $region49: #{tpu_custom_call.1} parent=11 // pred_check
          %p522 = pneg %p335
        $region50: #{tpu_custom_call.1} parent=11 // pred_check_branch
          %524 = sbr.rel (%p522) target = $region52
        $region51: #{tpu_custom_call.1} parent=11 // pred_region
          _
        $region52: #{tpu_custom_call.1} parent=11 // pred_fallthru
          _
        // Predicated region
        $region53: #{tpu_custom_call.1} parent=11 // pred_check
          %p525 = pneg %p356
        $region54: #{tpu_custom_call.1} parent=11 // pred_check_branch
          %527 = sbr.rel (%p525) target = $region56
        $region55: #{tpu_custom_call.1} parent=11 // pred_region
          _
        $region56: #{tpu_custom_call.1} parent=11 // pred_fallthru
          _
        // Predicated region
        $region57: #{tpu_custom_call.1} parent=11 // pred_check
          %p528 = pneg %p377
        $region58: #{tpu_custom_call.1} parent=11 // pred_check_branch
          %530 = sbr.rel (%p528) target = $region60
        $region59: #{tpu_custom_call.1} parent=11 // pred_region
          _
        $region60: #{tpu_custom_call.1} parent=11 // pred_fallthru
          _
        // Predicated region
        $region61: #{tpu_custom_call.1} parent=11 // pred_check
          %p531 = pneg %p398
        $region62: #{tpu_custom_call.1} parent=11 // pred_check_branch
          %533 = sbr.rel (%p531) target = $region64
        $region63: #{tpu_custom_call.1} parent=11 // pred_region
          _
        $region64: #{tpu_custom_call.1} parent=11 // pred_fallthru
          _
        // Predicated region
        $region65: #{tpu_custom_call.1} parent=11 // pred_check
          %p534 = pneg %p419
        $region66: #{tpu_custom_call.1} parent=11 // pred_check_branch
          %536 = sbr.rel (%p534) target = $region68
        $region67: #{tpu_custom_call.1} parent=11 // pred_region
          _
        $region68: #{tpu_custom_call.1} parent=11 // pred_fallthru
          _
      $region12: #{tpu_custom_call.1} parent=5 // pred_fallthru
        _
      %p537 = scmp.lt.s32.totalorder %s33, 4
      // Predicated region
      $region69: #{tpu_custom_call.1} parent=5 // pred_check
        %p538 = pneg %p537
      $region70: #{tpu_custom_call.1} parent=5 // pred_check_branch
        %540 = sbr.rel (%p538) target = $region72
      $region71: #{tpu_custom_call.1} parent=5 // pred_region
        // Predicated region
        $region73: #{tpu_custom_call.1} parent=71 // pred_check
          %p541 = pneg %p65
        $region74: #{tpu_custom_call.1} parent=71 // pred_check_branch
          %543 = sbr.rel (%p541) target = $region76
        $region75: #{tpu_custom_call.1} parent=71 // pred_region
          %p544 = scmp.lt.s32.totalorder %s40, 1
          %s545 = scalar_select %p544, %s40, 1
          %s546 = smul.addr %s545, 2
          %s547 = smul.addr %s546, 8
          %s548 = scalar_lea.vmem %s0, %s547
        $region76: #{tpu_custom_call.1} parent=71 // pred_fallthru
          _
        // Predicated region
        $region77: #{tpu_custom_call.1} parent=71 // pred_check
          %p549 = pneg %p93
        $region78: #{tpu_custom_call.1} parent=71 // pred_check_branch
          %551 = sbr.rel (%p549) target = $region80
        $region79: #{tpu_custom_call.1} parent=71 // pred_region
          %s552 = sand.u32 %s83, 1
          %s553 = scalar_lea.sflag [#allocation4], %s552
          %s554 = sand.u32 %s83, 1
          %s555 = smul.addr %s554, 8
          %s556 = scalar_lea.vmem [#allocation3], %s555
          %558 = vsyncadd %s553, 0
          %s559 = smul.addr %s40, 2
          %s560 = sadd.s32 %s41, %s559
          %s561 = smul.addr %s560, 8
          %s562 = scalar_lea.hbm %s1, %s561
          %s564 = sshll.u32 %s562, 4
          %s565 = int_to_ptr.hbm [resolvable:$true] %s564
          %s566 = sshll.u32 %s556, 4
          %s567 = int_to_ptr.vmem [resolvable:$true] %s566
          %569 = dma.hbm_to_vmem [thread:$0]  %s565, 128, %s567, %s553
        $region80: #{tpu_custom_call.1} parent=71 // pred_fallthru
          _
        // Predicated region
        $region81: #{tpu_custom_call.1} parent=71 // pred_check
          %p570 = pneg %p119
        $region82: #{tpu_custom_call.1} parent=71 // pred_check_branch
          %572 = sbr.rel (%p570) target = $region84
        $region83: #{tpu_custom_call.1} parent=71 // pred_region
          %s573 = sand.u32 %s33, 1
          %s574 = scalar_lea.sflag [#allocation7], %s573
          %s575 = sand.u32 %s109, 1
          %s576 = scalar_lea.vmem [#allocation6], %s575
          %578 = vsyncadd %s574, 0
          %s579 = scalar_lea.hbm %s2, %s40
          %s581 = sshll.u32 %s579, 4
          %s582 = int_to_ptr.hbm [resolvable:$true] %s581
          %s583 = sshll.u32 %s576, 4
          %s584 = int_to_ptr.vmem [resolvable:$true] %s583
          %586 = dma.hbm_to_vmem [thread:$0]  %s582, 16, %s584, %s574
        $region84: #{tpu_custom_call.1} parent=71 // pred_fallthru
          _
      $region72: #{tpu_custom_call.1} parent=5 // pred_fallthru
        _
      %p587 = scmp.le.s32.totalorder 1, %s33
      %p588 = scmp.lt.s32.totalorder %s33, 5
      %p589 = pnand %p587, %p588
      %p590 = pneg %p589
      // Predicated region
      $region85: #{tpu_custom_call.1} parent=5 // pred_check
        _
      $region86: #{tpu_custom_call.1} parent=5 // pred_check_branch
        %592 = sbr.rel (%p589) target = $region88
      $region87: #{tpu_custom_call.1} parent=5 // pred_region
        %s593 = ssub.s32 %s33, 1
        %s594 = sand.u32 %s86, 1
        %s595 = scalar_lea.sflag [#allocation4], %s594
        %s596 = sand.u32 %s86, 1
        %s597 = smul.addr %s596, 8
        %s598 = scalar_lea.vmem [#allocation3], %s597
        // Predicated region
        $region89: #{tpu_custom_call.1} parent=87 // pred_check
          %p599 = pneg %p99
        $region90: #{tpu_custom_call.1} parent=87 // pred_check_branch
          %601 = sbr.rel (%p599) target = $region92
        $region91: #{tpu_custom_call.1} parent=87 // pred_region
          %603 = dma.done %s595, 128
        $region92: #{tpu_custom_call.1} parent=87 // pred_fallthru
          _
        %s604 = sand.u32 %s38, 1
        %s605 = scalar_lea.sflag [#allocation7], %s604
        %s606 = sand.u32 %s112, 1
        %s607 = scalar_lea.vmem [#allocation6], %s606
        // Predicated region
        $region93: #{tpu_custom_call.1} parent=87 // pred_check
          %p608 = pneg %p125
        $region94: #{tpu_custom_call.1} parent=87 // pred_check_branch
          %610 = sbr.rel (%p608) target = $region96
        $region95: #{tpu_custom_call.1} parent=87 // pred_region
          %612 = dma.done %s605, 16
        $region96: #{tpu_custom_call.1} parent=87 // pred_fallthru
          _
        // Predicated region
        $region97: #{tpu_custom_call.1} parent=87 // pred_check
          %p613 = pneg %p188
        $region98: #{tpu_custom_call.1} parent=87 // pred_check_branch
          %615 = sbr.rel (%p613) target = $region100
        $region99: #{tpu_custom_call.1} parent=87 // pred_region
          %617 = dma.done [#allocation7], 256
        $region100: #{tpu_custom_call.1} parent=87 // pred_fallthru
          _
        // Predicated region
        $region101: #{tpu_custom_call.1} parent=87 // pred_check
          %p618 = pneg %p230
        $region102: #{tpu_custom_call.1} parent=87 // pred_check_branch
          %620 = sbr.rel (%p618) target = $region104
        $region103: #{tpu_custom_call.1} parent=87 // pred_region
          %622 = dma.done [#allocation10], 256
        $region104: #{tpu_custom_call.1} parent=87 // pred_fallthru
          _
        // Predicated region
        $region105: #{tpu_custom_call.1} parent=87 // pred_check
          %p623 = pneg %p314
        $region106: #{tpu_custom_call.1} parent=87 // pred_check_branch
          %625 = sbr.rel (%p623) target = $region108
        $region107: #{tpu_custom_call.1} parent=87 // pred_region
          %627 = dma.done [#allocation10], 256
        $region108: #{tpu_custom_call.1} parent=87 // pred_fallthru
          _
        %p628 = scmp.lt.s32.totalorder %s42, 1
        %s629 = scalar_select %p628, %s42, 1
        %s630 = smul.addr %s629, 2
        %s631 = smul.addr %s630, 8
        %s632 = scalar_lea.vmem %s0, %s631
        %p633 = pneg %p71
        %p634 = pneg %p68
        %s635 = sand.u32 %s86, 1
        %s636 = scalar_lea.sflag [#allocation4], %s635
        %s637 = sand.u32 %s86, 1
        %s638 = smul.addr %s637, 8
        %s639 = scalar_lea.vmem [#allocation3], %s638
        %p640 = pneg %p99
        %p641 = pneg %p96
        %s642 = sand.u32 %s38, 1
        %s643 = scalar_lea.sflag [#allocation7], %s642
        %s644 = sand.u32 %s112, 1
        %s645 = scalar_lea.vmem [#allocation6], %s644
        %p646 = pneg %p125
        %p647 = pneg %p122
        %p648 = pneg %p146
        %p649 = pneg %p143
        %p650 = pneg %p167
        %p651 = pneg %p164
        %p652 = pneg %p188
        %p653 = pneg %p185
        %p654 = pneg %p209
        %p655 = pneg %p206
        %p656 = pneg %p230
        %p657 = pneg %p227
        %p658 = pneg %p251
        %p659 = pneg %p248
        %p660 = pneg %p272
        %p661 = pneg %p269
        %p662 = pneg %p293
        %p663 = pneg %p290
        %p664 = pneg %p314
        %p665 = pneg %p311
        %p666 = pneg %p335
        %p667 = pneg %p332
        %p668 = pneg %p356
        %p669 = pneg %p353
        %p670 = pneg %p377
        %p671 = pneg %p374
        %p672 = pneg %p398
        %p673 = pneg %p395
        %p674 = pneg %p419
        %p675 = pneg %p416
        %p676 = pneg %p447
        %p677 = pneg %p444
        %s678 = sand.u32 %s434, 1
        %s679 = scalar_lea.sflag [#allocation5], %s678
        %s680 = sand.u32 %s434, 1
        %s681 = smul.addr %s680, 8
        %s682 = scalar_lea.vmem [#allocation12], %s681
        %p683 = scmp.lt.s32.totalorder %s42, 1
        %s684 = scalar_select %p683, %s42, 1
        %s685 = smul.addr %s684, 2
        %s686 = smul.addr %s685, 8
        %s687 = scalar_lea.vmem %s0, %s686
        %p689 = scmp.eq.s32.totalorder %s43, 0
        // Predicated region
        $region109: #{tpu_custom_call.1} parent=87 // pred_check
          %p690 = pneg %p689
        $region110: #{tpu_custom_call.1} parent=87 // pred_check_branch
          %692 = sbr.rel (%p690) target = $region112
        $region111: #{tpu_custom_call.1} parent=87 // pred_region
          %v693 = vld [vmem:[%s687] sm:$0xff]
          %v694 = vld [vmem:[%s687 + $0x8] sm:$0xff]
          %v695 = vpack.c.bf16 %v694, %v693
          %v696 = vld [vmem:[#allocation8] sm:$0xf]
          %v697 = vld [vmem:[#allocation8 + $0x4] sm:$0xf]
          %v698 = vld [vmem:[#allocation8 + $0x8] sm:$0xf]
          %v699 = vld [vmem:[#allocation8 + $0xc] sm:$0xf]
          %v700 = vld [vmem:[%s6] sm:$0x1]
          %v702 = vperm.slane %v700, 0
          %v708 = vunpack.c.l.b16 %v696
          %v709 = vunpack.c.l.b16 %v697
          %v710 = vunpack.c.l.b16 %v698
          %v711 = vunpack.c.l.b16 %v699
          %v712 = vpack.c.b16 %v709, %v708
          %v713 = vpack.c.b16 %v711, %v710
          %vm716 = vcmask 261120
          %v718 = vsel %vm716, %v695, 0
          %720 = vmatpush.bf16.msra.mxu0 0
          %721 = vmatpush.bf16.msra.mxu0 0
          %722 = vmatpush.bf16.msra.mxu0 0
          %723 = vmatpush.bf16.msra.mxu0 0
          %724 = vmatpush.bf16.msra.mxu0 0
          %725 = vmatpush.bf16.msra.mxu0 0
          %726 = vmatpush.bf16.msra.mxu0 %v713
          %727 = vmatpush.bf16.msra.mxu0 %v712
          %728 = vmatmul.bf16.gmra.mxu0 %v718
          %v729 = vpop.f32.mrf.mxu0
          %v730 = vadd.f32 %v702, %v729
          %v731 = vpop.f32.mrf.mxu0
          %v732 = vadd.f32 %v702, %v731
          %733 = vdwg.mxu0
          %v734 = vpack.c.bf16 %v730, %v730
          %v735 = vpack.c.bf16 %v732, %v732
          %vm736 = vcmask 519168
          %737 = vst.msk [vmem:[#allocation2] sm:$0xf] %vm736, %v734
          %738 = vst.msk [vmem:[#allocation2 + $0x4] sm:$0xf] %vm736, %v735
        $region112: #{tpu_custom_call.1} parent=87 // pred_fallthru
          _
        %v739 = vld [vmem:[%s598] sm:$0xff]
        %v740 = vpack.c.bf16 %v739, %v739
        %v741 = vld [vmem:[%s3] sm:$0xf]
        %v742 = vld [vmem:[%s3 + $0x4] sm:$0xf]
        %v743 = vld [vmem:[%s3 + $0x8] sm:$0xf]
        %v744 = vld [vmem:[%s3 + $0xc] sm:$0xf]
        %v745 = vld [vmem:[%s4] sm:$0x1]
        %v747 = vperm.slane %v745, 0
        %v753 = vunpack.c.l.b16 %v741
        %v754 = vunpack.c.l.b16 %v742
        %v755 = vunpack.c.l.b16 %v743
        %v756 = vunpack.c.l.b16 %v744
        %v757 = vpack.c.b16 %v754, %v753
        %v758 = vpack.c.b16 %v756, %v755
        %vm761 = vcmask 261120
        %v763 = vsel %vm761, %v740, 0
        %765 = vmatpush.bf16.msra.mxu0 0
        %766 = vmatpush.bf16.msra.mxu0 0
        %767 = vmatpush.bf16.msra.mxu0 0
        %768 = vmatpush.bf16.msra.mxu0 0
        %769 = vmatpush.bf16.msra.mxu0 0
        %770 = vmatpush.bf16.msra.mxu0 0
        %771 = vmatpush.bf16.msra.mxu0 %v758
        %772 = vmatpush.bf16.msra.mxu0 %v757
        %773 = vmatmul.bf16.gmra.mxu0 %v763
        %v774 = vpop.f32.mrf.mxu0
        %v775 = vadd.f32 %v747, %v774
        %v776 = vpop.f32.mrf.mxu0
        %777 = vdwg.mxu0
        %v778 = vmul.f32 %v775, 0.35355338
        %v779 = vpack.c.bf16 %v778, %v778
        %v780 = vld [vmem:[%s607] sm:$0x1]
        %vm781 = vcmp.gt.f32.partialorder %v780, 0.0
        %v782 = vsel %vm781, 0.0, -1e+09
        %v783 = vld [vmem:[#allocation2] sm:$0xf]
        %v784 = vld [vmem:[#allocation2 + $0x4] sm:$0xf]
        %v785 = vld [vmem:[#allocation9] sm:$0xf]
        %v786 = vld [vmem:[#allocation9 + $0x4] sm:$0xf]
        %v787 = vld [vmem:[#allocation9 + $0x8] sm:$0xf]
        %v788 = vld [vmem:[#allocation9 + $0xc] sm:$0xf]
        %v790 = vperm.slane %v782, 0
        %v794 = vunpack.c.l.b16 %v783
        %v795 = vunpack.c.l.b16 %v784
        %v796 = vpack.c.b16 %v795, %v794
        %vm797 = vcmask 64512
        %v799 = vsel %vm797, %v779, 0
        %v802 = vsel %vm797, %v796, 0
        %804 = vmatpush.bf16.xpose.msra.mxu0 0
        %805 = vmatpush.bf16.xpose.msra.mxu0 0
        %806 = vmatpush.bf16.xpose.msra.mxu0 0
        %807 = vmatpush.bf16.xpose.msra.mxu0 0
        %808 = vmatpush.bf16.xpose.msra.mxu0 0
        %809 = vmatpush.bf16.xpose.msra.mxu0 0
        %810 = vmatpush.bf16.xpose.msra.mxu0 0
        %811 = vmatpush.bf16.xpose.msra.mxu0 %v802
        %812 = vmatmul.bf16.gmra.mxu0 %v799
        %v813 = vpop.f32.mrf.mxu0
        %v814 = vadd.f32 %v790, %v813
        %v815 = vpop.f32.mrf.mxu0
        %816 = vdwg.mxu0
        %vm817 = vcmask 130048
        %v818 = vsel %vm817, %v814, -inf
        %819 = vmax.xlane.f32.xlu0 %v818
        %v820 = vpop.xlane.xlu0 %819
        %v821 = vsub.f32 %v814, %v820
        %v822 = vmul.f32 %v821, 1.442695
        %v823 = vpow.pop %v822
        %v824 = vsel %vm817, %v823, 0.0
        %825 = vadd.xlane.f32.xlu0 %v824
        %v826 = vpop.xlane.xlu0 %825
        %v827 = vrcp.pop %v826
        %v828 = vmul.f32 %v823, %v827
        %v829 = vpack.c.bf16 %v828, %v828
        %830 = vrot.lane.b32.xlu0 %v796, 96
        %v831 = vpop.permute.xlu0 %830
        %v834 = vsel %vm817, %v829, 0
        %836 = vmatpush.bf16.msra.mxu0 0
        %837 = vmatpush.bf16.msra.mxu0 0
        %838 = vmatpush.bf16.msra.mxu0 0
        %839 = vmatpush.bf16.msra.mxu0 0
        %840 = vmatpush.bf16.msra.mxu0 0
        %841 = vmatpush.bf16.msra.mxu0 0
        %842 = vmatpush.bf16.msra.mxu0 0
        %843 = vmatpush.bf16.msra.mxu0 %v831
        %844 = vmatmul.bf16.gmra.mxu0 %v834
        %v845 = vpop.f32.mrf.mxu0
        %v846 = vadd.f32 0.0, %v845
        %v847 = vpop.f32.mrf.mxu0
        %848 = vdwg.mxu0
        %v849 = vpack.c.bf16 %v846, %v846
        %v851 = vunpack.c.l.b16 %v779
        %v852 = vpack.c.b16 %v851, %v851
        %853 = vrot.lane.b32.xlu0 %v852, 120
        %v854 = vpop.permute.xlu0 %853
        %855 = vrot.lane.b32.xlu0 %v796, 120
        %v856 = vpop.permute.xlu0 %855
        %v858 = vsel %vm797, %v854, 0
        %v861 = vsel %vm797, %v856, 0
        %863 = vmatpush.bf16.xpose.msra.mxu0 0
        %864 = vmatpush.bf16.xpose.msra.mxu0 0
        %865 = vmatpush.bf16.xpose.msra.mxu0 0
        %866 = vmatpush.bf16.xpose.msra.mxu0 0
        %867 = vmatpush.bf16.xpose.msra.mxu0 0
        %868 = vmatpush.bf16.xpose.msra.mxu0 0
        %869 = vmatpush.bf16.xpose.msra.mxu0 0
        %870 = vmatpush.bf16.xpose.msra.mxu0 %v861
        %871 = vmatmul.bf16.gmra.mxu0 %v858
        %v872 = vpop.f32.mrf.mxu0
        %v873 = vadd.f32 %v790, %v872
        %v874 = vpop.f32.mrf.mxu0
        %875 = vdwg.mxu0
        %v876 = vsel %vm817, %v873, -inf
        %877 = vmax.xlane.f32.xlu0 %v876
        %v878 = vpop.xlane.xlu0 %877
        %v879 = vsub.f32 %v873, %v878
        %v880 = vmul.f32 %v879, 1.442695
        %v881 = vpow.pop %v880
        %v882 = vsel %vm817, %v881, 0.0
        %883 = vadd.xlane.f32.xlu0 %v882
        %v884 = vpop.xlane.xlu0 %883
        %v885 = vrcp.pop %v884
        %v886 = vmul.f32 %v881, %v885
        %v887 = vpack.c.bf16 %v886, %v886
        %888 = vrot.lane.b32.xlu0 %v796, 88
        %v889 = vpop.permute.xlu0 %888
        %v892 = vsel %vm817, %v887, 0
        %894 = vmatpush.bf16.msra.mxu0 0
        %895 = vmatpush.bf16.msra.mxu0 0
        %896 = vmatpush.bf16.msra.mxu0 0
        %897 = vmatpush.bf16.msra.mxu0 0
        %898 = vmatpush.bf16.msra.mxu0 0
        %899 = vmatpush.bf16.msra.mxu0 0
        %900 = vmatpush.bf16.msra.mxu0 0
        %901 = vmatpush.bf16.msra.mxu0 %v889
        %902 = vmatmul.bf16.gmra.mxu0 %v892
        %v903 = vpop.f32.mrf.mxu0
        %v904 = vadd.f32 0.0, %v903
        %v905 = vpop.f32.mrf.mxu0
        %906 = vdwg.mxu0
        %v907 = vpack.c.bf16 %v904, %v904
        %v909 = vsel %vm797, %v907, 0
        %vm911 = vcmask 1043456
        %v913 = vsel %vm911, %v786, 0
        %915 = vmatpush.bf16.msra.mxu0 0
        %916 = vmatpush.bf16.msra.mxu0 0
        %917 = vmatpush.bf16.msra.mxu0 0
        %918 = vmatpush.bf16.msra.mxu0 0
        %919 = vmatpush.bf16.msra.mxu0 0
        %920 = vmatpush.bf16.msra.mxu0 0
        %921 = vmatpush.bf16.msra.mxu0 0
        %922 = vmatpush.bf16.msra.mxu0 %v913
        %923 = vmatmul.bf16.gmra.mxu0 %v909
        %v924 = vpop.f32.mrf.mxu0
        %v925 = vadd.f32 0.0, %v924
        %v926 = vpop.f32.mrf.mxu0
        %927 = vdwg.mxu0
        %v929 = vsel %vm797, %v849, 0
        %v932 = vsel %vm911, %v785, 0
        %934 = vmatpush.bf16.msra.mxu0 0
        %935 = vmatpush.bf16.msra.mxu0 0
        %936 = vmatpush.bf16.msra.mxu0 0
        %937 = vmatpush.bf16.msra.mxu0 0
        %938 = vmatpush.bf16.msra.mxu0 0
        %939 = vmatpush.bf16.msra.mxu0 0
        %940 = vmatpush.bf16.msra.mxu0 0
        %941 = vmatpush.bf16.msra.mxu0 %v932
        %942 = vmatmul.bf16.gmra.mxu0 %v929
        %v943 = vpop.f32.mrf.mxu0
        %v944 = vadd.f32 %v925, %v943
        %v945 = vpop.f32.mrf.mxu0
        %946 = vdwg.mxu0
        %947 = vrot.lane.b32.xlu0 %v852, 112
        %v948 = vpop.permute.xlu0 %947
        %949 = vrot.lane.b32.xlu0 %v796, 112
        %v950 = vpop.permute.xlu0 %949
        %v952 = vsel %vm797, %v948, 0
        %v955 = vsel %vm797, %v950, 0
        %957 = vmatpush.bf16.xpose.msra.mxu0 0
        %958 = vmatpush.bf16.xpose.msra.mxu0 0
        %959 = vmatpush.bf16.xpose.msra.mxu0 0
        %960 = vmatpush.bf16.xpose.msra.mxu0 0
        %961 = vmatpush.bf16.xpose.msra.mxu0 0
        %962 = vmatpush.bf16.xpose.msra.mxu0 0
        %963 = vmatpush.bf16.xpose.msra.mxu0 0
        %964 = vmatpush.bf16.xpose.msra.mxu0 %v955
        %965 = vmatmul.bf16.gmra.mxu0 %v952
        %v966 = vpop.f32.mrf.mxu0
        %v967 = vadd.f32 %v790, %v966
        %v968 = vpop.f32.mrf.mxu0
        %969 = vdwg.mxu0
        %v970 = vsel %vm817, %v967, -inf
        %971 = vmax.xlane.f32.xlu0 %v970
        %v972 = vpop.xlane.xlu0 %971
        %v973 = vsub.f32 %v967, %v972
        %v974 = vmul.f32 %v973, 1.442695
        %v975 = vpow.pop %v974
        %v976 = vsel %vm817, %v975, 0.0
        %977 = vadd.xlane.f32.xlu0 %v976
        %v978 = vpop.xlane.xlu0 %977
        %v979 = vrcp.pop %v978
        %v980 = vmul.f32 %v975, %v979
        %v981 = vpack.c.bf16 %v980, %v980
        %982 = vrot.lane.b32.xlu0 %v796, 80
        %v983 = vpop.permute.xlu0 %982
        %v986 = vsel %vm817, %v981, 0
        %988 = vmatpush.bf16.msra.mxu0 0
        %989 = vmatpush.bf16.msra.mxu0 0
        %990 = vmatpush.bf16.msra.mxu0 0
        %991 = vmatpush.bf16.msra.mxu0 0
        %992 = vmatpush.bf16.msra.mxu0 0
        %993 = vmatpush.bf16.msra.mxu0 0
        %994 = vmatpush.bf16.msra.mxu0 0
        %995 = vmatpush.bf16.msra.mxu0 %v983
        %996 = vmatmul.bf16.gmra.mxu0 %v986
        %v997 = vpop.f32.mrf.mxu0
        %v998 = vadd.f32 0.0, %v997
        %v999 = vpop.f32.mrf.mxu0
        %1000 = vdwg.mxu0
        %v1001 = vpack.c.bf16 %v998, %v998
        %v1003 = vsel %vm797, %v1001, 0
        %v1006 = vsel %vm911, %v787, 0
        %1008 = vmatpush.bf16.msra.mxu0 0
        %1009 = vmatpush.bf16.msra.mxu0 0
        %1010 = vmatpush.bf16.msra.mxu0 0
        %1011 = vmatpush.bf16.msra.mxu0 0
        %1012 = vmatpush.bf16.msra.mxu0 0
        %1013 = vmatpush.bf16.msra.mxu0 0
        %1014 = vmatpush.bf16.msra.mxu0 0
        %1015 = vmatpush.bf16.msra.mxu0 %v1006
        %1016 = vmatmul.bf16.gmra.mxu0 %v1003
        %v1017 = vpop.f32.mrf.mxu0
        %v1018 = vadd.f32 0.0, %v1017
        %v1019 = vpop.f32.mrf.mxu0
        %1020 = vdwg.mxu0
        %v1021 = vadd.f32 %v944, %v1018
        %1022 = vrot.lane.b32.xlu0 %v852, 104
        %v1023 = vpop.permute.xlu0 %1022
        %1024 = vrot.lane.b32.xlu0 %v796, 104
        %v1025 = vpop.permute.xlu0 %1024
        %v1027 = vsel %vm797, %v1023, 0
        %v1030 = vsel %vm797, %v1025, 0
        %1032 = vmatpush.bf16.xpose.msra.mxu0 0
        %1033 = vmatpush.bf16.xpose.msra.mxu0 0
        %1034 = vmatpush.bf16.xpose.msra.mxu0 0
        %1035 = vmatpush.bf16.xpose.msra.mxu0 0
        %1036 = vmatpush.bf16.xpose.msra.mxu0 0
        %1037 = vmatpush.bf16.xpose.msra.mxu0 0
        %1038 = vmatpush.bf16.xpose.msra.mxu0 0
        %1039 = vmatpush.bf16.xpose.msra.mxu0 %v1030
        %1040 = vmatmul.bf16.gmra.mxu0 %v1027
        %v1041 = vpop.f32.mrf.mxu0
        %v1042 = vadd.f32 %v790, %v1041
        %v1043 = vpop.f32.mrf.mxu0
        %1044 = vdwg.mxu0
        %v1045 = vsel %vm817, %v1042, -inf
        %1046 = vmax.xlane.f32.xlu0 %v1045
        %v1047 = vpop.xlane.xlu0 %1046
        %v1048 = vsub.f32 %v1042, %v1047
        %v1049 = vmul.f32 %v1048, 1.442695
        %v1050 = vpow.pop %v1049
        %v1051 = vsel %vm817, %v1050, 0.0
        %1052 = vadd.xlane.f32.xlu0 %v1051
        %v1053 = vpop.xlane.xlu0 %1052
        %v1054 = vrcp.pop %v1053
        %v1055 = vmul.f32 %v1050, %v1054
        %v1056 = vpack.c.bf16 %v1055, %v1055
        %1057 = vrot.lane.b32.xlu0 %v796, 72
        %v1058 = vpop.permute.xlu0 %1057
        %v1061 = vsel %vm817, %v1056, 0
        %1063 = vmatpush.bf16.msra.mxu0 0
        %1064 = vmatpush.bf16.msra.mxu0 0
        %1065 = vmatpush.bf16.msra.mxu0 0
        %1066 = vmatpush.bf16.msra.mxu0 0
        %1067 = vmatpush.bf16.msra.mxu0 0
        %1068 = vmatpush.bf16.msra.mxu0 0
        %1069 = vmatpush.bf16.msra.mxu0 0
        %1070 = vmatpush.bf16.msra.mxu0 %v1058
        %1071 = vmatmul.bf16.gmra.mxu0 %v1061
        %v1072 = vpop.f32.mrf.mxu0
        %v1073 = vadd.f32 0.0, %v1072
        %v1074 = vpop.f32.mrf.mxu0
        %1075 = vdwg.mxu0
        %v1076 = vpack.c.bf16 %v1073, %v1073
        %v1078 = vsel %vm797, %v1076, 0
        %v1081 = vsel %vm911, %v788, 0
        %1083 = vmatpush.bf16.msra.mxu0 0
        %1084 = vmatpush.bf16.msra.mxu0 0
        %1085 = vmatpush.bf16.msra.mxu0 0
        %1086 = vmatpush.bf16.msra.mxu0 0
        %1087 = vmatpush.bf16.msra.mxu0 0
        %1088 = vmatpush.bf16.msra.mxu0 0
        %1089 = vmatpush.bf16.msra.mxu0 0
        %1090 = vmatpush.bf16.msra.mxu0 %v1081
        %1091 = vmatmul.bf16.gmra.mxu0 %v1078
        %v1092 = vpop.f32.mrf.mxu0
        %v1093 = vadd.f32 0.0, %v1092
        %v1094 = vpop.f32.mrf.mxu0
        %1095 = vdwg.mxu0
        %v1096 = vadd.f32 %v1021, %v1093
        %v1097 = vld [vmem:[%s8] sm:$0x1]
        %v1099 = vperm.slane %v1097, 0
        %v1101 = vadd.f32 %v1096, %v1099
        %v1102 = vadd.f32 %v739, %v1101
        %v1103 = vsel %vm761, %v1102, 0.0
        %1104 = vadd.xlane.f32.xlu0 %v1103
        %v1105 = vpop.xlane.xlu0 %1104
        %v1106 = vrcp.pop 32.0
        %v1107 = vmul.f32 32.0, %v1106
        %v1108 = vsub.f32 1.0, %v1107
        %v1109 = vmul.f32 %v1106, %v1108
        %v1110 = vadd.f32 %v1106, %v1109
        %vm1111 = vweird.f32 %v1106
        %v1112 = vsel %vm1111, %v1106, %v1110
        %v1113 = vmul.f32 %v1105, %v1112
        %v1114 = vsub.f32 %v1102, %v1113
        %v1115 = vmul.f32 %v1114, %v1114
        %v1116 = vsel %vm761, %v1115, 0.0
        %1117 = vadd.xlane.f32.xlu0 %v1116
        %v1118 = vpop.xlane.xlu0 %1117
        %v1119 = vmul.f32 %v1118, %v1112
        %v1120 = vadd.f32 %v1119, 1e-05
        %v1121 = vrsqrt.pop %v1120
        %v1122 = vmul.f32 %v1121, %v1120
        %v1123 = vmul.f32 %v1122, %v1121
        %v1124 = vmul.f32 0.5, %v1123
        %v1125 = vsub.f32 1.5, %v1124
        %v1126 = vmul.f32 %v1121, %v1125
        %vm1127 = vweird.f32 %v1120
        %vm1128 = vweird.f32 %v1121
        %vm1129 = vmor %vm1127, %vm1128
        %v1130 = vsel %vm1129, %v1121, %v1126
        %v1131 = vmul.f32 %v1114, %v1130
        %v1132 = vld [vmem:[%s9] sm:$0x1]
        %v1134 = vperm.slane %v1132, 0
        %v1136 = vmul.f32 %v1131, %v1134
        %v1137 = vld [vmem:[%s10] sm:$0x1]
        %v1139 = vperm.slane %v1137, 0
        %v1141 = vadd.f32 %v1136, %v1139
        %v1142 = vpack.c.bf16 %v1141, %v1141
        %v1143 = vld [vmem:[#allocation11] sm:$0xf]
        %v1144 = vld [vmem:[#allocation11 + $0x4] sm:$0xf]
        %v1145 = vld [vmem:[#allocation11 + $0x8] sm:$0xf]
        %v1146 = vld [vmem:[#allocation11 + $0xc] sm:$0xf]
        %v1147 = vld [vmem:[%s12] sm:$0x1]
        %v1149 = vperm.slane %v1147, 0
        %v1155 = vunpack.c.l.b16 %v1143
        %v1156 = vunpack.c.l.b16 %v1144
        %v1157 = vunpack.c.l.b16 %v1145
        %v1158 = vunpack.c.l.b16 %v1146
        %v1159 = vpack.c.b16 %v1156, %v1155
        %v1160 = vpack.c.b16 %v1158, %v1157
        %v1164 = vsel %vm761, %v1142, 0
        %1166 = vmatpush.bf16.msra.mxu0 0
        %1167 = vmatpush.bf16.msra.mxu0 0
        %1168 = vmatpush.bf16.msra.mxu0 0
        %1169 = vmatpush.bf16.msra.mxu0 0
        %1170 = vmatpush.bf16.msra.mxu0 0
        %1171 = vmatpush.bf16.msra.mxu0 0
        %1172 = vmatpush.bf16.msra.mxu0 %v1160
        %1173 = vmatpush.bf16.msra.mxu0 %v1159
        %1174 = vmatmul.bf16.gmra.mxu0 %v1164
        %v1175 = vpop.f32.mrf.mxu0
        %v1176 = vadd.f32 %v1149, %v1175
        %v1177 = vpop.f32.mrf.mxu0
        %1178 = vdwg.mxu0
        %v1179 = vmax.f32 %v1176, 0.0
        %v1180 = vpack.c.bf16 %v1179, %v1179
        %v1181 = vld [vmem:[%s13] sm:$0xf]
        %v1182 = vld [vmem:[%s13 + $0x4] sm:$0xf]
        %v1183 = vld [vmem:[%s13 + $0x8] sm:$0xf]
        %v1184 = vld [vmem:[%s13 + $0xc] sm:$0xf]
        %v1185 = vld [vmem:[%s13 + $0x10] sm:$0xf]
        %v1186 = vld [vmem:[%s13 + $0x14] sm:$0xf]
        %v1187 = vld [vmem:[%s13 + $0x18] sm:$0xf]
        %v1188 = vld [vmem:[%s13 + $0x1c] sm:$0xf]
        %v1189 = vld [vmem:[%s14] sm:$0x1]
        %v1191 = vperm.slane %v1189, 0
        %v1201 = vunpack.c.l.b16 %v1181
        %v1202 = vunpack.c.l.b16 %v1182
        %v1203 = vunpack.c.l.b16 %v1183
        %v1204 = vunpack.c.l.b16 %v1184
        %v1205 = vunpack.c.l.b16 %v1185
        %v1206 = vunpack.c.l.b16 %v1186
        %v1207 = vunpack.c.l.b16 %v1187
        %v1208 = vunpack.c.l.b16 %v1188
        %v1209 = vpack.c.b16 %v1202, %v1201
        %v1210 = vpack.c.b16 %v1204, %v1203
        %v1211 = vpack.c.b16 %v1206, %v1205
        %v1212 = vpack.c.b16 %v1208, %v1207
        %vm1217 = vcmask 523264
        %v1219 = vsel %vm1217, %v1180, 0
        %1221 = vmatpush.bf16.msra.mxu0 0
        %1222 = vmatpush.bf16.msra.mxu0 0
        %1223 = vmatpush.bf16.msra.mxu0 0
        %1224 = vmatpush.bf16.msra.mxu0 0
        %1225 = vmatpush.bf16.msra.mxu0 %v1212
        %1226 = vmatpush.bf16.msra.mxu0 %v1211
        %1227 = vmatpush.bf16.msra.mxu0 %v1210
        %1228 = vmatpush.bf16.msra.mxu0 %v1209
        %1229 = vmatmul.bf16.gmra.mxu0 %v1219
        %v1230 = vpop.f32.mrf.mxu0
        %v1231 = vadd.f32 %v1191, %v1230
        %v1232 = vpop.f32.mrf.mxu0
        %1233 = vdwg.mxu0
        %v1234 = vadd.f32 %v1141, %v1231
        %v1235 = vsel %vm761, %v1234, 0.0
        %1236 = vadd.xlane.f32.xlu0 %v1235
        %v1237 = vpop.xlane.xlu0 %1236
        %v1238 = vmul.f32 %v1237, %v1112
        %v1239 = vsub.f32 %v1234, %v1238
        %v1240 = vmul.f32 %v1239, %v1239
        %v1241 = vsel %vm761, %v1240, 0.0
        %1242 = vadd.xlane.f32.xlu0 %v1241
        %v1243 = vpop.xlane.xlu0 %1242
        %v1244 = vmul.f32 %v1243, %v1112
        %v1245 = vadd.f32 %v1244, 1e-05
        %v1246 = vrsqrt.pop %v1245
        %v1247 = vmul.f32 %v1246, %v1245
        %v1248 = vmul.f32 %v1247, %v1246
        %v1249 = vmul.f32 0.5, %v1248
        %v1250 = vsub.f32 1.5, %v1249
        %v1251 = vmul.f32 %v1246, %v1250
        %vm1252 = vweird.f32 %v1245
        %vm1253 = vweird.f32 %v1246
        %vm1254 = vmor %vm1252, %vm1253
        %v1255 = vsel %vm1254, %v1246, %v1251
        %v1256 = vmul.f32 %v1239, %v1255
        %v1257 = vld [vmem:[%s15] sm:$0x1]
        %v1259 = vperm.slane %v1257, 0
        %v1261 = vmul.f32 %v1256, %v1259
        %v1262 = vld [vmem:[%s16] sm:$0x1]
        %v1264 = vperm.slane %v1262, 0
        %v1266 = vadd.f32 %v1261, %v1264
        %1267 = vst.msk [vmem:[%s682] sm:$0xff] %vm761, %v1266
        %s1268 = sand.u32 %s434, 1
        %s1269 = scalar_lea.sflag [#allocation5], %s1268
        %s1270 = sand.u32 %s434, 1
        %s1271 = smul.addr %s1270, 8
        %s1272 = scalar_lea.vmem [#allocation12], %s1271
        // Predicated region
        $region113: #{tpu_custom_call.1} parent=87 // pred_check
          %p1273 = pneg %p444
        $region114: #{tpu_custom_call.1} parent=87 // pred_check_branch
          %1275 = sbr.rel (%p1273) target = $region116
        $region115: #{tpu_custom_call.1} parent=87 // pred_region
          %1277 = vsyncadd %s1269, 0
          %s1278 = smul.addr %s42, 2
          %s1279 = sadd.s32 %s43, %s1278
          %s1280 = smul.addr %s1279, 8
          %s1281 = scalar_lea.hbm %s17, %s1280
          %s1283 = sshll.u32 %s1272, 4
          %s1284 = int_to_ptr.vmem [resolvable:$true] %s1283
          %s1285 = sshll.u32 %s1281, 4
          %s1286 = int_to_ptr.hbm [resolvable:$true] %s1285
          %1288 = dma.vmem_to_hbm [thread:$0]  %s1284, 128, %s1286, %s1269
        $region116: #{tpu_custom_call.1} parent=87 // pred_fallthru
          _
      $region88: #{tpu_custom_call.1} parent=5 // pred_fallthru
        _
      %p1289 = scmp.le.s32.totalorder 2, %s33
      // Predicated region
      $region117: #{tpu_custom_call.1} parent=5 // pred_check
        %p1290 = pneg %p1289
      $region118: #{tpu_custom_call.1} parent=5 // pred_check_branch
        %1292 = sbr.rel (%p1290) target = $region120
      $region119: #{tpu_custom_call.1} parent=5 // pred_region
        %s1293 = ssub.s32 %s33, 2
        // Predicated region
        $region121: #{tpu_custom_call.1} parent=119 // pred_check
          %p1294 = pneg %p450
        $region122: #{tpu_custom_call.1} parent=119 // pred_check_branch
          %1296 = sbr.rel (%p1294) target = $region124
        $region123: #{tpu_custom_call.1} parent=119 // pred_region
          %s1297 = sand.u32 %s435, 1
          %s1298 = scalar_lea.sflag [#allocation5], %s1297
          %s1299 = sand.u32 %s435, 1
          %s1300 = smul.addr %s1299, 8
          %s1301 = scalar_lea.vmem [#allocation12], %s1300
          %1303 = dma.done %s1298, 128
        $region124: #{tpu_custom_call.1} parent=119 // pred_fallthru
          _
      $region120: #{tpu_custom_call.1} parent=5 // pred_fallthru
        _
    $region6: #{tpu_custom_call.1} parent=1 // loop_footer
      %s37 = sadd.s32 1, %s33
    $region7: #{tpu_custom_call.1} parent=1 // loop_footer_branch
      %32 = sbr.rel target = $region3
    $region8: #{tpu_custom_call.1} parent=1 // loop_exit
      _
    %1304 = vsyncpa [#allocation4], 1
    %s1305 = scalar_lea.sflag [#allocation4], 1
    %1306 = vsyncpa %s1305, 1
    %1307 = vsyncpa [#allocation7], 1
    %s1308 = scalar_lea.sflag [#allocation7], 1
    %1309 = vsyncpa %s1308, 1
    %1310 = vsyncpa [#allocation10], 1
    %1311 = vsyncpa [#allocation5], 1
    %s1312 = scalar_lea.sflag [#allocation5], 1
    %1313 = vsyncpa %s1312, 1

</llo_original>
